<compile_context>
chip_gen: v5e
topology: v5e:2x2
jax: 0.10.0
libtpu: 0.0.40
codegen_flags: <defaults>
</compile_context>

<pallas_src>
import jax
import jax.numpy as jnp
from jax.experimental import pallas as pl
from jax.experimental.pallas import tpu as pltpu

S = 5  # number of tied word-encoder slices (input_size // vocab_size)


def _round_up(n, m):
    return ((n + m - 1) // m) * m


def tied_classifier_kernel(
    x_ref,                                                    # (TB, S*Vp) compute dtype
    we1_w, we1_b, we2_w, we2_b, we3_w, we3_b, we4_w, we4_b,   # tied PhraseEncoder
    l3_w, l3_b, l4_w, l4_b, l5_w, l5_b, fin_w, fin_b,         # classifier head
    out_ref,                                                  # (TB, Lp) f32
):
    TB = out_ref.shape[0]
    Vp = x_ref.shape[1] // S
    Hp = l4_w.shape[0]
    cdt = we1_w.dtype          # matmul operand dtype (bf16); accumulation in f32

    def dense(h, w_ref, b_ref, relu, out_dtype):
        y = jnp.dot(h, w_ref[...], preferred_element_type=jnp.float32) + b_ref[...]
        if relu:
            y = jnp.maximum(y, 0.0)
        return y if out_dtype is None else y.astype(out_dtype)

    # ---- tied word encoder ----
    # Layer 1 per slice on lane-aligned static slices of x, relu, cast to bf16,
    # then stack slice-major along the sublane axis -> one M = 5*TB chain.
    parts = []
    for s in range(S):
        xs = x_ref[:, s * Vp:(s + 1) * Vp]                  # (TB, Vp) bf16
        parts.append(dense(xs, we1_w, we1_b, relu=True, out_dtype=cdt))
    h = jnp.concatenate(parts, axis=0)                      # (S*TB, Hp) bf16

    h = dense(h, we2_w, we2_b, relu=True, out_dtype=cdt)
    h = dense(h, we3_w, we3_b, relu=True, out_dtype=cdt)
    h = dense(h, we4_w, we4_b, relu=False, out_dtype=cdt)   # (S*TB, Hp) bf16

    # ---- linear3 over the virtual concat: sum of per-slice block matmuls ----
    acc = jnp.dot(h[0:TB, :], l3_w[0:Hp, :], preferred_element_type=jnp.float32)
    for s in range(1, S):
        acc = acc + jnp.dot(h[s * TB:(s + 1) * TB, :],
                            l3_w[s * Hp:(s + 1) * Hp, :],
                            preferred_element_type=jnp.float32)
    n = jnp.maximum(acc + l3_b[...], 0.0).astype(cdt)

    n = dense(n, l4_w, l4_b, relu=True, out_dtype=cdt)
    n = dense(n, l5_w, l5_b, relu=True, out_dtype=cdt)
    # padded label lanes come out as -inf because fin_b is padded with -inf
    logits = dense(n, fin_w, fin_b, relu=False, out_dtype=None)   # (TB, Lp) f32

    # ---- numerically stable log_softmax over the label lanes ----
    m = jnp.max(logits, axis=1, keepdims=True)
    z = logits - m
    lse = jnp.log(jnp.sum(jnp.exp(z), axis=1, keepdims=True))
    out_ref[...] = z - lse


def _device_budget():
    """(per-tile VMEM budget, vmem_limit_bytes, want >=2 batch tiles) per TPU generation."""
    try:
        kind = jax.devices()[0].device_kind.lower()
    except Exception:
        kind = ""
    if "v7" in kind or "7x" in kind:
        # v7x: 64 MiB VMEM per TensorCore, 2 TCs -> tighter tiles and nb >= 2.
        return 36 * 2**20, 48 * 2**20, True
    # v5e / v6e: 128 MiB physical VMEM -> bigger tiles, higher scoped limit.
    return 72 * 2**20, 100 * 2**20, False


def _choose_tb(B, Vp, Hp, Lp, block_b, weight_bytes, budget_bytes, want_two_tiles):
    """Largest batch tile (multiple of 16) whose pipelined buffers + intermediates
    fit the per-generation VMEM budget alongside the resident weights."""
    per_row = (S * Vp * 2) * 2        # x block, bf16, double-buffered
    per_row += Lp * 4 * 2             # out block, f32, double-buffered
    per_row += S * Hp * (2 + 4)       # encoder intermediates (bf16 value + f32 accum)
    per_row += Hp * (2 + 4) * 2       # head intermediates
    avail = budget_bytes - 2 * weight_bytes   # conservative: as if weights were double-buffered
    tb = avail // per_row if avail > 0 else 16
    tb = (int(tb) // 16) * 16
    tb = min(tb, block_b, _round_up(B, 16))
    if want_two_tiles and B >= 32:
        tb = min(tb, _round_up(-(-B // 2), 16))   # keep both v7x TensorCores fed
    return max(tb, 16)


def make_params(key, input_size, num_labels, hidden_size):
    """Deterministic synthetic parameters (shapes match the torch module, W transposed)."""
    vocab_size = input_size // S
    H = hidden_size
    shapes = [
        ("we1_w", (vocab_size, H)), ("we1_b", (1, H)),
        ("we2_w", (H, H)),          ("we2_b", (1, H)),
        ("we3_w", (H, H)),          ("we3_b", (1, H)),
        ("we4_w", (H, H)),          ("we4_b", (1, H)),
        ("l3_w", (S * H, H)),       ("l3_b", (1, H)),
        ("l4_w", (H, H)),           ("l4_b", (1, H)),
        ("l5_w", (H, H)),           ("l5_b", (1, H)),
        ("fin_w", (H, num_labels)), ("fin_b", (1, num_labels)),
    ]
    params = []
    for (_, shape) in shapes:
        key, sub = jax.random.split(key)
        params.append(0.05 * jax.random.normal(sub, shape, dtype=jnp.float32))
    return params


def tied_classifier_forward(x, params, *, input_size, num_labels, hidden_size,
                            block_b=512, compute_dtype=jnp.bfloat16):
    B = x.shape[0]
    V = input_size // S
    H = hidden_size

    # Lane/sublane-aligned padded sizes.
    Vp = _round_up(V, 128)
    Hp = _round_up(H, 128)
    Lp = _round_up(num_labels, 128)

    (we1_w, we1_b, we2_w, we2_b, we3_w, we3_b, we4_w, we4_b,
     l3_w, l3_b, l4_w, l4_b, l5_w, l5_b, fin_w, fin_b) = params

    def pad_w(w, r, c):
        return jnp.pad(w, ((0, r - w.shape[0]), (0, c - w.shape[1]))).astype(compute_dtype)

    def pad_b(b, c, fill=0.0):
        return jnp.pad(b, ((0, 0), (0, c - b.shape[1])),
                       constant_values=fill).astype(jnp.float32)

    # linear3 weight (5H, H): pad each per-slice row block independently to (Hp, Hp).
    p_l3_w = jnp.pad(l3_w.reshape(S, H, H),
                     ((0, 0), (0, Hp - H), (0, Hp - H))).reshape(S * Hp, Hp).astype(compute_dtype)

    padded_params = [
        pad_w(we1_w, Vp, Hp), pad_b(we1_b, Hp),
        pad_w(we2_w, Hp, Hp), pad_b(we2_b, Hp),
        pad_w(we3_w, Hp, Hp), pad_b(we3_b, Hp),
        pad_w(we4_w, Hp, Hp), pad_b(we4_b, Hp),
        p_l3_w,               pad_b(l3_b, Hp),
        pad_w(l4_w, Hp, Hp),  pad_b(l4_b, Hp),
        pad_w(l5_w, Hp, Hp),  pad_b(l5_b, Hp),
        # -inf on padded label lanes bakes the softmax mask into the bias.
        pad_w(fin_w, Hp, Lp), pad_b(fin_b, Lp, fill=-jnp.inf),
    ]
    weight_bytes = sum(int(p.nbytes) for p in padded_params)
    # TODO(synk): for very large Vp*Hp on v7x (64 MiB VMEM), K-tile we1_w over Vp via an
    # extra "arbitrary" grid axis (or store it in fp8) instead of relying on full residency.

    tile_budget, vmem_limit, want_two_tiles = _device_budget()
    TB = _choose_tb(B, Vp, Hp, Lp, block_b, weight_bytes, tile_budget, want_two_tiles)
    nb = pl.cdiv(B, TB)
    Bp = nb * TB

    # x layout: (Bp, S*Vp) with per-slice lane padding only -- no slice-major transpose
    # in HBM; the kernel slices lanes at 128-aligned offsets instead.
    if Vp == V:
        x_pad = x
    else:
        x_pad = jnp.pad(x.reshape(B, S, V), ((0, 0), (0, 0), (0, Vp - V))).reshape(B, S * Vp)
    if Bp != B:
        x_pad = jnp.pad(x_pad, ((0, Bp - B), (0, 0)))
    x2 = x_pad.astype(compute_dtype)

    flops = 2 * B * (S * (V * H + 3 * H * H) + (S * H) * H + 2 * H * H + H * num_labels)
    bytes_accessed = int(x2.nbytes + weight_bytes + Bp * Lp * 4)
    cost = pl.CostEstimate(flops=int(flops),
                           transcendentals=int(Bp * Lp),
                           bytes_accessed=bytes_accessed)

    def run(single_buffer_weights):
        in_specs = [pl.BlockSpec((TB, S * Vp), lambda i: (i, 0))]
        for p in padded_params:
            if single_buffer_weights:
                # Grid-invariant weights: one resident VMEM buffer each (no double buffering).
                in_specs.append(pl.BlockSpec(p.shape, lambda i: (0, 0),
                                             pipeline_mode=pl.Buffered(1)))
            else:
                in_specs.append(pl.BlockSpec(p.shape, lambda i: (0, 0)))
        out = pl.pallas_call(
            tied_classifier_kernel,
            out_shape=jax.ShapeDtypeStruct((Bp, Lp), jnp.float32),
            grid=(nb,),
            in_specs=in_specs,
            out_specs=pl.BlockSpec((TB, Lp), lambda i: (i, 0)),
            compiler_params=pltpu.CompilerParams(
                dimension_semantics=("parallel",),
                vmem_limit_bytes=vmem_limit,
            ),
            cost_estimate=cost,
        )(x2, *padded_params)
        return jax.block_until_ready(out)

    try:
        out = run(True)
    except Exception:
        # Fallback for JAX builds that reject 1-deep buffering on a BlockSpec.
        out = run(False)

    return out[:B, :num_labels]


def reference_forward(x, params, *, input_size, num_labels, hidden_size,
                      compute_dtype=jnp.bfloat16):
    """Pure-JAX reference mirroring the torch forward (dropout = identity).
    Matmul operands are cast to the same compute dtype as the kernel."""
    V = input_size // S
    (we1_w, we1_b, we2_w, we2_b, we3_w, we3_b, we4_w, we4_b,
     l3_w, l3_b, l4_w, l4_b, l5_w, l5_b, fin_w, fin_b) = params

    def dense(h, w, b, relu):
        y = jnp.dot(h.astype(compute_dtype), w.astype(compute_dtype),
                    preferred_element_type=jnp.float32) + b
        return jnp.maximum(y, 0.0) if relu else y

    def enc(xi):
        h = dense(xi, we1_w, we1_b, True)
        h = dense(h, we2_w, we2_b, True)
        h = dense(h, we3_w, we3_b, True)
        return dense(h, we4_w, we4_b, False)

    outs = [enc(x[:, i * V:(i + 1) * V]) for i in range(S)]
    n = jnp.concatenate(outs, axis=1)
    n = dense(n, l3_w, l3_b, True)
    n = dense(n, l4_w, l4_b, True)
    n = dense(n, l5_w, l5_b, True)
    logits = dense(n, fin_w, fin_b, False)
    return jax.nn.log_softmax(logits, axis=1)


if __name__ == "__main__":
    # Small shapes consistent with the module: input_size must be divisible by 5.
    B = 4
    hidden_size = 32
    num_labels = 10
    vocab_size = 64
    input_size = S * vocab_size  # 320

    key = jax.random.PRNGKey(0)
    kx, kp = jax.random.split(key)
    x = jax.random.normal(kx, (B, input_size), dtype=jnp.float32)
    params = make_params(kp, input_size, num_labels, hidden_size)

    out = tied_classifier_forward(
        x, params, input_size=input_size, num_labels=num_labels, hidden_size=hidden_size
    )
    out = jax.block_until_ready(out)

    ref = reference_forward(
        x, params, input_size=input_size, num_labels=num_labels, hidden_size=hidden_size
    )
    assert out.shape == (B, num_labels)
    err = float(jnp.max(jnp.abs(out - ref)))
    assert err < 1e-4, f"max abs err {err}"

    print("KERNEL_OK")
</pallas_src>

<mosaic_0001>
module attributes {stable_mosaic.version = 11 : i64} {
  func.func @tied_classifier_kernel(%arg0: i32, %arg1: memref<16x640xbf16, #tpu.memory_space<vmem>>, %arg2: memref<128x128xbf16, #tpu.memory_space<vmem>>, %arg3: memref<1x128xf32, #tpu.memory_space<vmem>>, %arg4: memref<128x128xbf16, #tpu.memory_space<vmem>>, %arg5: memref<1x128xf32, #tpu.memory_space<vmem>>, %arg6: memref<128x128xbf16, #tpu.memory_space<vmem>>, %arg7: memref<1x128xf32, #tpu.memory_space<vmem>>, %arg8: memref<128x128xbf16, #tpu.memory_space<vmem>>, %arg9: memref<1x128xf32, #tpu.memory_space<vmem>>, %arg10: memref<640x128xbf16, #tpu.memory_space<vmem>>, %arg11: memref<1x128xf32, #tpu.memory_space<vmem>>, %arg12: memref<128x128xbf16, #tpu.memory_space<vmem>>, %arg13: memref<1x128xf32, #tpu.memory_space<vmem>>, %arg14: memref<128x128xbf16, #tpu.memory_space<vmem>>, %arg15: memref<1x128xf32, #tpu.memory_space<vmem>>, %arg16: memref<128x128xbf16, #tpu.memory_space<vmem>>, %arg17: memref<1x128xf32, #tpu.memory_space<vmem>>, %arg18: memref<16x128xf32, #tpu.memory_space<vmem>>) attributes {dimension_semantics = [#tpu.dimension_semantics<parallel>], iteration_bounds = array<i64: 1>, scalar_prefetch = 0 : i64, scratch_operands = 0 : i64, tpu.core_type = #tpu.core_type<tc>, window_params = [{transform_indices = @transform_0, window_bounds = array<i64: 16, 640>}, {pipeline_mode = #tpu.pipeline_mode<synchronous>, transform_indices = @transform_1, window_bounds = array<i64: 128, 128>}, {pipeline_mode = #tpu.pipeline_mode<synchronous>, transform_indices = @transform_2, window_bounds = array<i64: 1, 128>}, {pipeline_mode = #tpu.pipeline_mode<synchronous>, transform_indices = @transform_3, window_bounds = array<i64: 128, 128>}, {pipeline_mode = #tpu.pipeline_mode<synchronous>, transform_indices = @transform_4, window_bounds = array<i64: 1, 128>}, {pipeline_mode = #tpu.pipeline_mode<synchronous>, transform_indices = @transform_5, window_bounds = array<i64: 128, 128>}, {pipeline_mode = #tpu.pipeline_mode<synchronous>, transform_indices = @transform_6, window_bounds = array<i64: 1, 128>}, {pipeline_mode = #tpu.pipeline_mode<synchronous>, transform_indices = @transform_7, window_bounds = array<i64: 128, 128>}, {pipeline_mode = #tpu.pipeline_mode<synchronous>, transform_indices = @transform_8, window_bounds = array<i64: 1, 128>}, {pipeline_mode = #tpu.pipeline_mode<synchronous>, transform_indices = @transform_9, window_bounds = array<i64: 640, 128>}, {pipeline_mode = #tpu.pipeline_mode<synchronous>, transform_indices = @transform_10, window_bounds = array<i64: 1, 128>}, {pipeline_mode = #tpu.pipeline_mode<synchronous>, transform_indices = @transform_11, window_bounds = array<i64: 128, 128>}, {pipeline_mode = #tpu.pipeline_mode<synchronous>, transform_indices = @transform_12, window_bounds = array<i64: 1, 128>}, {pipeline_mode = #tpu.pipeline_mode<synchronous>, transform_indices = @transform_13, window_bounds = array<i64: 128, 128>}, {pipeline_mode = #tpu.pipeline_mode<synchronous>, transform_indices = @transform_14, window_bounds = array<i64: 1, 128>}, {pipeline_mode = #tpu.pipeline_mode<synchronous>, transform_indices = @transform_15, window_bounds = array<i64: 128, 128>}, {pipeline_mode = #tpu.pipeline_mode<synchronous>, transform_indices = @transform_16, window_bounds = array<i64: 1, 128>}, {transform_indices = @transform_17, window_bounds = array<i64: 16, 128>}]} {
    %c0 = arith.constant 0 : index
    %c0_0 = arith.constant 0 : index
    %0 = vector.load %arg1[%c0, %c0_0] : memref<16x640xbf16, #tpu.memory_space<vmem>>, vector<16x128xbf16>
    %c0_1 = arith.constant 0 : index
    %c0_2 = arith.constant 0 : index
    %1 = vector.load %arg2[%c0_1, %c0_2] : memref<128x128xbf16, #tpu.memory_space<vmem>>, vector<128x128xbf16>
    %cst = arith.constant dense<0.000000e+00> : vector<16x128xf32>
    %2 = tpu.matmul %0, %1, %cst {dimension_numbers = #tpu.dot_dimension_numbers<[1], [0], [0], [1], [0, 0, 1, 1], [], []>} : vector<16x128xbf16>, vector<128x128xbf16>, vector<16x128xf32> -> vector<16x128xf32>
    %c0_3 = arith.constant 0 : index
    %c0_4 = arith.constant 0 : index
    %3 = vector.load %arg3[%c0_3, %c0_4] : memref<1x128xf32, #tpu.memory_space<vmem>>, vector<1x128xf32>
    %4 = vector.broadcast %3 : vector<1x128xf32> to vector<16x128xf32>
    %5 = arith.addf %2, %4 : vector<16x128xf32>
    %cst_5 = arith.constant 0.000000e+00 : f32
    %6 = vector.broadcast %cst_5 : f32 to vector<16x128xf32>
    %7 = arith.maximumf %5, %6 : vector<16x128xf32>
    %8 = arith.truncf %7 : vector<16x128xf32> to vector<16x128xbf16>
    %c0_6 = arith.constant 0 : index
    %c128 = arith.constant 128 : index
    %9 = vector.load %arg1[%c0_6, %c128] : memref<16x640xbf16, #tpu.memory_space<vmem>>, vector<16x128xbf16>
    %c0_7 = arith.constant 0 : index
    %c0_8 = arith.constant 0 : index
    %10 = vector.load %arg2[%c0_7, %c0_8] : memref<128x128xbf16, #tpu.memory_space<vmem>>, vector<128x128xbf16>
    %cst_9 = arith.constant dense<0.000000e+00> : vector<16x128xf32>
    %11 = tpu.matmul %9, %10, %cst_9 {dimension_numbers = #tpu.dot_dimension_numbers<[1], [0], [0], [1], [0, 0, 1, 1], [], []>} : vector<16x128xbf16>, vector<128x128xbf16>, vector<16x128xf32> -> vector<16x128xf32>
    %c0_10 = arith.constant 0 : index
    %c0_11 = arith.constant 0 : index
    %12 = vector.load %arg3[%c0_10, %c0_11] : memref<1x128xf32, #tpu.memory_space<vmem>>, vector<1x128xf32>
    %13 = vector.broadcast %12 : vector<1x128xf32> to vector<16x128xf32>
    %14 = arith.addf %11, %13 : vector<16x128xf32>
    %cst_12 = arith.constant 0.000000e+00 : f32
    %15 = vector.broadcast %cst_12 : f32 to vector<16x128xf32>
    %16 = arith.maximumf %14, %15 : vector<16x128xf32>
    %17 = arith.truncf %16 : vector<16x128xf32> to vector<16x128xbf16>
    %c0_13 = arith.constant 0 : index
    %c256 = arith.constant 256 : index
    %18 = vector.load %arg1[%c0_13, %c256] : memref<16x640xbf16, #tpu.memory_space<vmem>>, vector<16x128xbf16>
    %c0_14 = arith.constant 0 : index
    %c0_15 = arith.constant 0 : index
    %19 = vector.load %arg2[%c0_14, %c0_15] : memref<128x128xbf16, #tpu.memory_space<vmem>>, vector<128x128xbf16>
    %cst_16 = arith.constant dense<0.000000e+00> : vector<16x128xf32>
    %20 = tpu.matmul %18, %19, %cst_16 {dimension_numbers = #tpu.dot_dimension_numbers<[1], [0], [0], [1], [0, 0, 1, 1], [], []>} : vector<16x128xbf16>, vector<128x128xbf16>, vector<16x128xf32> -> vector<16x128xf32>
    %c0_17 = arith.constant 0 : index
    %c0_18 = arith.constant 0 : index
    %21 = vector.load %arg3[%c0_17, %c0_18] : memref<1x128xf32, #tpu.memory_space<vmem>>, vector<1x128xf32>
    %22 = vector.broadcast %21 : vector<1x128xf32> to vector<16x128xf32>
    %23 = arith.addf %20, %22 : vector<16x128xf32>
    %cst_19 = arith.constant 0.000000e+00 : f32
    %24 = vector.broadcast %cst_19 : f32 to vector<16x128xf32>
    %25 = arith.maximumf %23, %24 : vector<16x128xf32>
    %26 = arith.truncf %25 : vector<16x128xf32> to vector<16x128xbf16>
    %c0_20 = arith.constant 0 : index
    %c384 = arith.constant 384 : index
    %27 = vector.load %arg1[%c0_20, %c384] : memref<16x640xbf16, #tpu.memory_space<vmem>>, vector<16x128xbf16>
    %c0_21 = arith.constant 0 : index
    %c0_22 = arith.constant 0 : index
    %28 = vector.load %arg2[%c0_21, %c0_22] : memref<128x128xbf16, #tpu.memory_space<vmem>>, vector<128x128xbf16>
    %cst_23 = arith.constant dense<0.000000e+00> : vector<16x128xf32>
    %29 = tpu.matmul %27, %28, %cst_23 {dimension_numbers = #tpu.dot_dimension_numbers<[1], [0], [0], [1], [0, 0, 1, 1], [], []>} : vector<16x128xbf16>, vector<128x128xbf16>, vector<16x128xf32> -> vector<16x128xf32>
    %c0_24 = arith.constant 0 : index
    %c0_25 = arith.constant 0 : index
    %30 = vector.load %arg3[%c0_24, %c0_25] : memref<1x128xf32, #tpu.memory_space<vmem>>, vector<1x128xf32>
    %31 = vector.broadcast %30 : vector<1x128xf32> to vector<16x128xf32>
    %32 = arith.addf %29, %31 : vector<16x128xf32>
    %cst_26 = arith.constant 0.000000e+00 : f32
    %33 = vector.broadcast %cst_26 : f32 to vector<16x128xf32>
    %34 = arith.maximumf %32, %33 : vector<16x128xf32>
    %35 = arith.truncf %34 : vector<16x128xf32> to vector<16x128xbf16>
    %c0_27 = arith.constant 0 : index
    %c512 = arith.constant 512 : index
    %36 = vector.load %arg1[%c0_27, %c512] : memref<16x640xbf16, #tpu.memory_space<vmem>>, vector<16x128xbf16>
    %c0_28 = arith.constant 0 : index
    %c0_29 = arith.constant 0 : index
    %37 = vector.load %arg2[%c0_28, %c0_29] : memref<128x128xbf16, #tpu.memory_space<vmem>>, vector<128x128xbf16>
    %cst_30 = arith.constant dense<0.000000e+00> : vector<16x128xf32>
    %38 = tpu.matmul %36, %37, %cst_30 {dimension_numbers = #tpu.dot_dimension_numbers<[1], [0], [0], [1], [0, 0, 1, 1], [], []>} : vector<16x128xbf16>, vector<128x128xbf16>, vector<16x128xf32> -> vector<16x128xf32>
    %c0_31 = arith.constant 0 : index
    %c0_32 = arith.constant 0 : index
    %39 = vector.load %arg3[%c0_31, %c0_32] : memref<1x128xf32, #tpu.memory_space<vmem>>, vector<1x128xf32>
    %40 = vector.broadcast %39 : vector<1x128xf32> to vector<16x128xf32>
    %41 = arith.addf %38, %40 : vector<16x128xf32>
    %cst_33 = arith.constant 0.000000e+00 : f32
    %42 = vector.broadcast %cst_33 : f32 to vector<16x128xf32>
    %43 = arith.maximumf %41, %42 : vector<16x128xf32>
    %44 = arith.truncf %43 : vector<16x128xf32> to vector<16x128xbf16>
    %45 = tpu.concatenate %8, %17, %26, %35, %44 in 0 : vector<16x128xbf16>, vector<16x128xbf16>, vector<16x128xbf16>, vector<16x128xbf16>, vector<16x128xbf16> -> vector<80x128xbf16>
    %c0_34 = arith.constant 0 : index
    %c0_35 = arith.constant 0 : index
    %46 = vector.load %arg4[%c0_34, %c0_35] : memref<128x128xbf16, #tpu.memory_space<vmem>>, vector<128x128xbf16>
    %cst_36 = arith.constant dense<0.000000e+00> : vector<80x128xf32>
    %47 = tpu.matmul %45, %46, %cst_36 {dimension_numbers = #tpu.dot_dimension_numbers<[1], [0], [0], [1], [0, 0, 1, 1], [], []>} : vector<80x128xbf16>, vector<128x128xbf16>, vector<80x128xf32> -> vector<80x128xf32>
    %c0_37 = arith.constant 0 : index
    %c0_38 = arith.constant 0 : index
    %48 = vector.load %arg5[%c0_37, %c0_38] : memref<1x128xf32, #tpu.memory_space<vmem>>, vector<1x128xf32>
    %49 = vector.broadcast %48 : vector<1x128xf32> to vector<80x128xf32>
    %50 = arith.addf %47, %49 : vector<80x128xf32>
    %cst_39 = arith.constant 0.000000e+00 : f32
    %51 = vector.broadcast %cst_39 : f32 to vector<80x128xf32>
    %52 = arith.maximumf %50, %51 : vector<80x128xf32>
    %53 = arith.truncf %52 : vector<80x128xf32> to vector<80x128xbf16>
    %c0_40 = arith.constant 0 : index
    %c0_41 = arith.constant 0 : index
    %54 = vector.load %arg6[%c0_40, %c0_41] : memref<128x128xbf16, #tpu.memory_space<vmem>>, vector<128x128xbf16>
    %cst_42 = arith.constant dense<0.000000e+00> : vector<80x128xf32>
    %55 = tpu.matmul %53, %54, %cst_42 {dimension_numbers = #tpu.dot_dimension_numbers<[1], [0], [0], [1], [0, 0, 1, 1], [], []>} : vector<80x128xbf16>, vector<128x128xbf16>, vector<80x128xf32> -> vector<80x128xf32>
    %c0_43 = arith.constant 0 : index
    %c0_44 = arith.constant 0 : index
    %56 = vector.load %arg7[%c0_43, %c0_44] : memref<1x128xf32, #tpu.memory_space<vmem>>, vector<1x128xf32>
    %57 = vector.broadcast %56 : vector<1x128xf32> to vector<80x128xf32>
    %58 = arith.addf %55, %57 : vector<80x128xf32>
    %cst_45 = arith.constant 0.000000e+00 : f32
    %59 = vector.broadcast %cst_45 : f32 to vector<80x128xf32>
    %60 = arith.maximumf %58, %59 : vector<80x128xf32>
    %61 = arith.truncf %60 : vector<80x128xf32> to vector<80x128xbf16>
    %c0_46 = arith.constant 0 : index
    %c0_47 = arith.constant 0 : index
    %62 = vector.load %arg8[%c0_46, %c0_47] : memref<128x128xbf16, #tpu.memory_space<vmem>>, vector<128x128xbf16>
    %cst_48 = arith.constant dense<0.000000e+00> : vector<80x128xf32>
    %63 = tpu.matmul %61, %62, %cst_48 {dimension_numbers = #tpu.dot_dimension_numbers<[1], [0], [0], [1], [0, 0, 1, 1], [], []>} : vector<80x128xbf16>, vector<128x128xbf16>, vector<80x128xf32> -> vector<80x128xf32>
    %c0_49 = arith.constant 0 : index
    %c0_50 = arith.constant 0 : index
    %64 = vector.load %arg9[%c0_49, %c0_50] : memref<1x128xf32, #tpu.memory_space<vmem>>, vector<1x128xf32>
    %65 = vector.broadcast %64 : vector<1x128xf32> to vector<80x128xf32>
    %66 = arith.addf %63, %65 : vector<80x128xf32>
    %67 = arith.truncf %66 : vector<80x128xf32> to vector<80x128xbf16>
    %68 = vector.extract_strided_slice %67 {offsets = [0, 0], sizes = [16, 128], strides = [1, 1]} : vector<80x128xbf16> to vector<16x128xbf16>
    %c0_51 = arith.constant 0 : index
    %c0_52 = arith.constant 0 : index
    %69 = vector.load %arg10[%c0_51, %c0_52] : memref<640x128xbf16, #tpu.memory_space<vmem>>, vector<128x128xbf16>
    %cst_53 = arith.constant dense<0.000000e+00> : vector<16x128xf32>
    %70 = tpu.matmul %68, %69, %cst_53 {dimension_numbers = #tpu.dot_dimension_numbers<[1], [0], [0], [1], [0, 0, 1, 1], [], []>} : vector<16x128xbf16>, vector<128x128xbf16>, vector<16x128xf32> -> vector<16x128xf32>
    %71 = vector.extract_strided_slice %67 {offsets = [16, 0], sizes = [16, 128], strides = [1, 1]} : vector<80x128xbf16> to vector<16x128xbf16>
    %c128_54 = arith.constant 128 : index
    %c0_55 = arith.constant 0 : index
    %72 = vector.load %arg10[%c128_54, %c0_55] : memref<640x128xbf16, #tpu.memory_space<vmem>>, vector<128x128xbf16>
    %cst_56 = arith.constant dense<0.000000e+00> : vector<16x128xf32>
    %73 = tpu.matmul %71, %72, %cst_56 {dimension_numbers = #tpu.dot_dimension_numbers<[1], [0], [0], [1], [0, 0, 1, 1], [], []>} : vector<16x128xbf16>, vector<128x128xbf16>, vector<16x128xf32> -> vector<16x128xf32>
    %74 = arith.addf %70, %73 : vector<16x128xf32>
    %75 = vector.extract_strided_slice %67 {offsets = [32, 0], sizes = [16, 128], strides = [1, 1]} : vector<80x128xbf16> to vector<16x128xbf16>
    %c256_57 = arith.constant 256 : index
    %c0_58 = arith.constant 0 : index
    %76 = vector.load %arg10[%c256_57, %c0_58] : memref<640x128xbf16, #tpu.memory_space<vmem>>, vector<128x128xbf16>
    %cst_59 = arith.constant dense<0.000000e+00> : vector<16x128xf32>
    %77 = tpu.matmul %75, %76, %cst_59 {dimension_numbers = #tpu.dot_dimension_numbers<[1], [0], [0], [1], [0, 0, 1, 1], [], []>} : vector<16x128xbf16>, vector<128x128xbf16>, vector<16x128xf32> -> vector<16x128xf32>
    %78 = arith.addf %74, %77 : vector<16x128xf32>
    %79 = vector.extract_strided_slice %67 {offsets = [48, 0], sizes = [16, 128], strides = [1, 1]} : vector<80x128xbf16> to vector<16x128xbf16>
    %c384_60 = arith.constant 384 : index
    %c0_61 = arith.constant 0 : index
    %80 = vector.load %arg10[%c384_60, %c0_61] : memref<640x128xbf16, #tpu.memory_space<vmem>>, vector<128x128xbf16>
    %cst_62 = arith.constant dense<0.000000e+00> : vector<16x128xf32>
    %81 = tpu.matmul %79, %80, %cst_62 {dimension_numbers = #tpu.dot_dimension_numbers<[1], [0], [0], [1], [0, 0, 1, 1], [], []>} : vector<16x128xbf16>, vector<128x128xbf16>, vector<16x128xf32> -> vector<16x128xf32>
    %82 = arith.addf %78, %81 : vector<16x128xf32>
    %83 = vector.extract_strided_slice %67 {offsets = [64, 0], sizes = [16, 128], strides = [1, 1]} : vector<80x128xbf16> to vector<16x128xbf16>
    %c512_63 = arith.constant 512 : index
    %c0_64 = arith.constant 0 : index
    %84 = vector.load %arg10[%c512_63, %c0_64] : memref<640x128xbf16, #tpu.memory_space<vmem>>, vector<128x128xbf16>
    %cst_65 = arith.constant dense<0.000000e+00> : vector<16x128xf32>
    %85 = tpu.matmul %83, %84, %cst_65 {dimension_numbers = #tpu.dot_dimension_numbers<[1], [0], [0], [1], [0, 0, 1, 1], [], []>} : vector<16x128xbf16>, vector<128x128xbf16>, vector<16x128xf32> -> vector<16x128xf32>
    %86 = arith.addf %82, %85 : vector<16x128xf32>
    %c0_66 = arith.constant 0 : index
    %c0_67 = arith.constant 0 : index
    %87 = vector.load %arg11[%c0_66, %c0_67] : memref<1x128xf32, #tpu.memory_space<vmem>>, vector<1x128xf32>
    %88 = vector.broadcast %87 : vector<1x128xf32> to vector<16x128xf32>
    %89 = arith.addf %86, %88 : vector<16x128xf32>
    %cst_68 = arith.constant 0.000000e+00 : f32
    %90 = vector.broadcast %cst_68 : f32 to vector<16x128xf32>
    %91 = arith.maximumf %89, %90 : vector<16x128xf32>
    %92 = arith.truncf %91 : vector<16x128xf32> to vector<16x128xbf16>
    %c0_69 = arith.constant 0 : index
    %c0_70 = arith.constant 0 : index
    %93 = vector.load %arg12[%c0_69, %c0_70] : memref<128x128xbf16, #tpu.memory_space<vmem>>, vector<128x128xbf16>
    %cst_71 = arith.constant dense<0.000000e+00> : vector<16x128xf32>
    %94 = tpu.matmul %92, %93, %cst_71 {dimension_numbers = #tpu.dot_dimension_numbers<[1], [0], [0], [1], [0, 0, 1, 1], [], []>} : vector<16x128xbf16>, vector<128x128xbf16>, vector<16x128xf32> -> vector<16x128xf32>
    %c0_72 = arith.constant 0 : index
    %c0_73 = arith.constant 0 : index
    %95 = vector.load %arg13[%c0_72, %c0_73] : memref<1x128xf32, #tpu.memory_space<vmem>>, vector<1x128xf32>
    %96 = vector.broadcast %95 : vector<1x128xf32> to vector<16x128xf32>
    %97 = arith.addf %94, %96 : vector<16x128xf32>
    %cst_74 = arith.constant 0.000000e+00 : f32
    %98 = vector.broadcast %cst_74 : f32 to vector<16x128xf32>
    %99 = arith.maximumf %97, %98 : vector<16x128xf32>
    %100 = arith.truncf %99 : vector<16x128xf32> to vector<16x128xbf16>
    %c0_75 = arith.constant 0 : index
    %c0_76 = arith.constant 0 : index
    %101 = vector.load %arg14[%c0_75, %c0_76] : memref<128x128xbf16, #tpu.memory_space<vmem>>, vector<128x128xbf16>
    %cst_77 = arith.constant dense<0.000000e+00> : vector<16x128xf32>
    %102 = tpu.matmul %100, %101, %cst_77 {dimension_numbers = #tpu.dot_dimension_numbers<[1], [0], [0], [1], [0, 0, 1, 1], [], []>} : vector<16x128xbf16>, vector<128x128xbf16>, vector<16x128xf32> -> vector<16x128xf32>
    %c0_78 = arith.constant 0 : index
    %c0_79 = arith.constant 0 : index
    %103 = vector.load %arg15[%c0_78, %c0_79] : memref<1x128xf32, #tpu.memory_space<vmem>>, vector<1x128xf32>
    %104 = vector.broadcast %103 : vector<1x128xf32> to vector<16x128xf32>
    %105 = arith.addf %102, %104 : vector<16x128xf32>
    %cst_80 = arith.constant 0.000000e+00 : f32
    %106 = vector.broadcast %cst_80 : f32 to vector<16x128xf32>
    %107 = arith.maximumf %105, %106 : vector<16x128xf32>
    %108 = arith.truncf %107 : vector<16x128xf32> to vector<16x128xbf16>
    %c0_81 = arith.constant 0 : index
    %c0_82 = arith.constant 0 : index
    %109 = vector.load %arg16[%c0_81, %c0_82] : memref<128x128xbf16, #tpu.memory_space<vmem>>, vector<128x128xbf16>
    %cst_83 = arith.constant dense<0.000000e+00> : vector<16x128xf32>
    %110 = tpu.matmul %108, %109, %cst_83 {dimension_numbers = #tpu.dot_dimension_numbers<[1], [0], [0], [1], [0, 0, 1, 1], [], []>} : vector<16x128xbf16>, vector<128x128xbf16>, vector<16x128xf32> -> vector<16x128xf32>
    %c0_84 = arith.constant 0 : index
    %c0_85 = arith.constant 0 : index
    %111 = vector.load %arg17[%c0_84, %c0_85] : memref<1x128xf32, #tpu.memory_space<vmem>>, vector<1x128xf32>
    %112 = vector.broadcast %111 : vector<1x128xf32> to vector<16x128xf32>
    %113 = arith.addf %110, %112 : vector<16x128xf32>
    %cst_86 = arith.constant dense<0xFF800000> : vector<16xf32>
    %114 = vector.multi_reduction <maximumf>, %113, %cst_86 [1] : vector<16x128xf32> to vector<16xf32>
    %115 = vector.shape_cast %114 : vector<16xf32> to vector<16x1xf32>
    %116 = vector.broadcast %115 : vector<16x1xf32> to vector<16x128xf32>
    %117 = arith.subf %113, %116 : vector<16x128xf32>
    %118 = math.exp %117 : vector<16x128xf32>
    %cst_87 = arith.constant dense<0.000000e+00> : vector<16xf32>
    %119 = vector.multi_reduction <add>, %118, %cst_87 [1] : vector<16x128xf32> to vector<16xf32>
    %120 = vector.shape_cast %119 : vector<16xf32> to vector<16x1xf32>
    %121 = math.log %120 : vector<16x1xf32>
    %122 = vector.broadcast %121 : vector<16x1xf32> to vector<16x128xf32>
    %123 = arith.subf %117, %122 : vector<16x128xf32>
    %c0_88 = arith.constant 0 : index
    %c0_89 = arith.constant 0 : index
    %124 = vector.load %arg18[%c0_88, %c0_89] : memref<16x128xf32, #tpu.memory_space<vmem>>, vector<16x128xf32>
    tpu.vector_store %arg18[%c0_88, %c0_89], %123 {strides = array<i32>} : memref<16x128xf32, #tpu.memory_space<vmem>>, vector<16x128xf32>,
    return
  }
  func.func @transform_0(%arg0: i32) -> (i32, i32) {
    %c0_i32 = arith.constant 0 : i32
    %c0_i32_0 = arith.constant 0 : i32
    return %arg0, %c0_i32 : i32, i32
  }
  func.func @transform_1(%arg0: i32) -> (i32, i32) {
    %c0_i32 = arith.constant 0 : i32
    %c0_i32_0 = arith.constant 0 : i32
    %c0_i32_1 = arith.constant 0 : i32
    return %c0_i32, %c0_i32_0 : i32, i32
  }
  func.func @transform_2(%arg0: i32) -> (i32, i32) {
    %c0_i32 = arith.constant 0 : i32
    %c0_i32_0 = arith.constant 0 : i32
    %c0_i32_1 = arith.constant 0 : i32
    return %c0_i32, %c0_i32_0 : i32, i32
  }
  func.func @transform_3(%arg0: i32) -> (i32, i32) {
    %c0_i32 = arith.constant 0 : i32
    %c0_i32_0 = arith.constant 0 : i32
    %c0_i32_1 = arith.constant 0 : i32
    return %c0_i32, %c0_i32_0 : i32, i32
  }
  func.func @transform_4(%arg0: i32) -> (i32, i32) {
    %c0_i32 = arith.constant 0 : i32
    %c0_i32_0 = arith.constant 0 : i32
    %c0_i32_1 = arith.constant 0 : i32
    return %c0_i32, %c0_i32_0 : i32, i32
  }
  func.func @transform_5(%arg0: i32) -> (i32, i32) {
    %c0_i32 = arith.constant 0 : i32
    %c0_i32_0 = arith.constant 0 : i32
    %c0_i32_1 = arith.constant 0 : i32
    return %c0_i32, %c0_i32_0 : i32, i32
  }
  func.func @transform_6(%arg0: i32) -> (i32, i32) {
    %c0_i32 = arith.constant 0 : i32
    %c0_i32_0 = arith.constant 0 : i32
    %c0_i32_1 = arith.constant 0 : i32
    return %c0_i32, %c0_i32_0 : i32, i32
  }
  func.func @transform_7(%arg0: i32) -> (i32, i32) {
    %c0_i32 = arith.constant 0 : i32
    %c0_i32_0 = arith.constant 0 : i32
    %c0_i32_1 = arith.constant 0 : i32
    return %c0_i32, %c0_i32_0 : i32, i32
  }
  func.func @transform_8(%arg0: i32) -> (i32, i32) {
    %c0_i32 = arith.constant 0 : i32
    %c0_i32_0 = arith.constant 0 : i32
    %c0_i32_1 = arith.constant 0 : i32
    return %c0_i32, %c0_i32_0 : i32, i32
  }
  func.func @transform_9(%arg0: i32) -> (i32, i32) {
    %c0_i32 = arith.constant 0 : i32
    %c0_i32_0 = arith.constant 0 : i32
    %c0_i32_1 = arith.constant 0 : i32
    return %c0_i32, %c0_i32_0 : i32, i32
  }
  func.func @transform_10(%arg0: i32) -> (i32, i32) {
    %c0_i32 = arith.constant 0 : i32
    %c0_i32_0 = arith.constant 0 : i32
    %c0_i32_1 = arith.constant 0 : i32
    return %c0_i32, %c0_i32_0 : i32, i32
  }
  func.func @transform_11(%arg0: i32) -> (i32, i32) {
    %c0_i32 = arith.constant 0 : i32
    %c0_i32_0 = arith.constant 0 : i32
    %c0_i32_1 = arith.constant 0 : i32
    return %c0_i32, %c0_i32_0 : i32, i32
  }
  func.func @transform_12(%arg0: i32) -> (i32, i32) {
    %c0_i32 = arith.constant 0 : i32
    %c0_i32_0 = arith.constant 0 : i32
    %c0_i32_1 = arith.constant 0 : i32
    return %c0_i32, %c0_i32_0 : i32, i32
  }
  func.func @transform_13(%arg0: i32) -> (i32, i32) {
    %c0_i32 = arith.constant 0 : i32
    %c0_i32_0 = arith.constant 0 : i32
    %c0_i32_1 = arith.constant 0 : i32
    return %c0_i32, %c0_i32_0 : i32, i32
  }
  func.func @transform_14(%arg0: i32) -> (i32, i32) {
    %c0_i32 = arith.constant 0 : i32
    %c0_i32_0 = arith.constant 0 : i32
    %c0_i32_1 = arith.constant 0 : i32
    return %c0_i32, %c0_i32_0 : i32, i32
  }
  func.func @transform_15(%arg0: i32) -> (i32, i32) {
    %c0_i32 = arith.constant 0 : i32
    %c0_i32_0 = arith.constant 0 : i32
    %c0_i32_1 = arith.constant 0 : i32
    return %c0_i32, %c0_i32_0 : i32, i32
  }
  func.func @transform_16(%arg0: i32) -> (i32, i32) {
    %c0_i32 = arith.constant 0 : i32
    %c0_i32_0 = arith.constant 0 : i32
    %c0_i32_1 = arith.constant 0 : i32
    return %c0_i32, %c0_i32_0 : i32, i32
  }
  func.func @transform_17(%arg0: i32) -> (i32, i32) {
    %c0_i32 = arith.constant 0 : i32
    %c0_i32_0 = arith.constant 0 : i32
    return %arg0, %c0_i32 : i32, i32
  }
}

module attributes {stable_mosaic.version = 11 : i64} {
  func.func @tied_classifier_kernel(%arg0: i32, %arg1: memref<16x640xbf16, #tpu.memory_space<vmem>>, %arg2: memref<128x128xbf16, #tpu.memory_space<vmem>>, %arg3: memref<1x128xf32, #tpu.memory_space<vmem>>, %arg4: memref<128x128xbf16, #tpu.memory_space<vmem>>, %arg5: memref<1x128xf32, #tpu.memory_space<vmem>>, %arg6: memref<128x128xbf16, #tpu.memory_space<vmem>>, %arg7: memref<1x128xf32, #tpu.memory_space<vmem>>, %arg8: memref<128x128xbf16, #tpu.memory_space<vmem>>, %arg9: memref<1x128xf32, #tpu.memory_space<vmem>>, %arg10: memref<640x128xbf16, #tpu.memory_space<vmem>>, %arg11: memref<1x128xf32, #tpu.memory_space<vmem>>, %arg12: memref<128x128xbf16, #tpu.memory_space<vmem>>, %arg13: memref<1x128xf32, #tpu.memory_space<vmem>>, %arg14: memref<128x128xbf16, #tpu.memory_space<vmem>>, %arg15: memref<1x128xf32, #tpu.memory_space<vmem>>, %arg16: memref<128x128xbf16, #tpu.memory_space<vmem>>, %arg17: memref<1x128xf32, #tpu.memory_space<vmem>>, %arg18: memref<16x128xf32, #tpu.memory_space<vmem>>) attributes {dimension_semantics = [#tpu.dimension_semantics<parallel>], iteration_bounds = array<i64: 1>, scalar_prefetch = 0 : i64, scratch_operands = 0 : i64, tpu.core_type = #tpu.core_type<tc>, window_params = [{transform_indices = @transform_0, window_bounds = array<i64: 16, 640>}, {pipeline_mode = #tpu.pipeline_mode<synchronous>, transform_indices = @transform_1, window_bounds = array<i64: 128, 128>}, {pipeline_mode = #tpu.pipeline_mode<synchronous>, transform_indices = @transform_2, window_bounds = array<i64: 1, 128>}, {pipeline_mode = #tpu.pipeline_mode<synchronous>, transform_indices = @transform_3, window_bounds = array<i64: 128, 128>}, {pipeline_mode = #tpu.pipeline_mode<synchronous>, transform_indices = @transform_4, window_bounds = array<i64: 1, 128>}, {pipeline_mode = #tpu.pipeline_mode<synchronous>, transform_indices = @transform_5, window_bounds = array<i64: 128, 128>}, {pipeline_mode = #tpu.pipeline_mode<synchronous>, transform_indices = @transform_6, window_bounds = array<i64: 1, 128>}, {pipeline_mode = #tpu.pipeline_mode<synchronous>, transform_indices = @transform_7, window_bounds = array<i64: 128, 128>}, {pipeline_mode = #tpu.pipeline_mode<synchronous>, transform_indices = @transform_8, window_bounds = array<i64: 1, 128>}, {pipeline_mode = #tpu.pipeline_mode<synchronous>, transform_indices = @transform_9, window_bounds = array<i64: 640, 128>}, {pipeline_mode = #tpu.pipeline_mode<synchronous>, transform_indices = @transform_10, window_bounds = array<i64: 1, 128>}, {pipeline_mode = #tpu.pipeline_mode<synchronous>, transform_indices = @transform_11, window_bounds = array<i64: 128, 128>}, {pipeline_mode = #tpu.pipeline_mode<synchronous>, transform_indices = @transform_12, window_bounds = array<i64: 1, 128>}, {pipeline_mode = #tpu.pipeline_mode<synchronous>, transform_indices = @transform_13, window_bounds = array<i64: 128, 128>}, {pipeline_mode = #tpu.pipeline_mode<synchronous>, transform_indices = @transform_14, window_bounds = array<i64: 1, 128>}, {pipeline_mode = #tpu.pipeline_mode<synchronous>, transform_indices = @transform_15, window_bounds = array<i64: 128, 128>}, {pipeline_mode = #tpu.pipeline_mode<synchronous>, transform_indices = @transform_16, window_bounds = array<i64: 1, 128>}, {transform_indices = @transform_17, window_bounds = array<i64: 16, 128>}]} {
    %c0 = arith.constant 0 : index
    %c0_0 = arith.constant 0 : index
    %0 = vector.load %arg1[%c0, %c0_0] : memref<16x640xbf16, #tpu.memory_space<vmem>>, vector<16x128xbf16>
    %c0_1 = arith.constant 0 : index
    %c0_2 = arith.constant 0 : index
    %1 = vector.load %arg2[%c0_1, %c0_2] : memref<128x128xbf16, #tpu.memory_space<vmem>>, vector<128x128xbf16>
    %cst = arith.constant dense<0.000000e+00> : vector<16x128xf32>
    %2 = tpu.matmul %0, %1, %cst {dimension_numbers = #tpu.dot_dimension_numbers<[1], [0], [0], [1], [0, 0, 1, 1], [], []>} : vector<16x128xbf16>, vector<128x128xbf16>, vector<16x128xf32> -> vector<16x128xf32>
    %c0_3 = arith.constant 0 : index
    %c0_4 = arith.constant 0 : index
    %3 = vector.load %arg3[%c0_3, %c0_4] : memref<1x128xf32, #tpu.memory_space<vmem>>, vector<1x128xf32>
    %4 = vector.broadcast %3 : vector<1x128xf32> to vector<16x128xf32>
    %5 = arith.addf %2, %4 : vector<16x128xf32>
    %cst_5 = arith.constant 0.000000e+00 : f32
    %6 = vector.broadcast %cst_5 : f32 to vector<16x128xf32>
    %7 = arith.maximumf %5, %6 : vector<16x128xf32>
    %8 = arith.truncf %7 : vector<16x128xf32> to vector<16x128xbf16>
    %c0_6 = arith.constant 0 : index
    %c128 = arith.constant 128 : index
    %9 = vector.load %arg1[%c0_6, %c128] : memref<16x640xbf16, #tpu.memory_space<vmem>>, vector<16x128xbf16>
    %c0_7 = arith.constant 0 : index
    %c0_8 = arith.constant 0 : index
    %10 = vector.load %arg2[%c0_7, %c0_8] : memref<128x128xbf16, #tpu.memory_space<vmem>>, vector<128x128xbf16>
    %cst_9 = arith.constant dense<0.000000e+00> : vector<16x128xf32>
    %11 = tpu.matmul %9, %10, %cst_9 {dimension_numbers = #tpu.dot_dimension_numbers<[1], [0], [0], [1], [0, 0, 1, 1], [], []>} : vector<16x128xbf16>, vector<128x128xbf16>, vector<16x128xf32> -> vector<16x128xf32>
    %c0_10 = arith.constant 0 : index
    %c0_11 = arith.constant 0 : index
    %12 = vector.load %arg3[%c0_10, %c0_11] : memref<1x128xf32, #tpu.memory_space<vmem>>, vector<1x128xf32>
    %13 = vector.broadcast %12 : vector<1x128xf32> to vector<16x128xf32>
    %14 = arith.addf %11, %13 : vector<16x128xf32>
    %cst_12 = arith.constant 0.000000e+00 : f32
    %15 = vector.broadcast %cst_12 : f32 to vector<16x128xf32>
    %16 = arith.maximumf %14, %15 : vector<16x128xf32>
    %17 = arith.truncf %16 : vector<16x128xf32> to vector<16x128xbf16>
    %c0_13 = arith.constant 0 : index
    %c256 = arith.constant 256 : index
    %18 = vector.load %arg1[%c0_13, %c256] : memref<16x640xbf16, #tpu.memory_space<vmem>>, vector<16x128xbf16>
    %c0_14 = arith.constant 0 : index
    %c0_15 = arith.constant 0 : index
    %19 = vector.load %arg2[%c0_14, %c0_15] : memref<128x128xbf16, #tpu.memory_space<vmem>>, vector<128x128xbf16>
    %cst_16 = arith.constant dense<0.000000e+00> : vector<16x128xf32>
    %20 = tpu.matmul %18, %19, %cst_16 {dimension_numbers = #tpu.dot_dimension_numbers<[1], [0], [0], [1], [0, 0, 1, 1], [], []>} : vector<16x128xbf16>, vector<128x128xbf16>, vector<16x128xf32> -> vector<16x128xf32>
    %c0_17 = arith.constant 0 : index
    %c0_18 = arith.constant 0 : index
    %21 = vector.load %arg3[%c0_17, %c0_18] : memref<1x128xf32, #tpu.memory_space<vmem>>, vector<1x128xf32>
    %22 = vector.broadcast %21 : vector<1x128xf32> to vector<16x128xf32>
    %23 = arith.addf %20, %22 : vector<16x128xf32>
    %cst_19 = arith.constant 0.000000e+00 : f32
    %24 = vector.broadcast %cst_19 : f32 to vector<16x128xf32>
    %25 = arith.maximumf %23, %24 : vector<16x128xf32>
    %26 = arith.truncf %25 : vector<16x128xf32> to vector<16x128xbf16>
    %c0_20 = arith.constant 0 : index
    %c384 = arith.constant 384 : index
    %27 = vector.load %arg1[%c0_20, %c384] : memref<16x640xbf16, #tpu.memory_space<vmem>>, vector<16x128xbf16>
    %c0_21 = arith.constant 0 : index
    %c0_22 = arith.constant 0 : index
    %28 = vector.load %arg2[%c0_21, %c0_22] : memref<128x128xbf16, #tpu.memory_space<vmem>>, vector<128x128xbf16>
    %cst_23 = arith.constant dense<0.000000e+00> : vector<16x128xf32>
    %29 = tpu.matmul %27, %28, %cst_23 {dimension_numbers = #tpu.dot_dimension_numbers<[1], [0], [0], [1], [0, 0, 1, 1], [], []>} : vector<16x128xbf16>, vector<128x128xbf16>, vector<16x128xf32> -> vector<16x128xf32>
    %c0_24 = arith.constant 0 : index
    %c0_25 = arith.constant 0 : index
    %30 = vector.load %arg3[%c0_24, %c0_25] : memref<1x128xf32, #tpu.memory_space<vmem>>, vector<1x128xf32>
    %31 = vector.broadcast %30 : vector<1x128xf32> to vector<16x128xf32>
    %32 = arith.addf %29, %31 : vector<16x128xf32>
    %cst_26 = arith.constant 0.000000e+00 : f32
    %33 = vector.broadcast %cst_26 : f32 to vector<16x128xf32>
    %34 = arith.maximumf %32, %33 : vector<16x128xf32>
    %35 = arith.truncf %34 : vector<16x128xf32> to vector<16x128xbf16>
    %c0_27 = arith.constant 0 : index
    %c512 = arith.constant 512 : index
    %36 = vector.load %arg1[%c0_27, %c512] : memref<16x640xbf16, #tpu.memory_space<vmem>>, vector<16x128xbf16>
    %c0_28 = arith.constant 0 : index
    %c0_29 = arith.constant 0 : index
    %37 = vector.load %arg2[%c0_28, %c0_29] : memref<128x128xbf16, #tpu.memory_space<vmem>>, vector<128x128xbf16>
    %cst_30 = arith.constant dense<0.000000e+00> : vector<16x128xf32>
    %38 = tpu.matmul %36, %37, %cst_30 {dimension_numbers = #tpu.dot_dimension_numbers<[1], [0], [0], [1], [0, 0, 1, 1], [], []>} : vector<16x128xbf16>, vector<128x128xbf16>, vector<16x128xf32> -> vector<16x128xf32>
    %c0_31 = arith.constant 0 : index
    %c0_32 = arith.constant 0 : index
    %39 = vector.load %arg3[%c0_31, %c0_32] : memref<1x128xf32, #tpu.memory_space<vmem>>, vector<1x128xf32>
    %40 = vector.broadcast %39 : vector<1x128xf32> to vector<16x128xf32>
    %41 = arith.addf %38, %40 : vector<16x128xf32>
    %cst_33 = arith.constant 0.000000e+00 : f32
    %42 = vector.broadcast %cst_33 : f32 to vector<16x128xf32>
    %43 = arith.maximumf %41, %42 : vector<16x128xf32>
    %44 = arith.truncf %43 : vector<16x128xf32> to vector<16x128xbf16>
    %45 = tpu.concatenate %8, %17, %26, %35, %44 in 0 : vector<16x128xbf16>, vector<16x128xbf16>, vector<16x128xbf16>, vector<16x128xbf16>, vector<16x128xbf16> -> vector<80x128xbf16>
    %c0_34 = arith.constant 0 : index
    %c0_35 = arith.constant 0 : index
    %46 = vector.load %arg4[%c0_34, %c0_35] : memref<128x128xbf16, #tpu.memory_space<vmem>>, vector<128x128xbf16>
    %cst_36 = arith.constant dense<0.000000e+00> : vector<80x128xf32>
    %47 = tpu.matmul %45, %46, %cst_36 {dimension_numbers = #tpu.dot_dimension_numbers<[1], [0], [0], [1], [0, 0, 1, 1], [], []>} : vector<80x128xbf16>, vector<128x128xbf16>, vector<80x128xf32> -> vector<80x128xf32>
    %c0_37 = arith.constant 0 : index
    %c0_38 = arith.constant 0 : index
    %48 = vector.load %arg5[%c0_37, %c0_38] : memref<1x128xf32, #tpu.memory_space<vmem>>, vector<1x128xf32>
    %49 = vector.broadcast %48 : vector<1x128xf32> to vector<80x128xf32>
    %50 = arith.addf %47, %49 : vector<80x128xf32>
    %cst_39 = arith.constant 0.000000e+00 : f32
    %51 = vector.broadcast %cst_39 : f32 to vector<80x128xf32>
    %52 = arith.maximumf %50, %51 : vector<80x128xf32>
    %53 = arith.truncf %52 : vector<80x128xf32> to vector<80x128xbf16>
    %c0_40 = arith.constant 0 : index
    %c0_41 = arith.constant 0 : index
    %54 = vector.load %arg6[%c0_40, %c0_41] : memref<128x128xbf16, #tpu.memory_space<vmem>>, vector<128x128xbf16>
    %cst_42 = arith.constant dense<0.000000e+00> : vector<80x128xf32>
    %55 = tpu.matmul %53, %54, %cst_42 {dimension_numbers = #tpu.dot_dimension_numbers<[1], [0], [0], [1], [0, 0, 1, 1], [], []>} : vector<80x128xbf16>, vector<128x128xbf16>, vector<80x128xf32> -> vector<80x128xf32>
    %c0_43 = arith.constant 0 : index
    %c0_44 = arith.constant 0 : index
    %56 = vector.load %arg7[%c0_43, %c0_44] : memref<1x128xf32, #tpu.memory_space<vmem>>, vector<1x128xf32>
    %57 = vector.broadcast %56 : vector<1x128xf32> to vector<80x128xf32>
    %58 = arith.addf %55, %57 : vector<80x128xf32>
    %cst_45 = arith.constant 0.000000e+00 : f32
    %59 = vector.broadcast %cst_45 : f32 to vector<80x128xf32>
    %60 = arith.maximumf %58, %59 : vector<80x128xf32>
    %61 = arith.truncf %60 : vector<80x128xf32> to vector<80x128xbf16>
    %c0_46 = arith.constant 0 : index
    %c0_47 = arith.constant 0 : index
    %62 = vector.load %arg8[%c0_46, %c0_47] : memref<128x128xbf16, #tpu.memory_space<vmem>>, vector<128x128xbf16>
    %cst_48 = arith.constant dense<0.000000e+00> : vector<80x128xf32>
    %63 = tpu.matmul %61, %62, %cst_48 {dimension_numbers = #tpu.dot_dimension_numbers<[1], [0], [0], [1], [0, 0, 1, 1], [], []>} : vector<80x128xbf16>, vector<128x128xbf16>, vector<80x128xf32> -> vector<80x128xf32>
    %c0_49 = arith.constant 0 : index
    %c0_50 = arith.constant 0 : index
    %64 = vector.load %arg9[%c0_49, %c0_50] : memref<1x128xf32, #tpu.memory_space<vmem>>, vector<1x128xf32>
    %65 = vector.broadcast %64 : vector<1x128xf32> to vector<80x128xf32>
    %66 = arith.addf %63, %65 : vector<80x128xf32>
    %67 = arith.truncf %66 : vector<80x128xf32> to vector<80x128xbf16>
    %68 = vector.extract_strided_slice %67 {offsets = [0, 0], sizes = [16, 128], strides = [1, 1]} : vector<80x128xbf16> to vector<16x128xbf16>
    %c0_51 = arith.constant 0 : index
    %c0_52 = arith.constant 0 : index
    %69 = vector.load %arg10[%c0_51, %c0_52] : memref<640x128xbf16, #tpu.memory_space<vmem>>, vector<128x128xbf16>
    %cst_53 = arith.constant dense<0.000000e+00> : vector<16x128xf32>
    %70 = tpu.matmul %68, %69, %cst_53 {dimension_numbers = #tpu.dot_dimension_numbers<[1], [0], [0], [1], [0, 0, 1, 1], [], []>} : vector<16x128xbf16>, vector<128x128xbf16>, vector<16x128xf32> -> vector<16x128xf32>
    %71 = vector.extract_strided_slice %67 {offsets = [16, 0], sizes = [16, 128], strides = [1, 1]} : vector<80x128xbf16> to vector<16x128xbf16>
    %c128_54 = arith.constant 128 : index
    %c0_55 = arith.constant 0 : index
    %72 = vector.load %arg10[%c128_54, %c0_55] : memref<640x128xbf16, #tpu.memory_space<vmem>>, vector<128x128xbf16>
    %cst_56 = arith.constant dense<0.000000e+00> : vector<16x128xf32>
    %73 = tpu.matmul %71, %72, %cst_56 {dimension_numbers = #tpu.dot_dimension_numbers<[1], [0], [0], [1], [0, 0, 1, 1], [], []>} : vector<16x128xbf16>, vector<128x128xbf16>, vector<16x128xf32> -> vector<16x128xf32>
    %74 = arith.addf %70, %73 : vector<16x128xf32>
    %75 = vector.extract_strided_slice %67 {offsets = [32, 0], sizes = [16, 128], strides = [1, 1]} : vector<80x128xbf16> to vector<16x128xbf16>
    %c256_57 = arith.constant 256 : index
    %c0_58 = arith.constant 0 : index
    %76 = vector.load %arg10[%c256_57, %c0_58] : memref<640x128xbf16, #tpu.memory_space<vmem>>, vector<128x128xbf16>
    %cst_59 = arith.constant dense<0.000000e+00> : vector<16x128xf32>
    %77 = tpu.matmul %75, %76, %cst_59 {dimension_numbers = #tpu.dot_dimension_numbers<[1], [0], [0], [1], [0, 0, 1, 1], [], []>} : vector<16x128xbf16>, vector<128x128xbf16>, vector<16x128xf32> -> vector<16x128xf32>
    %78 = arith.addf %74, %77 : vector<16x128xf32>
    %79 = vector.extract_strided_slice %67 {offsets = [48, 0], sizes = [16, 128], strides = [1, 1]} : vector<80x128xbf16> to vector<16x128xbf16>
    %c384_60 = arith.constant 384 : index
    %c0_61 = arith.constant 0 : index
    %80 = vector.load %arg10[%c384_60, %c0_61] : memref<640x128xbf16, #tpu.memory_space<vmem>>, vector<128x128xbf16>
    %cst_62 = arith.constant dense<0.000000e+00> : vector<16x128xf32>
    %81 = tpu.matmul %79, %80, %cst_62 {dimension_numbers = #tpu.dot_dimension_numbers<[1], [0], [0], [1], [0, 0, 1, 1], [], []>} : vector<16x128xbf16>, vector<128x128xbf16>, vector<16x128xf32> -> vector<16x128xf32>
    %82 = arith.addf %78, %81 : vector<16x128xf32>
    %83 = vector.extract_strided_slice %67 {offsets = [64, 0], sizes = [16, 128], strides = [1, 1]} : vector<80x128xbf16> to vector<16x128xbf16>
    %c512_63 = arith.constant 512 : index
    %c0_64 = arith.constant 0 : index
    %84 = vector.load %arg10[%c512_63, %c0_64] : memref<640x128xbf16, #tpu.memory_space<vmem>>, vector<128x128xbf16>
    %cst_65 = arith.constant dense<0.000000e+00> : vector<16x128xf32>
    %85 = tpu.matmul %83, %84, %cst_65 {dimension_numbers = #tpu.dot_dimension_numbers<[1], [0], [0], [1], [0, 0, 1, 1], [], []>} : vector<16x128xbf16>, vector<128x128xbf16>, vector<16x128xf32> -> vector<16x128xf32>
    %86 = arith.addf %82, %85 : vector<16x128xf32>
    %c0_66 = arith.constant 0 : index
    %c0_67 = arith.constant 0 : index
    %87 = vector.load %arg11[%c0_66, %c0_67] : memref<1x128xf32, #tpu.memory_space<vmem>>, vector<1x128xf32>
    %88 = vector.broadcast %87 : vector<1x128xf32> to vector<16x128xf32>
    %89 = arith.addf %86, %88 : vector<16x128xf32>
    %cst_68 = arith.constant 0.000000e+00 : f32
    %90 = vector.broadcast %cst_68 : f32 to vector<16x128xf32>
    %91 = arith.maximumf %89, %90 : vector<16x128xf32>
    %92 = arith.truncf %91 : vector<16x128xf32> to vector<16x128xbf16>
    %c0_69 = arith.constant 0 : index
    %c0_70 = arith.constant 0 : index
    %93 = vector.load %arg12[%c0_69, %c0_70] : memref<128x128xbf16, #tpu.memory_space<vmem>>, vector<128x128xbf16>
    %cst_71 = arith.constant dense<0.000000e+00> : vector<16x128xf32>
    %94 = tpu.matmul %92, %93, %cst_71 {dimension_numbers = #tpu.dot_dimension_numbers<[1], [0], [0], [1], [0, 0, 1, 1], [], []>} : vector<16x128xbf16>, vector<128x128xbf16>, vector<16x128xf32> -> vector<16x128xf32>
    %c0_72 = arith.constant 0 : index
    %c0_73 = arith.constant 0 : index
    %95 = vector.load %arg13[%c0_72, %c0_73] : memref<1x128xf32, #tpu.memory_space<vmem>>, vector<1x128xf32>
    %96 = vector.broadcast %95 : vector<1x128xf32> to vector<16x128xf32>
    %97 = arith.addf %94, %96 : vector<16x128xf32>
    %cst_74 = arith.constant 0.000000e+00 : f32
    %98 = vector.broadcast %cst_74 : f32 to vector<16x128xf32>
    %99 = arith.maximumf %97, %98 : vector<16x128xf32>
    %100 = arith.truncf %99 : vector<16x128xf32> to vector<16x128xbf16>
    %c0_75 = arith.constant 0 : index
    %c0_76 = arith.constant 0 : index
    %101 = vector.load %arg14[%c0_75, %c0_76] : memref<128x128xbf16, #tpu.memory_space<vmem>>, vector<128x128xbf16>
    %cst_77 = arith.constant dense<0.000000e+00> : vector<16x128xf32>
    %102 = tpu.matmul %100, %101, %cst_77 {dimension_numbers = #tpu.dot_dimension_numbers<[1], [0], [0], [1], [0, 0, 1, 1], [], []>} : vector<16x128xbf16>, vector<128x128xbf16>, vector<16x128xf32> -> vector<16x128xf32>
    %c0_78 = arith.constant 0 : index
    %c0_79 = arith.constant 0 : index
    %103 = vector.load %arg15[%c0_78, %c0_79] : memref<1x128xf32, #tpu.memory_space<vmem>>, vector<1x128xf32>
    %104 = vector.broadcast %103 : vector<1x128xf32> to vector<16x128xf32>
    %105 = arith.addf %102, %104 : vector<16x128xf32>
    %cst_80 = arith.constant 0.000000e+00 : f32
    %106 = vector.broadcast %cst_80 : f32 to vector<16x128xf32>
    %107 = arith.maximumf %105, %106 : vector<16x128xf32>
    %108 = arith.truncf %107 : vector<16x128xf32> to vector<16x128xbf16>
    %c0_81 = arith.constant 0 : index
    %c0_82 = arith.constant 0 : index
    %109 = vector.load %arg16[%c0_81, %c0_82] : memref<128x128xbf16, #tpu.memory_space<vmem>>, vector<128x128xbf16>
    %cst_83 = arith.constant dense<0.000000e+00> : vector<16x128xf32>
    %110 = tpu.matmul %108, %109, %cst_83 {dimension_numbers = #tpu.dot_dimension_numbers<[1], [0], [0], [1], [0, 0, 1, 1], [], []>} : vector<16x128xbf16>, vector<128x128xbf16>, vector<16x128xf32> -> vector<16x128xf32>
    %c0_84 = arith.constant 0 : index
    %c0_85 = arith.constant 0 : index
    %111 = vector.load %arg17[%c0_84, %c0_85] : memref<1x128xf32, #tpu.memory_space<vmem>>, vector<1x128xf32>
    %112 = vector.broadcast %111 : vector<1x128xf32> to vector<16x128xf32>
    %113 = arith.addf %110, %112 : vector<16x128xf32>
    %cst_86 = arith.constant dense<0xFF800000> : vector<16xf32>
    %114 = vector.multi_reduction <maximumf>, %113, %cst_86 [1] : vector<16x128xf32> to vector<16xf32>
    %115 = vector.shape_cast %114 : vector<16xf32> to vector<16x1xf32>
    %116 = vector.broadcast %115 : vector<16x1xf32> to vector<16x128xf32>
    %117 = arith.subf %113, %116 : vector<16x128xf32>
    %118 = math.exp %117 : vector<16x128xf32>
    %cst_87 = arith.constant dense<0.000000e+00> : vector<16xf32>
    %119 = vector.multi_reduction <add>, %118, %cst_87 [1] : vector<16x128xf32> to vector<16xf32>
    %120 = vector.shape_cast %119 : vector<16xf32> to vector<16x1xf32>
    %121 = math.log %120 : vector<16x1xf32>
    %122 = vector.broadcast %121 : vector<16x1xf32> to vector<16x128xf32>
    %123 = arith.subf %117, %122 : vector<16x128xf32>
    %c0_88 = arith.constant 0 : index
    %c0_89 = arith.constant 0 : index
    %124 = vector.load %arg18[%c0_88, %c0_89] : memref<16x128xf32, #tpu.memory_space<vmem>>, vector<16x128xf32>
    tpu.vector_store %arg18[%c0_88, %c0_89], %123 {strides = array<i32>} : memref<16x128xf32, #tpu.memory_space<vmem>>, vector<16x128xf32>,
    return
  }
  func.func @transform_0(%arg0: i32) -> (i32, i32) {
    %c0_i32 = arith.constant 0 : i32
    %c0_i32_0 = arith.constant 0 : i32
    return %arg0, %c0_i32 : i32, i32
  }
  func.func @transform_1(%arg0: i32) -> (i32, i32) {
    %c0_i32 = arith.constant 0 : i32
    %c0_i32_0 = arith.constant 0 : i32
    %c0_i32_1 = arith.constant 0 : i32
    return %c0_i32, %c0_i32_0 : i32, i32
  }
  func.func @transform_2(%arg0: i32) -> (i32, i32) {
    %c0_i32 = arith.constant 0 : i32
    %c0_i32_0 = arith.constant 0 : i32
    %c0_i32_1 = arith.constant 0 : i32
    return %c0_i32, %c0_i32_0 : i32, i32
  }
  func.func @transform_3(%arg0: i32) -> (i32, i32) {
    %c0_i32 = arith.constant 0 : i32
    %c0_i32_0 = arith.constant 0 : i32
    %c0_i32_1 = arith.constant 0 : i32
    return %c0_i32, %c0_i32_0 : i32, i32
  }
  func.func @transform_4(%arg0: i32) -> (i32, i32) {
    %c0_i32 = arith.constant 0 : i32
    %c0_i32_0 = arith.constant 0 : i32
    %c0_i32_1 = arith.constant 0 : i32
    return %c0_i32, %c0_i32_0 : i32, i32
  }
  func.func @transform_5(%arg0: i32) -> (i32, i32) {
    %c0_i32 = arith.constant 0 : i32
    %c0_i32_0 = arith.constant 0 : i32
    %c0_i32_1 = arith.constant 0 : i32
    return %c0_i32, %c0_i32_0 : i32, i32
  }
  func.func @transform_6(%arg0: i32) -> (i32, i32) {
    %c0_i32 = arith.constant 0 : i32
    %c0_i32_0 = arith.constant 0 : i32
    %c0_i32_1 = arith.constant 0 : i32
    return %c0_i32, %c0_i32_0 : i32, i32
  }
  func.func @transform_7(%arg0: i32) -> (i32, i32) {
    %c0_i32 = arith.constant 0 : i32
    %c0_i32_0 = arith.constant 0 : i32
    %c0_i32_1 = arith.constant 0 : i32
    return %c0_i32, %c0_i32_0 : i32, i32
  }
  func.func @transform_8(%arg0: i32) -> (i32, i32) {
    %c0_i32 = arith.constant 0 : i32
    %c0_i32_0 = arith.constant 0 : i32
    %c0_i32_1 = arith.constant 0 : i32
    return %c0_i32, %c0_i32_0 : i32, i32
  }
  func.func @transform_9(%arg0: i32) -> (i32, i32) {
    %c0_i32 = arith.constant 0 : i32
    %c0_i32_0 = arith.constant 0 : i32
    %c0_i32_1 = arith.constant 0 : i32
    return %c0_i32, %c0_i32_0 : i32, i32
  }
  func.func @transform_10(%arg0: i32) -> (i32, i32) {
    %c0_i32 = arith.constant 0 : i32
    %c0_i32_0 = arith.constant 0 : i32
    %c0_i32_1 = arith.constant 0 : i32
    return %c0_i32, %c0_i32_0 : i32, i32
  }
  func.func @transform_11(%arg0: i32) -> (i32, i32) {
    %c0_i32 = arith.constant 0 : i32
    %c0_i32_0 = arith.constant 0 : i32
    %c0_i32_1 = arith.constant 0 : i32
    return %c0_i32, %c0_i32_0 : i32, i32
  }
  func.func @transform_12(%arg0: i32) -> (i32, i32) {
    %c0_i32 = arith.constant 0 : i32
    %c0_i32_0 = arith.constant 0 : i32
    %c0_i32_1 = arith.constant 0 : i32
    return %c0_i32, %c0_i32_0 : i32, i32
  }
  func.func @transform_13(%arg0: i32) -> (i32, i32) {
    %c0_i32 = arith.constant 0 : i32
    %c0_i32_0 = arith.constant 0 : i32
    %c0_i32_1 = arith.constant 0 : i32
    return %c0_i32, %c0_i32_0 : i32, i32
  }
  func.func @transform_14(%arg0: i32) -> (i32, i32) {
    %c0_i32 = arith.constant 0 : i32
    %c0_i32_0 = arith.constant 0 : i32
    %c0_i32_1 = arith.constant 0 : i32
    return %c0_i32, %c0_i32_0 : i32, i32
  }
  func.func @transform_15(%arg0: i32) -> (i32, i32) {
    %c0_i32 = arith.constant 0 : i32
    %c0_i32_0 = arith.constant 0 : i32
    %c0_i32_1 = arith.constant 0 : i32
    return %c0_i32, %c0_i32_0 : i32, i32
  }
  func.func @transform_16(%arg0: i32) -> (i32, i32) {
    %c0_i32 = arith.constant 0 : i32
    %c0_i32_0 = arith.constant 0 : i32
    %c0_i32_1 = arith.constant 0 : i32
    return %c0_i32, %c0_i32_0 : i32, i32
  }
  func.func @transform_17(%arg0: i32) -> (i32, i32) {
    %c0_i32 = arith.constant 0 : i32
    %c0_i32_0 = arith.constant 0 : i32
    return %arg0, %c0_i32 : i32, i32
  }
}

</mosaic_0001>

<llo_original>
// kernel: tpu_custom_call.1
$region0: #{tpu_custom_call.1}
  #allocation0 [shape = 'u32[]', space=smem, size = 0x4, offset = 0x4, fixed_abs, tag = 'smem constant byte address 0x4 - core index']
  #allocation1 [shape = 'u32[72,128]{1,0:T(1,128)}', space=vmem, size = 0x9000, scoped, tag = 'internal scratch']
  %s0 = inlined_call_operand.hbm [shape: bf16[16,640], index: 0, kind: input, shape index: {}]
  %s1 = inlined_call_operand.hbm [shape: bf16[128,128], index: 1, kind: input, shape index: {}]
  %s2 = inlined_call_operand.vmem [shape: f32[1,128], index: 2, kind: input, shape index: {}]
  %s3 = inlined_call_operand.hbm [shape: bf16[128,128], index: 3, kind: input, shape index: {}]
  %s4 = inlined_call_operand.vmem [shape: f32[1,128], index: 4, kind: input, shape index: {}]
  %s5 = inlined_call_operand.hbm [shape: bf16[128,128], index: 5, kind: input, shape index: {}]
  %s6 = inlined_call_operand.vmem [shape: f32[1,128], index: 6, kind: input, shape index: {}]
  %s7 = inlined_call_operand.hbm [shape: bf16[128,128], index: 7, kind: input, shape index: {}]
  %s8 = inlined_call_operand.vmem [shape: f32[1,128], index: 8, kind: input, shape index: {}]
  %s9 = inlined_call_operand.hbm [shape: bf16[640,128], index: 9, kind: input, shape index: {}]
  %s10 = inlined_call_operand.vmem [shape: f32[1,128], index: 10, kind: input, shape index: {}]
  %s11 = inlined_call_operand.hbm [shape: bf16[128,128], index: 11, kind: input, shape index: {}]
  %s12 = inlined_call_operand.vmem [shape: f32[1,128], index: 12, kind: input, shape index: {}]
  %s13 = inlined_call_operand.hbm [shape: bf16[128,128], index: 13, kind: input, shape index: {}]
  %s14 = inlined_call_operand.vmem [shape: f32[1,128], index: 14, kind: input, shape index: {}]
  %s15 = inlined_call_operand.hbm [shape: bf16[128,128], index: 15, kind: input, shape index: {}]
  %s16 = inlined_call_operand.vmem [shape: f32[1,128], index: 16, kind: input, shape index: {}]
  %s17 = inlined_call_operand.hbm [shape: f32[16,128], index: 17, kind: output, shape index: {}]
  %s18 = sld [smem:[#allocation0]]
  $region114: #{tpu_custom_call.1} parent=0
    _
  %s20 = ssub.s32 1, %s18
  %s21 = scalar_select 0, %s20, %s18
  $region1: #{tpu_custom_call.1} parent=0
    #allocation2 [shape = 'u8[20480]{0}', space=vmem, size = 0x5000, scoped, tag = 'input window, operand 0, single buffered']
    #allocation3 [shape = 's32[1]{0}', space=sflag, size = 0x4, scoped, tag = 'scoped memory for tpu_custom_call.1']
    #allocation4 [shape = 's32[1]{0}', space=sflag, size = 0x4, scoped, tag = 'scoped memory for tpu_custom_call.1']
    #allocation5 [shape = 'u8[32768]{0}', space=vmem, size = 0x8000, scoped, tag = 'input window, operand 1, single buffered']
    #allocation6 [shape = 's32[1]{0}', space=sflag, size = 0x4, scoped, tag = 'scoped memory for tpu_custom_call.1']
    #allocation7 [shape = 'u8[32768]{0}', space=vmem, size = 0x8000, scoped, tag = 'input window, operand 3, single buffered']
    #allocation8 [shape = 'u8[32768]{0}', space=vmem, size = 0x8000, scoped, tag = 'input window, operand 5, single buffered']
    #allocation9 [shape = 's32[1]{0}', space=sflag, size = 0x4, scoped, tag = 'scoped memory for tpu_custom_call.1']
    #allocation10 [shape = 'u8[32768]{0}', space=vmem, size = 0x8000, scoped, tag = 'input window, operand 7, single buffered']
    #allocation11 [shape = 'u8[163840]{0}', space=vmem, size = 0x28000, scoped, tag = 'input window, operand 9, single buffered']
    #allocation12 [shape = 's32[1]{0}', space=sflag, size = 0x4, scoped, tag = 'scoped memory for tpu_custom_call.1']
    #allocation13 [shape = 'u8[32768]{0}', space=vmem, size = 0x8000, scoped, tag = 'input window, operand 11, single buffered']
    #allocation14 [shape = 'u8[32768]{0}', space=vmem, size = 0x8000, scoped, tag = 'input window, operand 13, single buffered']
    #allocation15 [shape = 's32[1]{0}', space=sflag, size = 0x4, scoped, tag = 'scoped memory for tpu_custom_call.1']
    #allocation16 [shape = 'u8[32768]{0}', space=vmem, size = 0x8000, scoped, tag = 'input window, operand 15, single buffered']
    #allocation17 [shape = 'u8[8192]{0}', space=vmem, size = 0x2000, scoped, tag = 'output window, operand 0, single buffered']
    %22 = vsyncpa [#allocation3], 0
    %23 = vsyncpa [#allocation6], 0
    %24 = vsyncpa [#allocation9], 0
    %25 = vsyncpa [#allocation12], 0
    %26 = vsyncpa [#allocation15], 0
    %27 = vsyncpa [#allocation4], 0
    // Predicated region
    $region2: #{tpu_custom_call.1} parent=1 // pred_check
      _
    $region3: #{tpu_custom_call.1} parent=1 // pred_check_branch
      %29 = sbr.rel (0) target = $region5
    $region4: #{tpu_custom_call.1} parent=1 // pred_region
      %31 = vsyncadd [#allocation3], 0
      %s32 = sshll.u32 %s0, 4
      %s33 = int_to_ptr.hbm [resolvable:$true] %s32
      %s34 = sshll.u32 [#allocation2], 4
      %s35 = int_to_ptr.vmem [resolvable:$true] %s34
      %40 = dma.hbm_to_vmem [thread:$0]  %s33, 640, %s35, [#allocation3], 320, 320, 20
    $region5: #{tpu_custom_call.1} parent=1 // pred_fallthru
      _
    // Predicated region
    $region6: #{tpu_custom_call.1} parent=1 // pred_check
      _
    $region7: #{tpu_custom_call.1} parent=1 // pred_check_branch
      %42 = sbr.rel (0) target = $region9
    $region8: #{tpu_custom_call.1} parent=1 // pred_region
      %44 = vsyncadd [#allocation6], 0
      %s45 = sshll.u32 %s1, 4
      %s46 = int_to_ptr.hbm [resolvable:$true] %s45
      %s47 = sshll.u32 [#allocation5], 4
      %s48 = int_to_ptr.vmem [resolvable:$true] %s47
      %53 = dma.hbm_to_vmem [thread:$0]  %s46, 1024, %s48, [#allocation6], 64, 64, 4
    $region9: #{tpu_custom_call.1} parent=1 // pred_fallthru
      _
    // Predicated region
    $region10: #{tpu_custom_call.1} parent=1 // pred_check
      _
    $region11: #{tpu_custom_call.1} parent=1 // pred_check_branch
      %55 = sbr.rel (0) target = $region13
    $region12: #{tpu_custom_call.1} parent=1 // pred_region
      _
    $region13: #{tpu_custom_call.1} parent=1 // pred_fallthru
      _
    // Predicated region
    $region14: #{tpu_custom_call.1} parent=1 // pred_check
      _
    $region15: #{tpu_custom_call.1} parent=1 // pred_check_branch
      %57 = sbr.rel (0) target = $region17
    $region16: #{tpu_custom_call.1} parent=1 // pred_region
      %59 = vsyncadd [#allocation6], 0
      %s60 = sshll.u32 %s3, 4
      %s61 = int_to_ptr.hbm [resolvable:$true] %s60
      %s62 = sshll.u32 [#allocation7], 4
      %s63 = int_to_ptr.vmem [resolvable:$true] %s62
      %68 = dma.hbm_to_vmem [thread:$0]  %s61, 1024, %s63, [#allocation6], 64, 64, 4
    $region17: #{tpu_custom_call.1} parent=1 // pred_fallthru
      _
    // Predicated region
    $region18: #{tpu_custom_call.1} parent=1 // pred_check
      _
    $region19: #{tpu_custom_call.1} parent=1 // pred_check_branch
      %70 = sbr.rel (0) target = $region21
    $region20: #{tpu_custom_call.1} parent=1 // pred_region
      _
    $region21: #{tpu_custom_call.1} parent=1 // pred_fallthru
      _
    // Predicated region
    $region22: #{tpu_custom_call.1} parent=1 // pred_check
      _
    $region23: #{tpu_custom_call.1} parent=1 // pred_check_branch
      %72 = sbr.rel (0) target = $region25
    $region24: #{tpu_custom_call.1} parent=1 // pred_region
      %74 = vsyncadd [#allocation9], 0
      %s75 = sshll.u32 %s5, 4
      %s76 = int_to_ptr.hbm [resolvable:$true] %s75
      %s77 = sshll.u32 [#allocation8], 4
      %s78 = int_to_ptr.vmem [resolvable:$true] %s77
      %83 = dma.hbm_to_vmem [thread:$0]  %s76, 1024, %s78, [#allocation9], 64, 64, 4
    $region25: #{tpu_custom_call.1} parent=1 // pred_fallthru
      _
    // Predicated region
    $region26: #{tpu_custom_call.1} parent=1 // pred_check
      _
    $region27: #{tpu_custom_call.1} parent=1 // pred_check_branch
      %85 = sbr.rel (0) target = $region29
    $region28: #{tpu_custom_call.1} parent=1 // pred_region
      _
    $region29: #{tpu_custom_call.1} parent=1 // pred_fallthru
      _
    // Predicated region
    $region30: #{tpu_custom_call.1} parent=1 // pred_check
      _
    $region31: #{tpu_custom_call.1} parent=1 // pred_check_branch
      %87 = sbr.rel (0) target = $region33
    $region32: #{tpu_custom_call.1} parent=1 // pred_region
      %89 = vsyncadd [#allocation9], 0
      %s90 = sshll.u32 %s7, 4
      %s91 = int_to_ptr.hbm [resolvable:$true] %s90
      %s92 = sshll.u32 [#allocation10], 4
      %s93 = int_to_ptr.vmem [resolvable:$true] %s92
      %98 = dma.hbm_to_vmem [thread:$0]  %s91, 1024, %s93, [#allocation9], 64, 64, 4
    $region33: #{tpu_custom_call.1} parent=1 // pred_fallthru
      _
    // Predicated region
    $region34: #{tpu_custom_call.1} parent=1 // pred_check
      _
    $region35: #{tpu_custom_call.1} parent=1 // pred_check_branch
      %100 = sbr.rel (0) target = $region37
    $region36: #{tpu_custom_call.1} parent=1 // pred_region
      _
    $region37: #{tpu_custom_call.1} parent=1 // pred_fallthru
      _
    // Predicated region
    $region38: #{tpu_custom_call.1} parent=1 // pred_check
      _
    $region39: #{tpu_custom_call.1} parent=1 // pred_check_branch
      %102 = sbr.rel (0) target = $region41
    $region40: #{tpu_custom_call.1} parent=1 // pred_region
      %104 = vsyncadd [#allocation12], 0
      %s105 = sshll.u32 %s9, 4
      %s106 = int_to_ptr.hbm [resolvable:$true] %s105
      %s107 = sshll.u32 [#allocation11], 4
      %s108 = int_to_ptr.vmem [resolvable:$true] %s107
      %113 = dma.hbm_to_vmem [thread:$0]  %s106, 5120, %s108, [#allocation12], 64, 64, 4
    $region41: #{tpu_custom_call.1} parent=1 // pred_fallthru
      _
    // Predicated region
    $region42: #{tpu_custom_call.1} parent=1 // pred_check
      _
    $region43: #{tpu_custom_call.1} parent=1 // pred_check_branch
      %115 = sbr.rel (0) target = $region45
    $region44: #{tpu_custom_call.1} parent=1 // pred_region
      _
    $region45: #{tpu_custom_call.1} parent=1 // pred_fallthru
      _
    // Predicated region
    $region46: #{tpu_custom_call.1} parent=1 // pred_check
      _
    $region47: #{tpu_custom_call.1} parent=1 // pred_check_branch
      %117 = sbr.rel (0) target = $region49
    $region48: #{tpu_custom_call.1} parent=1 // pred_region
      %119 = vsyncadd [#allocation12], 0
      %s120 = sshll.u32 %s11, 4
      %s121 = int_to_ptr.hbm [resolvable:$true] %s120
      %s122 = sshll.u32 [#allocation13], 4
      %s123 = int_to_ptr.vmem [resolvable:$true] %s122
      %128 = dma.hbm_to_vmem [thread:$0]  %s121, 1024, %s123, [#allocation12], 64, 64, 4
    $region49: #{tpu_custom_call.1} parent=1 // pred_fallthru
      _
    // Predicated region
    $region50: #{tpu_custom_call.1} parent=1 // pred_check
      _
    $region51: #{tpu_custom_call.1} parent=1 // pred_check_branch
      %130 = sbr.rel (0) target = $region53
    $region52: #{tpu_custom_call.1} parent=1 // pred_region
      _
    $region53: #{tpu_custom_call.1} parent=1 // pred_fallthru
      _
    // Predicated region
    $region54: #{tpu_custom_call.1} parent=1 // pred_check
      _
    $region55: #{tpu_custom_call.1} parent=1 // pred_check_branch
      %132 = sbr.rel (0) target = $region57
    $region56: #{tpu_custom_call.1} parent=1 // pred_region
      %134 = vsyncadd [#allocation15], 0
      %s135 = sshll.u32 %s13, 4
      %s136 = int_to_ptr.hbm [resolvable:$true] %s135
      %s137 = sshll.u32 [#allocation14], 4
      %s138 = int_to_ptr.vmem [resolvable:$true] %s137
      %143 = dma.hbm_to_vmem [thread:$0]  %s136, 1024, %s138, [#allocation15], 64, 64, 4
    $region57: #{tpu_custom_call.1} parent=1 // pred_fallthru
      _
    // Predicated region
    $region58: #{tpu_custom_call.1} parent=1 // pred_check
      _
    $region59: #{tpu_custom_call.1} parent=1 // pred_check_branch
      %145 = sbr.rel (0) target = $region61
    $region60: #{tpu_custom_call.1} parent=1 // pred_region
      _
    $region61: #{tpu_custom_call.1} parent=1 // pred_fallthru
      _
    // Predicated region
    $region62: #{tpu_custom_call.1} parent=1 // pred_check
      _
    $region63: #{tpu_custom_call.1} parent=1 // pred_check_branch
      %147 = sbr.rel (0) target = $region65
    $region64: #{tpu_custom_call.1} parent=1 // pred_region
      %149 = vsyncadd [#allocation15], 0
      %s150 = sshll.u32 %s15, 4
      %s151 = int_to_ptr.hbm [resolvable:$true] %s150
      %s152 = sshll.u32 [#allocation16], 4
      %s153 = int_to_ptr.vmem [resolvable:$true] %s152
      %158 = dma.hbm_to_vmem [thread:$0]  %s151, 1024, %s153, [#allocation15], 64, 64, 4
    $region65: #{tpu_custom_call.1} parent=1 // pred_fallthru
      _
    // Predicated region
    $region66: #{tpu_custom_call.1} parent=1 // pred_check
      _
    $region67: #{tpu_custom_call.1} parent=1 // pred_check_branch
      %160 = sbr.rel (0) target = $region69
    $region68: #{tpu_custom_call.1} parent=1 // pred_region
      _
    $region69: #{tpu_custom_call.1} parent=1 // pred_fallthru
      _
    // Predicated region
    $region70: #{tpu_custom_call.1} parent=1 // pred_check
      _
    $region71: #{tpu_custom_call.1} parent=1 // pred_check_branch
      %162 = sbr.rel (0) target = $region73
    $region72: #{tpu_custom_call.1} parent=1 // pred_region
      %164 = dma.done [#allocation3], 640
    $region73: #{tpu_custom_call.1} parent=1 // pred_fallthru
      _
    // Predicated region
    $region74: #{tpu_custom_call.1} parent=1 // pred_check
      _
    $region75: #{tpu_custom_call.1} parent=1 // pred_check_branch
      %166 = sbr.rel (0) target = $region77
    $region76: #{tpu_custom_call.1} parent=1 // pred_region
      %168 = dma.done [#allocation6], 1024
    $region77: #{tpu_custom_call.1} parent=1 // pred_fallthru
      _
    // Predicated region
    $region78: #{tpu_custom_call.1} parent=1 // pred_check
      _
    $region79: #{tpu_custom_call.1} parent=1 // pred_check_branch
      %170 = sbr.rel (0) target = $region81
    $region80: #{tpu_custom_call.1} parent=1 // pred_region
      %172 = dma.done [#allocation6], 1024
    $region81: #{tpu_custom_call.1} parent=1 // pred_fallthru
      _
    // Predicated region
    $region82: #{tpu_custom_call.1} parent=1 // pred_check
      _
    $region83: #{tpu_custom_call.1} parent=1 // pred_check_branch
      %174 = sbr.rel (0) target = $region85
    $region84: #{tpu_custom_call.1} parent=1 // pred_region
      %176 = dma.done [#allocation9], 1024
    $region85: #{tpu_custom_call.1} parent=1 // pred_fallthru
      _
    // Predicated region
    $region86: #{tpu_custom_call.1} parent=1 // pred_check
      _
    $region87: #{tpu_custom_call.1} parent=1 // pred_check_branch
      %178 = sbr.rel (0) target = $region89
    $region88: #{tpu_custom_call.1} parent=1 // pred_region
      %180 = dma.done [#allocation9], 1024
    $region89: #{tpu_custom_call.1} parent=1 // pred_fallthru
      _
    // Predicated region
    $region90: #{tpu_custom_call.1} parent=1 // pred_check
      _
    $region91: #{tpu_custom_call.1} parent=1 // pred_check_branch
      %182 = sbr.rel (0) target = $region93
    $region92: #{tpu_custom_call.1} parent=1 // pred_region
      %184 = dma.done [#allocation12], 5120
    $region93: #{tpu_custom_call.1} parent=1 // pred_fallthru
      _
    // Predicated region
    $region94: #{tpu_custom_call.1} parent=1 // pred_check
      _
    $region95: #{tpu_custom_call.1} parent=1 // pred_check_branch
      %186 = sbr.rel (0) target = $region97
    $region96: #{tpu_custom_call.1} parent=1 // pred_region
      %188 = dma.done [#allocation12], 1024
    $region97: #{tpu_custom_call.1} parent=1 // pred_fallthru
      _
    // Predicated region
    $region98: #{tpu_custom_call.1} parent=1 // pred_check
      _
    $region99: #{tpu_custom_call.1} parent=1 // pred_check_branch
      %190 = sbr.rel (0) target = $region101
    $region100: #{tpu_custom_call.1} parent=1 // pred_region
      %192 = dma.done [#allocation15], 1024
    $region101: #{tpu_custom_call.1} parent=1 // pred_fallthru
      _
    // Predicated region
    $region102: #{tpu_custom_call.1} parent=1 // pred_check
      _
    $region103: #{tpu_custom_call.1} parent=1 // pred_check_branch
      %194 = sbr.rel (0) target = $region105
    $region104: #{tpu_custom_call.1} parent=1 // pred_region
      %196 = dma.done [#allocation15], 1024
    $region105: #{tpu_custom_call.1} parent=1 // pred_fallthru
      _
    %v197 = vld [vmem:[#allocation2] sm:$0xf]
    %v198 = vld [vmem:[#allocation2 + $0x14] sm:$0xf]
    %v199 = vld [vmem:[#allocation5] sm:$0xf]
    %v200 = vld [vmem:[#allocation5 + $0x4] sm:$0xf]
    %v201 = vld [vmem:[#allocation5 + $0x8] sm:$0xf]
    %v202 = vld [vmem:[#allocation5 + $0xc] sm:$0xf]
    %v203 = vld [vmem:[#allocation5 + $0x10] sm:$0xf]
    %v204 = vld [vmem:[#allocation5 + $0x14] sm:$0xf]
    %v205 = vld [vmem:[#allocation5 + $0x18] sm:$0xf]
    %v206 = vld [vmem:[#allocation5 + $0x1c] sm:$0xf]
    %v207 = vld [vmem:[#allocation5 + $0x20] sm:$0xf]
    %v208 = vld [vmem:[#allocation5 + $0x24] sm:$0xf]
    %v209 = vld [vmem:[#allocation5 + $0x28] sm:$0xf]
    %v210 = vld [vmem:[#allocation5 + $0x2c] sm:$0xf]
    %v211 = vld [vmem:[#allocation5 + $0x30] sm:$0xf]
    %v212 = vld [vmem:[#allocation5 + $0x34] sm:$0xf]
    %v213 = vld [vmem:[#allocation5 + $0x38] sm:$0xf]
    %v214 = vld [vmem:[#allocation5 + $0x3c] sm:$0xf]
    %v215 = vld [vmem:[%s2] sm:$0x1]
    %v217 = vperm.slane %v215, 0
    %v221 = vunpack.c.l.b16 %v197
    %v222 = vunpack.c.l.b16 %v198
    %v223 = vpack.c.b16 %v222, %v221
    %v241 = vunpack.c.l.b16 %v199
    %v242 = vunpack.c.l.b16 %v200
    %v243 = vunpack.c.l.b16 %v201
    %v244 = vunpack.c.l.b16 %v202
    %v245 = vunpack.c.l.b16 %v203
    %v246 = vunpack.c.l.b16 %v204
    %v247 = vunpack.c.l.b16 %v205
    %v248 = vunpack.c.l.b16 %v206
    %v249 = vunpack.c.l.b16 %v207
    %v250 = vunpack.c.l.b16 %v208
    %v251 = vunpack.c.l.b16 %v209
    %v252 = vunpack.c.l.b16 %v210
    %v253 = vunpack.c.l.b16 %v211
    %v254 = vunpack.c.l.b16 %v212
    %v255 = vunpack.c.l.b16 %v213
    %v256 = vunpack.c.l.b16 %v214
    %v257 = vpack.c.b16 %v242, %v241
    %v258 = vpack.c.b16 %v244, %v243
    %v259 = vpack.c.b16 %v246, %v245
    %v260 = vpack.c.b16 %v248, %v247
    %v261 = vpack.c.b16 %v250, %v249
    %v262 = vpack.c.b16 %v252, %v251
    %v263 = vpack.c.b16 %v254, %v253
    %v264 = vpack.c.b16 %v256, %v255
    %273 = vmatpush.bf16.msra.mxu0 %v264
    %274 = vmatpush.bf16.msra.mxu0 %v263
    %275 = vmatpush.bf16.msra.mxu0 %v262
    %276 = vmatpush.bf16.msra.mxu0 %v261
    %277 = vmatpush.bf16.msra.mxu0 %v260
    %278 = vmatpush.bf16.msra.mxu0 %v259
    %279 = vmatpush.bf16.msra.mxu0 %v258
    %280 = vmatpush.bf16.msra.mxu0 %v257
    %281 = vmatmul.bf16.gmra.mxu0 %v223
    %v282 = vpop.f32.mrf.mxu0
    %v283 = vadd.f32 %v217, %v282
    %v284 = vpop.f32.mrf.mxu0
    %v285 = vadd.f32 %v217, %v284
    %286 = vdwg.mxu0
    %v287 = vmax.f32 %v283, 0.0
    %v288 = vmax.f32 %v285, 0.0
    %v289 = vpack.c.bf16 %v287, %v287
    %v290 = vpack.c.bf16 %v288, %v288
    %v291 = vld [vmem:[#allocation2 + $0x4] sm:$0xf]
    %v292 = vld [vmem:[#allocation2 + $0x18] sm:$0xf]
    %v295 = vunpack.c.l.b16 %v291
    %v296 = vunpack.c.l.b16 %v292
    %v297 = vpack.c.b16 %v296, %v295
    %299 = vmatpush.bf16.msra.mxu0 %v264
    %300 = vmatpush.bf16.msra.mxu0 %v263
    %301 = vmatpush.bf16.msra.mxu0 %v262
    %302 = vmatpush.bf16.msra.mxu0 %v261
    %303 = vmatpush.bf16.msra.mxu0 %v260
    %304 = vmatpush.bf16.msra.mxu0 %v259
    %305 = vmatpush.bf16.msra.mxu0 %v258
    %306 = vmatpush.bf16.msra.mxu0 %v257
    %307 = vmatmul.bf16.gmra.mxu0 %v297
    %v308 = vpop.f32.mrf.mxu0
    %v309 = vadd.f32 %v217, %v308
    %v310 = vpop.f32.mrf.mxu0
    %v311 = vadd.f32 %v217, %v310
    %312 = vdwg.mxu0
    %v313 = vmax.f32 %v309, 0.0
    %v314 = vmax.f32 %v311, 0.0
    %v315 = vpack.c.bf16 %v313, %v313
    %v316 = vpack.c.bf16 %v314, %v314
    %v317 = vld [vmem:[#allocation2 + $0x8] sm:$0xf]
    %v318 = vld [vmem:[#allocation2 + $0x1c] sm:$0xf]
    %v321 = vunpack.c.l.b16 %v317
    %v322 = vunpack.c.l.b16 %v318
    %v323 = vpack.c.b16 %v322, %v321
    %325 = vmatpush.bf16.msra.mxu0 %v264
    %326 = vmatpush.bf16.msra.mxu0 %v263
    %327 = vmatpush.bf16.msra.mxu0 %v262
    %328 = vmatpush.bf16.msra.mxu0 %v261
    %329 = vmatpush.bf16.msra.mxu0 %v260
    %330 = vmatpush.bf16.msra.mxu0 %v259
    %331 = vmatpush.bf16.msra.mxu0 %v258
    %332 = vmatpush.bf16.msra.mxu0 %v257
    %333 = vmatmul.bf16.gmra.mxu0 %v323
    %v334 = vpop.f32.mrf.mxu0
    %v335 = vadd.f32 %v217, %v334
    %v336 = vpop.f32.mrf.mxu0
    %v337 = vadd.f32 %v217, %v336
    %338 = vdwg.mxu0
    %v339 = vmax.f32 %v335, 0.0
    %v340 = vmax.f32 %v337, 0.0
    %v341 = vpack.c.bf16 %v339, %v339
    %v342 = vpack.c.bf16 %v340, %v340
    %v343 = vld [vmem:[#allocation2 + $0xc] sm:$0xf]
    %v344 = vld [vmem:[#allocation2 + $0x20] sm:$0xf]
    %v347 = vunpack.c.l.b16 %v343
    %v348 = vunpack.c.l.b16 %v344
    %v349 = vpack.c.b16 %v348, %v347
    %351 = vmatpush.bf16.msra.mxu0 %v264
    %352 = vmatpush.bf16.msra.mxu0 %v263
    %353 = vmatpush.bf16.msra.mxu0 %v262
    %354 = vmatpush.bf16.msra.mxu0 %v261
    %355 = vmatpush.bf16.msra.mxu0 %v260
    %356 = vmatpush.bf16.msra.mxu0 %v259
    %357 = vmatpush.bf16.msra.mxu0 %v258
    %358 = vmatpush.bf16.msra.mxu0 %v257
    %359 = vmatmul.bf16.gmra.mxu0 %v349
    %v360 = vpop.f32.mrf.mxu0
    %v361 = vadd.f32 %v217, %v360
    %v362 = vpop.f32.mrf.mxu0
    %v363 = vadd.f32 %v217, %v362
    %364 = vdwg.mxu0
    %v365 = vmax.f32 %v361, 0.0
    %v366 = vmax.f32 %v363, 0.0
    %v367 = vpack.c.bf16 %v365, %v365
    %v368 = vpack.c.bf16 %v366, %v366
    %v369 = vld [vmem:[#allocation2 + $0x10] sm:$0xf]
    %v370 = vld [vmem:[#allocation2 + $0x24] sm:$0xf]
    %v373 = vunpack.c.l.b16 %v369
    %v374 = vunpack.c.l.b16 %v370
    %v375 = vpack.c.b16 %v374, %v373
    %377 = vmatpush.bf16.msra.mxu0 %v264
    %378 = vmatpush.bf16.msra.mxu0 %v263
    %379 = vmatpush.bf16.msra.mxu0 %v262
    %380 = vmatpush.bf16.msra.mxu0 %v261
    %381 = vmatpush.bf16.msra.mxu0 %v260
    %382 = vmatpush.bf16.msra.mxu0 %v259
    %383 = vmatpush.bf16.msra.mxu0 %v258
    %384 = vmatpush.bf16.msra.mxu0 %v257
    %385 = vmatmul.bf16.gmra.mxu0 %v375
    %v386 = vpop.f32.mrf.mxu0
    %v387 = vadd.f32 %v217, %v386
    %v388 = vpop.f32.mrf.mxu0
    %v389 = vadd.f32 %v217, %v388
    %390 = vdwg.mxu0
    %v391 = vmax.f32 %v387, 0.0
    %v392 = vmax.f32 %v389, 0.0
    %v393 = vpack.c.bf16 %v391, %v391
    %v394 = vpack.c.bf16 %v392, %v392
    %v397 = vunpack.c.l.b16 %v289
    %v398 = vunpack.c.l.b16 %v290
    %v399 = vpack.c.b16 %v398, %v397
    %v403 = vunpack.c.l.b16 %v315
    %v404 = vunpack.c.l.b16 %v316
    %v405 = vpack.c.b16 %v404, %v403
    %v409 = vunpack.c.l.b16 %v341
    %v410 = vunpack.c.l.b16 %v342
    %v411 = vpack.c.b16 %v410, %v409
    %v415 = vunpack.c.l.b16 %v367
    %v416 = vunpack.c.l.b16 %v368
    %v417 = vpack.c.b16 %v416, %v415
    %v421 = vunpack.c.l.b16 %v393
    %v422 = vunpack.c.l.b16 %v394
    %v423 = vpack.c.b16 %v422, %v421
    %v425 = vld [vmem:[#allocation7] sm:$0xf]
    %v426 = vld [vmem:[#allocation7 + $0x4] sm:$0xf]
    %v427 = vld [vmem:[#allocation7 + $0x8] sm:$0xf]
    %v428 = vld [vmem:[#allocation7 + $0xc] sm:$0xf]
    %v429 = vld [vmem:[#allocation7 + $0x10] sm:$0xf]
    %v430 = vld [vmem:[#allocation7 + $0x14] sm:$0xf]
    %v431 = vld [vmem:[#allocation7 + $0x18] sm:$0xf]
    %v432 = vld [vmem:[#allocation7 + $0x1c] sm:$0xf]
    %v433 = vld [vmem:[#allocation7 + $0x20] sm:$0xf]
    %v434 = vld [vmem:[#allocation7 + $0x24] sm:$0xf]
    %v435 = vld [vmem:[#allocation7 + $0x28] sm:$0xf]
    %v436 = vld [vmem:[#allocation7 + $0x2c] sm:$0xf]
    %v437 = vld [vmem:[#allocation7 + $0x30] sm:$0xf]
    %v438 = vld [vmem:[#allocation7 + $0x34] sm:$0xf]
    %v439 = vld [vmem:[#allocation7 + $0x38] sm:$0xf]
    %v440 = vld [vmem:[#allocation7 + $0x3c] sm:$0xf]
    %v441 = vld [vmem:[%s4] sm:$0x1]
    %v443 = vperm.slane %v441, 0
    %v461 = vunpack.c.l.b16 %v425
    %v462 = vunpack.c.l.b16 %v426
    %v463 = vunpack.c.l.b16 %v427
    %v464 = vunpack.c.l.b16 %v428
    %v465 = vunpack.c.l.b16 %v429
    %v466 = vunpack.c.l.b16 %v430
    %v467 = vunpack.c.l.b16 %v431
    %v468 = vunpack.c.l.b16 %v432
    %v469 = vunpack.c.l.b16 %v433
    %v470 = vunpack.c.l.b16 %v434
    %v471 = vunpack.c.l.b16 %v435
    %v472 = vunpack.c.l.b16 %v436
    %v473 = vunpack.c.l.b16 %v437
    %v474 = vunpack.c.l.b16 %v438
    %v475 = vunpack.c.l.b16 %v439
    %v476 = vunpack.c.l.b16 %v440
    %v477 = vpack.c.b16 %v462, %v461
    %v478 = vpack.c.b16 %v464, %v463
    %v479 = vpack.c.b16 %v466, %v465
    %v480 = vpack.c.b16 %v468, %v467
    %v481 = vpack.c.b16 %v470, %v469
    %v482 = vpack.c.b16 %v472, %v471
    %v483 = vpack.c.b16 %v474, %v473
    %v484 = vpack.c.b16 %v476, %v475
    %493 = vmatpush.bf16.msra.mxu0 %v484
    %494 = vmatpush.bf16.msra.mxu0 %v483
    %495 = vmatpush.bf16.msra.mxu0 %v482
    %496 = vmatpush.bf16.msra.mxu0 %v481
    %497 = vmatpush.bf16.msra.mxu0 %v480
    %498 = vmatpush.bf16.msra.mxu0 %v479
    %499 = vmatpush.bf16.msra.mxu0 %v478
    %500 = vmatpush.bf16.msra.mxu0 %v477
    %501 = vmatmul.bf16.gmra.mxu0 %v399
    %v502 = vpop.f32.mrf.mxu0
    %v503 = vadd.f32 %v443, %v502
    %v504 = vpop.f32.mrf.mxu0
    %v505 = vadd.f32 %v443, %v504
    %506 = vmatmul.bf16.gmra.mxu0 %v405
    %v507 = vpop.f32.mrf.mxu0
    %v508 = vadd.f32 %v443, %v507
    %v509 = vpop.f32.mrf.mxu0
    %v510 = vadd.f32 %v443, %v509
    %511 = vmatmul.bf16.gmra.mxu0 %v411
    %v512 = vpop.f32.mrf.mxu0
    %v513 = vadd.f32 %v443, %v512
    %v514 = vpop.f32.mrf.mxu0
    %v515 = vadd.f32 %v443, %v514
    %516 = vmatmul.bf16.gmra.mxu0 %v417
    %v517 = vpop.f32.mrf.mxu0
    %v518 = vadd.f32 %v443, %v517
    %v519 = vpop.f32.mrf.mxu0
    %v520 = vadd.f32 %v443, %v519
    %521 = vmatmul.bf16.gmra.mxu0 %v423
    %v522 = vpop.f32.mrf.mxu0
    %v523 = vadd.f32 %v443, %v522
    %v524 = vpop.f32.mrf.mxu0
    %v525 = vadd.f32 %v443, %v524
    %526 = vdwg.mxu0
    %v527 = vmax.f32 %v503, 0.0
    %v528 = vmax.f32 %v505, 0.0
    %v529 = vmax.f32 %v508, 0.0
    %v530 = vmax.f32 %v510, 0.0
    %v531 = vmax.f32 %v513, 0.0
    %v532 = vmax.f32 %v515, 0.0
    %v533 = vmax.f32 %v518, 0.0
    %v534 = vmax.f32 %v520, 0.0
    %v535 = vmax.f32 %v523, 0.0
    %v536 = vmax.f32 %v525, 0.0
    %v537 = vpack.c.bf16 %v528, %v527
    %v538 = vpack.c.bf16 %v530, %v529
    %v539 = vpack.c.bf16 %v532, %v531
    %v540 = vpack.c.bf16 %v534, %v533
    %v541 = vpack.c.bf16 %v536, %v535
    %v542 = vld [vmem:[#allocation8] sm:$0xf]
    %v543 = vld [vmem:[#allocation8 + $0x4] sm:$0xf]
    %v544 = vld [vmem:[#allocation8 + $0x8] sm:$0xf]
    %v545 = vld [vmem:[#allocation8 + $0xc] sm:$0xf]
    %v546 = vld [vmem:[#allocation8 + $0x10] sm:$0xf]
    %v547 = vld [vmem:[#allocation8 + $0x14] sm:$0xf]
    %v548 = vld [vmem:[#allocation8 + $0x18] sm:$0xf]
    %v549 = vld [vmem:[#allocation8 + $0x1c] sm:$0xf]
    %v550 = vld [vmem:[#allocation8 + $0x20] sm:$0xf]
    %v551 = vld [vmem:[#allocation8 + $0x24] sm:$0xf]
    %v552 = vld [vmem:[#allocation8 + $0x28] sm:$0xf]
    %v553 = vld [vmem:[#allocation8 + $0x2c] sm:$0xf]
    %v554 = vld [vmem:[#allocation8 + $0x30] sm:$0xf]
    %v555 = vld [vmem:[#allocation8 + $0x34] sm:$0xf]
    %v556 = vld [vmem:[#allocation8 + $0x38] sm:$0xf]
    %v557 = vld [vmem:[#allocation8 + $0x3c] sm:$0xf]
    %v558 = vld [vmem:[%s6] sm:$0x1]
    %v560 = vperm.slane %v558, 0
    %v578 = vunpack.c.l.b16 %v542
    %v579 = vunpack.c.l.b16 %v543
    %v580 = vunpack.c.l.b16 %v544
    %v581 = vunpack.c.l.b16 %v545
    %v582 = vunpack.c.l.b16 %v546
    %v583 = vunpack.c.l.b16 %v547
    %v584 = vunpack.c.l.b16 %v548
    %v585 = vunpack.c.l.b16 %v549
    %v586 = vunpack.c.l.b16 %v550
    %v587 = vunpack.c.l.b16 %v551
    %v588 = vunpack.c.l.b16 %v552
    %v589 = vunpack.c.l.b16 %v553
    %v590 = vunpack.c.l.b16 %v554
    %v591 = vunpack.c.l.b16 %v555
    %v592 = vunpack.c.l.b16 %v556
    %v593 = vunpack.c.l.b16 %v557
    %v594 = vpack.c.b16 %v579, %v578
    %v595 = vpack.c.b16 %v581, %v580
    %v596 = vpack.c.b16 %v583, %v582
    %v597 = vpack.c.b16 %v585, %v584
    %v598 = vpack.c.b16 %v587, %v586
    %v599 = vpack.c.b16 %v589, %v588
    %v600 = vpack.c.b16 %v591, %v590
    %v601 = vpack.c.b16 %v593, %v592
    %610 = vmatpush.bf16.msra.mxu0 %v601
    %611 = vmatpush.bf16.msra.mxu0 %v600
    %612 = vmatpush.bf16.msra.mxu0 %v599
    %613 = vmatpush.bf16.msra.mxu0 %v598
    %614 = vmatpush.bf16.msra.mxu0 %v597
    %615 = vmatpush.bf16.msra.mxu0 %v596
    %616 = vmatpush.bf16.msra.mxu0 %v595
    %617 = vmatpush.bf16.msra.mxu0 %v594
    %618 = vmatmul.bf16.gmra.mxu0 %v537
    %v619 = vpop.f32.mrf.mxu0
    %v620 = vadd.f32 %v560, %v619
    %v621 = vpop.f32.mrf.mxu0
    %v622 = vadd.f32 %v560, %v621
    %623 = vmatmul.bf16.gmra.mxu0 %v538
    %v624 = vpop.f32.mrf.mxu0
    %v625 = vadd.f32 %v560, %v624
    %v626 = vpop.f32.mrf.mxu0
    %v627 = vadd.f32 %v560, %v626
    %628 = vmatmul.bf16.gmra.mxu0 %v539
    %v629 = vpop.f32.mrf.mxu0
    %v630 = vadd.f32 %v560, %v629
    %v631 = vpop.f32.mrf.mxu0
    %v632 = vadd.f32 %v560, %v631
    %633 = vmatmul.bf16.gmra.mxu0 %v540
    %v634 = vpop.f32.mrf.mxu0
    %v635 = vadd.f32 %v560, %v634
    %v636 = vpop.f32.mrf.mxu0
    %v637 = vadd.f32 %v560, %v636
    %638 = vmatmul.bf16.gmra.mxu0 %v541
    %v639 = vpop.f32.mrf.mxu0
    %v640 = vadd.f32 %v560, %v639
    %v641 = vpop.f32.mrf.mxu0
    %v642 = vadd.f32 %v560, %v641
    %643 = vdwg.mxu0
    %v644 = vmax.f32 %v620, 0.0
    %v645 = vmax.f32 %v622, 0.0
    %v646 = vmax.f32 %v625, 0.0
    %v647 = vmax.f32 %v627, 0.0
    %v648 = vmax.f32 %v630, 0.0
    %v649 = vmax.f32 %v632, 0.0
    %v650 = vmax.f32 %v635, 0.0
    %v651 = vmax.f32 %v637, 0.0
    %v652 = vmax.f32 %v640, 0.0
    %v653 = vmax.f32 %v642, 0.0
    %v654 = vpack.c.bf16 %v645, %v644
    %v655 = vpack.c.bf16 %v647, %v646
    %v656 = vpack.c.bf16 %v649, %v648
    %v657 = vpack.c.bf16 %v651, %v650
    %v658 = vpack.c.bf16 %v653, %v652
    %v659 = vld [vmem:[#allocation10] sm:$0xf]
    %v660 = vld [vmem:[#allocation10 + $0x4] sm:$0xf]
    %v661 = vld [vmem:[#allocation10 + $0x8] sm:$0xf]
    %v662 = vld [vmem:[#allocation10 + $0xc] sm:$0xf]
    %v663 = vld [vmem:[#allocation10 + $0x10] sm:$0xf]
    %v664 = vld [vmem:[#allocation10 + $0x14] sm:$0xf]
    %v665 = vld [vmem:[#allocation10 + $0x18] sm:$0xf]
    %v666 = vld [vmem:[#allocation10 + $0x1c] sm:$0xf]
    %v667 = vld [vmem:[#allocation10 + $0x20] sm:$0xf]
    %v668 = vld [vmem:[#allocation10 + $0x24] sm:$0xf]
    %v669 = vld [vmem:[#allocation10 + $0x28] sm:$0xf]
    %v670 = vld [vmem:[#allocation10 + $0x2c] sm:$0xf]
    %v671 = vld [vmem:[#allocation10 + $0x30] sm:$0xf]
    %v672 = vld [vmem:[#allocation10 + $0x34] sm:$0xf]
    %v673 = vld [vmem:[#allocation10 + $0x38] sm:$0xf]
    %v674 = vld [vmem:[#allocation10 + $0x3c] sm:$0xf]
    %v675 = vld [vmem:[%s8] sm:$0x1]
    %v677 = vperm.slane %v675, 0
    %v695 = vunpack.c.l.b16 %v659
    %v696 = vunpack.c.l.b16 %v660
    %v697 = vunpack.c.l.b16 %v661
    %v698 = vunpack.c.l.b16 %v662
    %v699 = vunpack.c.l.b16 %v663
    %v700 = vunpack.c.l.b16 %v664
    %v701 = vunpack.c.l.b16 %v665
    %v702 = vunpack.c.l.b16 %v666
    %v703 = vunpack.c.l.b16 %v667
    %v704 = vunpack.c.l.b16 %v668
    %v705 = vunpack.c.l.b16 %v669
    %v706 = vunpack.c.l.b16 %v670
    %v707 = vunpack.c.l.b16 %v671
    %v708 = vunpack.c.l.b16 %v672
    %v709 = vunpack.c.l.b16 %v673
    %v710 = vunpack.c.l.b16 %v674
    %v711 = vpack.c.b16 %v696, %v695
    %v712 = vpack.c.b16 %v698, %v697
    %v713 = vpack.c.b16 %v700, %v699
    %v714 = vpack.c.b16 %v702, %v701
    %v715 = vpack.c.b16 %v704, %v703
    %v716 = vpack.c.b16 %v706, %v705
    %v717 = vpack.c.b16 %v708, %v707
    %v718 = vpack.c.b16 %v710, %v709
    %727 = vmatpush.bf16.msra.mxu0 %v718
    %728 = vmatpush.bf16.msra.mxu0 %v717
    %729 = vmatpush.bf16.msra.mxu0 %v716
    %730 = vmatpush.bf16.msra.mxu0 %v715
    %731 = vmatpush.bf16.msra.mxu0 %v714
    %732 = vmatpush.bf16.msra.mxu0 %v713
    %733 = vmatpush.bf16.msra.mxu0 %v712
    %734 = vmatpush.bf16.msra.mxu0 %v711
    %735 = vmatmul.bf16.gmra.mxu0 %v654
    %v736 = vpop.f32.mrf.mxu0
    %v737 = vadd.f32 %v677, %v736
    %v738 = vpop.f32.mrf.mxu0
    %v739 = vadd.f32 %v677, %v738
    %740 = vmatmul.bf16.gmra.mxu0 %v655
    %v741 = vpop.f32.mrf.mxu0
    %v742 = vadd.f32 %v677, %v741
    %v743 = vpop.f32.mrf.mxu0
    %v744 = vadd.f32 %v677, %v743
    %745 = vmatmul.bf16.gmra.mxu0 %v656
    %v746 = vpop.f32.mrf.mxu0
    %v747 = vadd.f32 %v677, %v746
    %v748 = vpop.f32.mrf.mxu0
    %v749 = vadd.f32 %v677, %v748
    %750 = vmatmul.bf16.gmra.mxu0 %v657
    %v751 = vpop.f32.mrf.mxu0
    %v752 = vadd.f32 %v677, %v751
    %v753 = vpop.f32.mrf.mxu0
    %v754 = vadd.f32 %v677, %v753
    %755 = vmatmul.bf16.gmra.mxu0 %v658
    %v756 = vpop.f32.mrf.mxu0
    %v757 = vadd.f32 %v677, %v756
    %v758 = vpop.f32.mrf.mxu0
    %v759 = vadd.f32 %v677, %v758
    %760 = vdwg.mxu0
    %v761 = vpack.c.bf16 %v737, %v737
    %v762 = vpack.c.bf16 %v739, %v739
    %v763 = vpack.c.bf16 %v742, %v742
    %v764 = vpack.c.bf16 %v744, %v744
    %v765 = vpack.c.bf16 %v747, %v747
    %v766 = vpack.c.bf16 %v749, %v749
    %v767 = vpack.c.bf16 %v752, %v752
    %v768 = vpack.c.bf16 %v754, %v754
    %v769 = vpack.c.bf16 %v757, %v757
    %v770 = vpack.c.bf16 %v759, %v759
    %v771 = vld [vmem:[#allocation11] sm:$0xf]
    %v772 = vld [vmem:[#allocation11 + $0x4] sm:$0xf]
    %v773 = vld [vmem:[#allocation11 + $0x8] sm:$0xf]
    %v774 = vld [vmem:[#allocation11 + $0xc] sm:$0xf]
    %v775 = vld [vmem:[#allocation11 + $0x10] sm:$0xf]
    %v776 = vld [vmem:[#allocation11 + $0x14] sm:$0xf]
    %v777 = vld [vmem:[#allocation11 + $0x18] sm:$0xf]
    %v778 = vld [vmem:[#allocation11 + $0x1c] sm:$0xf]
    %v779 = vld [vmem:[#allocation11 + $0x20] sm:$0xf]
    %v780 = vld [vmem:[#allocation11 + $0x24] sm:$0xf]
    %v781 = vld [vmem:[#allocation11 + $0x28] sm:$0xf]
    %v782 = vld [vmem:[#allocation11 + $0x2c] sm:$0xf]
    %v783 = vld [vmem:[#allocation11 + $0x30] sm:$0xf]
    %v784 = vld [vmem:[#allocation11 + $0x34] sm:$0xf]
    %v785 = vld [vmem:[#allocation11 + $0x38] sm:$0xf]
    %v786 = vld [vmem:[#allocation11 + $0x3c] sm:$0xf]
    %v787 = vld [vmem:[#allocation11 + $0x40] sm:$0xf]
    %v788 = vld [vmem:[#allocation11 + $0x44] sm:$0xf]
    %v789 = vld [vmem:[#allocation11 + $0x48] sm:$0xf]
    %v790 = vld [vmem:[#allocation11 + $0x4c] sm:$0xf]
    %v791 = vld [vmem:[#allocation11 + $0x50] sm:$0xf]
    %v792 = vld [vmem:[#allocation11 + $0x54] sm:$0xf]
    %v793 = vld [vmem:[#allocation11 + $0x58] sm:$0xf]
    %v794 = vld [vmem:[#allocation11 + $0x5c] sm:$0xf]
    %v795 = vld [vmem:[#allocation11 + $0x60] sm:$0xf]
    %v796 = vld [vmem:[#allocation11 + $0x64] sm:$0xf]
    %v797 = vld [vmem:[#allocation11 + $0x68] sm:$0xf]
    %v798 = vld [vmem:[#allocation11 + $0x6c] sm:$0xf]
    %v799 = vld [vmem:[#allocation11 + $0x70] sm:$0xf]
    %v800 = vld [vmem:[#allocation11 + $0x74] sm:$0xf]
    %v801 = vld [vmem:[#allocation11 + $0x78] sm:$0xf]
    %v802 = vld [vmem:[#allocation11 + $0x7c] sm:$0xf]
    %v805 = vunpack.c.l.b16 %v763
    %v806 = vunpack.c.l.b16 %v764
    %v807 = vpack.c.b16 %v806, %v805
    %v825 = vunpack.c.l.b16 %v787
    %v826 = vunpack.c.l.b16 %v788
    %v827 = vunpack.c.l.b16 %v789
    %v828 = vunpack.c.l.b16 %v790
    %v829 = vunpack.c.l.b16 %v791
    %v830 = vunpack.c.l.b16 %v792
    %v831 = vunpack.c.l.b16 %v793
    %v832 = vunpack.c.l.b16 %v794
    %v833 = vunpack.c.l.b16 %v795
    %v834 = vunpack.c.l.b16 %v796
    %v835 = vunpack.c.l.b16 %v797
    %v836 = vunpack.c.l.b16 %v798
    %v837 = vunpack.c.l.b16 %v799
    %v838 = vunpack.c.l.b16 %v800
    %v839 = vunpack.c.l.b16 %v801
    %v840 = vunpack.c.l.b16 %v802
    %v841 = vpack.c.b16 %v826, %v825
    %v842 = vpack.c.b16 %v828, %v827
    %v843 = vpack.c.b16 %v830, %v829
    %v844 = vpack.c.b16 %v832, %v831
    %v845 = vpack.c.b16 %v834, %v833
    %v846 = vpack.c.b16 %v836, %v835
    %v847 = vpack.c.b16 %v838, %v837
    %v848 = vpack.c.b16 %v840, %v839
    %857 = vmatpush.bf16.msra.mxu0 %v848
    %858 = vmatpush.bf16.msra.mxu0 %v847
    %859 = vmatpush.bf16.msra.mxu0 %v846
    %860 = vmatpush.bf16.msra.mxu0 %v845
    %861 = vmatpush.bf16.msra.mxu0 %v844
    %862 = vmatpush.bf16.msra.mxu0 %v843
    %863 = vmatpush.bf16.msra.mxu0 %v842
    %864 = vmatpush.bf16.msra.mxu0 %v841
    %865 = vmatmul.bf16.gmra.mxu0 %v807
    %v866 = vpop.f32.mrf.mxu0
    %v867 = vadd.f32 0.0, %v866
    %v868 = vpop.f32.mrf.mxu0
    %v869 = vadd.f32 0.0, %v868
    %870 = vdwg.mxu0
    %v873 = vunpack.c.l.b16 %v761
    %v874 = vunpack.c.l.b16 %v762
    %v875 = vpack.c.b16 %v874, %v873
    %v893 = vunpack.c.l.b16 %v771
    %v894 = vunpack.c.l.b16 %v772
    %v895 = vunpack.c.l.b16 %v773
    %v896 = vunpack.c.l.b16 %v774
    %v897 = vunpack.c.l.b16 %v775
    %v898 = vunpack.c.l.b16 %v776
    %v899 = vunpack.c.l.b16 %v777
    %v900 = vunpack.c.l.b16 %v778
    %v901 = vunpack.c.l.b16 %v779
    %v902 = vunpack.c.l.b16 %v780
    %v903 = vunpack.c.l.b16 %v781
    %v904 = vunpack.c.l.b16 %v782
    %v905 = vunpack.c.l.b16 %v783
    %v906 = vunpack.c.l.b16 %v784
    %v907 = vunpack.c.l.b16 %v785
    %v908 = vunpack.c.l.b16 %v786
    %v909 = vpack.c.b16 %v894, %v893
    %v910 = vpack.c.b16 %v896, %v895
    %v911 = vpack.c.b16 %v898, %v897
    %v912 = vpack.c.b16 %v900, %v899
    %v913 = vpack.c.b16 %v902, %v901
    %v914 = vpack.c.b16 %v904, %v903
    %v915 = vpack.c.b16 %v906, %v905
    %v916 = vpack.c.b16 %v908, %v907
    %925 = vmatpush.bf16.msra.mxu0 %v916
    %926 = vmatpush.bf16.msra.mxu0 %v915
    %927 = vmatpush.bf16.msra.mxu0 %v914
    %928 = vmatpush.bf16.msra.mxu0 %v913
    %929 = vmatpush.bf16.msra.mxu0 %v912
    %930 = vmatpush.bf16.msra.mxu0 %v911
    %931 = vmatpush.bf16.msra.mxu0 %v910
    %932 = vmatpush.bf16.msra.mxu0 %v909
    %933 = vmatmul.bf16.gmra.mxu0 %v875
    %v934 = vpop.f32.mrf.mxu0
    %v935 = vadd.f32 %v867, %v934
    %v936 = vpop.f32.mrf.mxu0
    %v937 = vadd.f32 %v869, %v936
    %938 = vdwg.mxu0
    %v939 = vld [vmem:[#allocation11 + $0x80] sm:$0xf]
    %v940 = vld [vmem:[#allocation11 + $0x84] sm:$0xf]
    %v941 = vld [vmem:[#allocation11 + $0x88] sm:$0xf]
    %v942 = vld [vmem:[#allocation11 + $0x8c] sm:$0xf]
    %v943 = vld [vmem:[#allocation11 + $0x90] sm:$0xf]
    %v944 = vld [vmem:[#allocation11 + $0x94] sm:$0xf]
    %v945 = vld [vmem:[#allocation11 + $0x98] sm:$0xf]
    %v946 = vld [vmem:[#allocation11 + $0x9c] sm:$0xf]
    %v947 = vld [vmem:[#allocation11 + $0xa0] sm:$0xf]
    %v948 = vld [vmem:[#allocation11 + $0xa4] sm:$0xf]
    %v949 = vld [vmem:[#allocation11 + $0xa8] sm:$0xf]
    %v950 = vld [vmem:[#allocation11 + $0xac] sm:$0xf]
    %v951 = vld [vmem:[#allocation11 + $0xb0] sm:$0xf]
    %v952 = vld [vmem:[#allocation11 + $0xb4] sm:$0xf]
    %v953 = vld [vmem:[#allocation11 + $0xb8] sm:$0xf]
    %v954 = vld [vmem:[#allocation11 + $0xbc] sm:$0xf]
    %v957 = vunpack.c.l.b16 %v765
    %v958 = vunpack.c.l.b16 %v766
    %v959 = vpack.c.b16 %v958, %v957
    %v977 = vunpack.c.l.b16 %v939
    %v978 = vunpack.c.l.b16 %v940
    %v979 = vunpack.c.l.b16 %v941
    %v980 = vunpack.c.l.b16 %v942
    %v981 = vunpack.c.l.b16 %v943
    %v982 = vunpack.c.l.b16 %v944
    %v983 = vunpack.c.l.b16 %v945
    %v984 = vunpack.c.l.b16 %v946
    %v985 = vunpack.c.l.b16 %v947
    %v986 = vunpack.c.l.b16 %v948
    %v987 = vunpack.c.l.b16 %v949
    %v988 = vunpack.c.l.b16 %v950
    %v989 = vunpack.c.l.b16 %v951
    %v990 = vunpack.c.l.b16 %v952
    %v991 = vunpack.c.l.b16 %v953
    %v992 = vunpack.c.l.b16 %v954
    %v993 = vpack.c.b16 %v978, %v977
    %v994 = vpack.c.b16 %v980, %v979
    %v995 = vpack.c.b16 %v982, %v981
    %v996 = vpack.c.b16 %v984, %v983
    %v997 = vpack.c.b16 %v986, %v985
    %v998 = vpack.c.b16 %v988, %v987
    %v999 = vpack.c.b16 %v990, %v989
    %v1000 = vpack.c.b16 %v992, %v991
    %1009 = vmatpush.bf16.msra.mxu0 %v1000
    %1010 = vmatpush.bf16.msra.mxu0 %v999
    %1011 = vmatpush.bf16.msra.mxu0 %v998
    %1012 = vmatpush.bf16.msra.mxu0 %v997
    %1013 = vmatpush.bf16.msra.mxu0 %v996
    %1014 = vmatpush.bf16.msra.mxu0 %v995
    %1015 = vmatpush.bf16.msra.mxu0 %v994
    %1016 = vmatpush.bf16.msra.mxu0 %v993
    %1017 = vmatmul.bf16.gmra.mxu0 %v959
    %v1018 = vpop.f32.mrf.mxu0
    %v1019 = vadd.f32 0.0, %v1018
    %v1020 = vpop.f32.mrf.mxu0
    %v1021 = vadd.f32 0.0, %v1020
    %1022 = vdwg.mxu0
    %v1023 = vadd.f32 %v935, %v1019
    %v1024 = vadd.f32 %v937, %v1021
    %v1025 = vld [vmem:[#allocation11 + $0xc0] sm:$0xf]
    %v1026 = vld [vmem:[#allocation11 + $0xc4] sm:$0xf]
    %v1027 = vld [vmem:[#allocation11 + $0xc8] sm:$0xf]
    %v1028 = vld [vmem:[#allocation11 + $0xcc] sm:$0xf]
    %v1029 = vld [vmem:[#allocation11 + $0xd0] sm:$0xf]
    %v1030 = vld [vmem:[#allocation11 + $0xd4] sm:$0xf]
    %v1031 = vld [vmem:[#allocation11 + $0xd8] sm:$0xf]
    %v1032 = vld [vmem:[#allocation11 + $0xdc] sm:$0xf]
    %v1033 = vld [vmem:[#allocation11 + $0xe0] sm:$0xf]
    %v1034 = vld [vmem:[#allocation11 + $0xe4] sm:$0xf]
    %v1035 = vld [vmem:[#allocation11 + $0xe8] sm:$0xf]
    %v1036 = vld [vmem:[#allocation11 + $0xec] sm:$0xf]
    %v1037 = vld [vmem:[#allocation11 + $0xf0] sm:$0xf]
    %v1038 = vld [vmem:[#allocation11 + $0xf4] sm:$0xf]
    %v1039 = vld [vmem:[#allocation11 + $0xf8] sm:$0xf]
    %v1040 = vld [vmem:[#allocation11 + $0xfc] sm:$0xf]
    %v1043 = vunpack.c.l.b16 %v767
    %v1044 = vunpack.c.l.b16 %v768
    %v1045 = vpack.c.b16 %v1044, %v1043
    %v1063 = vunpack.c.l.b16 %v1025
    %v1064 = vunpack.c.l.b16 %v1026
    %v1065 = vunpack.c.l.b16 %v1027
    %v1066 = vunpack.c.l.b16 %v1028
    %v1067 = vunpack.c.l.b16 %v1029
    %v1068 = vunpack.c.l.b16 %v1030
    %v1069 = vunpack.c.l.b16 %v1031
    %v1070 = vunpack.c.l.b16 %v1032
    %v1071 = vunpack.c.l.b16 %v1033
    %v1072 = vunpack.c.l.b16 %v1034
    %v1073 = vunpack.c.l.b16 %v1035
    %v1074 = vunpack.c.l.b16 %v1036
    %v1075 = vunpack.c.l.b16 %v1037
    %v1076 = vunpack.c.l.b16 %v1038
    %v1077 = vunpack.c.l.b16 %v1039
    %v1078 = vunpack.c.l.b16 %v1040
    %v1079 = vpack.c.b16 %v1064, %v1063
    %v1080 = vpack.c.b16 %v1066, %v1065
    %v1081 = vpack.c.b16 %v1068, %v1067
    %v1082 = vpack.c.b16 %v1070, %v1069
    %v1083 = vpack.c.b16 %v1072, %v1071
    %v1084 = vpack.c.b16 %v1074, %v1073
    %v1085 = vpack.c.b16 %v1076, %v1075
    %v1086 = vpack.c.b16 %v1078, %v1077
    %1095 = vmatpush.bf16.msra.mxu0 %v1086
    %1096 = vmatpush.bf16.msra.mxu0 %v1085
    %1097 = vmatpush.bf16.msra.mxu0 %v1084
    %1098 = vmatpush.bf16.msra.mxu0 %v1083
    %1099 = vmatpush.bf16.msra.mxu0 %v1082
    %1100 = vmatpush.bf16.msra.mxu0 %v1081
    %1101 = vmatpush.bf16.msra.mxu0 %v1080
    %1102 = vmatpush.bf16.msra.mxu0 %v1079
    %1103 = vmatmul.bf16.gmra.mxu0 %v1045
    %v1104 = vpop.f32.mrf.mxu0
    %v1105 = vadd.f32 0.0, %v1104
    %v1106 = vpop.f32.mrf.mxu0
    %v1107 = vadd.f32 0.0, %v1106
    %1108 = vdwg.mxu0
    %v1109 = vadd.f32 %v1023, %v1105
    %v1110 = vadd.f32 %v1024, %v1107
    %v1111 = vld [vmem:[#allocation11 + $0x100] sm:$0xf]
    %v1112 = vld [vmem:[#allocation11 + $0x104] sm:$0xf]
    %v1113 = vld [vmem:[#allocation11 + $0x108] sm:$0xf]
    %v1114 = vld [vmem:[#allocation11 + $0x10c] sm:$0xf]
    %v1115 = vld [vmem:[#allocation11 + $0x110] sm:$0xf]
    %v1116 = vld [vmem:[#allocation11 + $0x114] sm:$0xf]
    %v1117 = vld [vmem:[#allocation11 + $0x118] sm:$0xf]
    %v1118 = vld [vmem:[#allocation11 + $0x11c] sm:$0xf]
    %v1119 = vld [vmem:[#allocation11 + $0x120] sm:$0xf]
    %v1120 = vld [vmem:[#allocation11 + $0x124] sm:$0xf]
    %v1121 = vld [vmem:[#allocation11 + $0x128] sm:$0xf]
    %v1122 = vld [vmem:[#allocation11 + $0x12c] sm:$0xf]
    %v1123 = vld [vmem:[#allocation11 + $0x130] sm:$0xf]
    %v1124 = vld [vmem:[#allocation11 + $0x134] sm:$0xf]
    %v1125 = vld [vmem:[#allocation11 + $0x138] sm:$0xf]
    %v1126 = vld [vmem:[#allocation11 + $0x13c] sm:$0xf]
    %v1129 = vunpack.c.l.b16 %v769
    %v1130 = vunpack.c.l.b16 %v770
    %v1131 = vpack.c.b16 %v1130, %v1129
    %v1149 = vunpack.c.l.b16 %v1111
    %v1150 = vunpack.c.l.b16 %v1112
    %v1151 = vunpack.c.l.b16 %v1113
    %v1152 = vunpack.c.l.b16 %v1114
    %v1153 = vunpack.c.l.b16 %v1115
    %v1154 = vunpack.c.l.b16 %v1116
    %v1155 = vunpack.c.l.b16 %v1117
    %v1156 = vunpack.c.l.b16 %v1118
    %v1157 = vunpack.c.l.b16 %v1119
    %v1158 = vunpack.c.l.b16 %v1120
    %v1159 = vunpack.c.l.b16 %v1121
    %v1160 = vunpack.c.l.b16 %v1122
    %v1161 = vunpack.c.l.b16 %v1123
    %v1162 = vunpack.c.l.b16 %v1124
    %v1163 = vunpack.c.l.b16 %v1125
    %v1164 = vunpack.c.l.b16 %v1126
    %v1165 = vpack.c.b16 %v1150, %v1149
    %v1166 = vpack.c.b16 %v1152, %v1151
    %v1167 = vpack.c.b16 %v1154, %v1153
    %v1168 = vpack.c.b16 %v1156, %v1155
    %v1169 = vpack.c.b16 %v1158, %v1157
    %v1170 = vpack.c.b16 %v1160, %v1159
    %v1171 = vpack.c.b16 %v1162, %v1161
    %v1172 = vpack.c.b16 %v1164, %v1163
    %1181 = vmatpush.bf16.msra.mxu0 %v1172
    %1182 = vmatpush.bf16.msra.mxu0 %v1171
    %1183 = vmatpush.bf16.msra.mxu0 %v1170
    %1184 = vmatpush.bf16.msra.mxu0 %v1169
    %1185 = vmatpush.bf16.msra.mxu0 %v1168
    %1186 = vmatpush.bf16.msra.mxu0 %v1167
    %1187 = vmatpush.bf16.msra.mxu0 %v1166
    %1188 = vmatpush.bf16.msra.mxu0 %v1165
    %1189 = vmatmul.bf16.gmra.mxu0 %v1131
    %v1190 = vpop.f32.mrf.mxu0
    %v1191 = vadd.f32 0.0, %v1190
    %v1192 = vpop.f32.mrf.mxu0
    %v1193 = vadd.f32 0.0, %v1192
    %1194 = vdwg.mxu0
    %v1195 = vadd.f32 %v1109, %v1191
    %v1196 = vadd.f32 %v1110, %v1193
    %v1197 = vld [vmem:[%s10] sm:$0x1]
    %v1199 = vperm.slane %v1197, 0
    %v1201 = vadd.f32 %v1195, %v1199
    %v1202 = vadd.f32 %v1196, %v1199
    %v1203 = vmax.f32 %v1201, 0.0
    %v1204 = vmax.f32 %v1202, 0.0
    %v1205 = vpack.c.bf16 %v1204, %v1203
    %v1206 = vld [vmem:[#allocation13] sm:$0xf]
    %v1207 = vld [vmem:[#allocation13 + $0x4] sm:$0xf]
    %v1208 = vld [vmem:[#allocation13 + $0x8] sm:$0xf]
    %v1209 = vld [vmem:[#allocation13 + $0xc] sm:$0xf]
    %v1210 = vld [vmem:[#allocation13 + $0x10] sm:$0xf]
    %v1211 = vld [vmem:[#allocation13 + $0x14] sm:$0xf]
    %v1212 = vld [vmem:[#allocation13 + $0x18] sm:$0xf]
    %v1213 = vld [vmem:[#allocation13 + $0x1c] sm:$0xf]
    %v1214 = vld [vmem:[#allocation13 + $0x20] sm:$0xf]
    %v1215 = vld [vmem:[#allocation13 + $0x24] sm:$0xf]
    %v1216 = vld [vmem:[#allocation13 + $0x28] sm:$0xf]
    %v1217 = vld [vmem:[#allocation13 + $0x2c] sm:$0xf]
    %v1218 = vld [vmem:[#allocation13 + $0x30] sm:$0xf]
    %v1219 = vld [vmem:[#allocation13 + $0x34] sm:$0xf]
    %v1220 = vld [vmem:[#allocation13 + $0x38] sm:$0xf]
    %v1221 = vld [vmem:[#allocation13 + $0x3c] sm:$0xf]
    %v1222 = vld [vmem:[%s12] sm:$0x1]
    %v1224 = vperm.slane %v1222, 0
    %v1242 = vunpack.c.l.b16 %v1206
    %v1243 = vunpack.c.l.b16 %v1207
    %v1244 = vunpack.c.l.b16 %v1208
    %v1245 = vunpack.c.l.b16 %v1209
    %v1246 = vunpack.c.l.b16 %v1210
    %v1247 = vunpack.c.l.b16 %v1211
    %v1248 = vunpack.c.l.b16 %v1212
    %v1249 = vunpack.c.l.b16 %v1213
    %v1250 = vunpack.c.l.b16 %v1214
    %v1251 = vunpack.c.l.b16 %v1215
    %v1252 = vunpack.c.l.b16 %v1216
    %v1253 = vunpack.c.l.b16 %v1217
    %v1254 = vunpack.c.l.b16 %v1218
    %v1255 = vunpack.c.l.b16 %v1219
    %v1256 = vunpack.c.l.b16 %v1220
    %v1257 = vunpack.c.l.b16 %v1221
    %v1258 = vpack.c.b16 %v1243, %v1242
    %v1259 = vpack.c.b16 %v1245, %v1244
    %v1260 = vpack.c.b16 %v1247, %v1246
    %v1261 = vpack.c.b16 %v1249, %v1248
    %v1262 = vpack.c.b16 %v1251, %v1250
    %v1263 = vpack.c.b16 %v1253, %v1252
    %v1264 = vpack.c.b16 %v1255, %v1254
    %v1265 = vpack.c.b16 %v1257, %v1256
    %1274 = vmatpush.bf16.msra.mxu0 %v1265
    %1275 = vmatpush.bf16.msra.mxu0 %v1264
    %1276 = vmatpush.bf16.msra.mxu0 %v1263
    %1277 = vmatpush.bf16.msra.mxu0 %v1262
    %1278 = vmatpush.bf16.msra.mxu0 %v1261
    %1279 = vmatpush.bf16.msra.mxu0 %v1260
    %1280 = vmatpush.bf16.msra.mxu0 %v1259
    %1281 = vmatpush.bf16.msra.mxu0 %v1258
    %1282 = vmatmul.bf16.gmra.mxu0 %v1205
    %v1283 = vpop.f32.mrf.mxu0
    %v1284 = vadd.f32 %v1224, %v1283
    %v1285 = vpop.f32.mrf.mxu0
    %v1286 = vadd.f32 %v1224, %v1285
    %1287 = vdwg.mxu0
    %v1288 = vmax.f32 %v1284, 0.0
    %v1289 = vmax.f32 %v1286, 0.0
    %v1290 = vpack.c.bf16 %v1289, %v1288
    %v1291 = vld [vmem:[#allocation14] sm:$0xf]
    %v1292 = vld [vmem:[#allocation14 + $0x4] sm:$0xf]
    %v1293 = vld [vmem:[#allocation14 + $0x8] sm:$0xf]
    %v1294 = vld [vmem:[#allocation14 + $0xc] sm:$0xf]
    %v1295 = vld [vmem:[#allocation14 + $0x10] sm:$0xf]
    %v1296 = vld [vmem:[#allocation14 + $0x14] sm:$0xf]
    %v1297 = vld [vmem:[#allocation14 + $0x18] sm:$0xf]
    %v1298 = vld [vmem:[#allocation14 + $0x1c] sm:$0xf]
    %v1299 = vld [vmem:[#allocation14 + $0x20] sm:$0xf]
    %v1300 = vld [vmem:[#allocation14 + $0x24] sm:$0xf]
    %v1301 = vld [vmem:[#allocation14 + $0x28] sm:$0xf]
    %v1302 = vld [vmem:[#allocation14 + $0x2c] sm:$0xf]
    %v1303 = vld [vmem:[#allocation14 + $0x30] sm:$0xf]
    %v1304 = vld [vmem:[#allocation14 + $0x34] sm:$0xf]
    %v1305 = vld [vmem:[#allocation14 + $0x38] sm:$0xf]
    %v1306 = vld [vmem:[#allocation14 + $0x3c] sm:$0xf]
    %v1307 = vld [vmem:[%s14] sm:$0x1]
    %v1309 = vperm.slane %v1307, 0
    %v1327 = vunpack.c.l.b16 %v1291
    %v1328 = vunpack.c.l.b16 %v1292
    %v1329 = vunpack.c.l.b16 %v1293
    %v1330 = vunpack.c.l.b16 %v1294
    %v1331 = vunpack.c.l.b16 %v1295
    %v1332 = vunpack.c.l.b16 %v1296
    %v1333 = vunpack.c.l.b16 %v1297
    %v1334 = vunpack.c.l.b16 %v1298
    %v1335 = vunpack.c.l.b16 %v1299
    %v1336 = vunpack.c.l.b16 %v1300
    %v1337 = vunpack.c.l.b16 %v1301
    %v1338 = vunpack.c.l.b16 %v1302
    %v1339 = vunpack.c.l.b16 %v1303
    %v1340 = vunpack.c.l.b16 %v1304
    %v1341 = vunpack.c.l.b16 %v1305
    %v1342 = vunpack.c.l.b16 %v1306
    %v1343 = vpack.c.b16 %v1328, %v1327
    %v1344 = vpack.c.b16 %v1330, %v1329
    %v1345 = vpack.c.b16 %v1332, %v1331
    %v1346 = vpack.c.b16 %v1334, %v1333
    %v1347 = vpack.c.b16 %v1336, %v1335
    %v1348 = vpack.c.b16 %v1338, %v1337
    %v1349 = vpack.c.b16 %v1340, %v1339
    %v1350 = vpack.c.b16 %v1342, %v1341
    %1359 = vmatpush.bf16.msra.mxu0 %v1350
    %1360 = vmatpush.bf16.msra.mxu0 %v1349
    %1361 = vmatpush.bf16.msra.mxu0 %v1348
    %1362 = vmatpush.bf16.msra.mxu0 %v1347
    %1363 = vmatpush.bf16.msra.mxu0 %v1346
    %1364 = vmatpush.bf16.msra.mxu0 %v1345
    %1365 = vmatpush.bf16.msra.mxu0 %v1344
    %1366 = vmatpush.bf16.msra.mxu0 %v1343
    %1367 = vmatmul.bf16.gmra.mxu0 %v1290
    %v1368 = vpop.f32.mrf.mxu0
    %v1369 = vadd.f32 %v1309, %v1368
    %v1370 = vpop.f32.mrf.mxu0
    %v1371 = vadd.f32 %v1309, %v1370
    %1372 = vdwg.mxu0
    %v1373 = vmax.f32 %v1369, 0.0
    %v1374 = vmax.f32 %v1371, 0.0
    %v1375 = vpack.c.bf16 %v1374, %v1373
    %v1376 = vld [vmem:[#allocation16] sm:$0xf]
    %v1377 = vld [vmem:[#allocation16 + $0x4] sm:$0xf]
    %v1378 = vld [vmem:[#allocation16 + $0x8] sm:$0xf]
    %v1379 = vld [vmem:[#allocation16 + $0xc] sm:$0xf]
    %v1380 = vld [vmem:[#allocation16 + $0x10] sm:$0xf]
    %v1381 = vld [vmem:[#allocation16 + $0x14] sm:$0xf]
    %v1382 = vld [vmem:[#allocation16 + $0x18] sm:$0xf]
    %v1383 = vld [vmem:[#allocation16 + $0x1c] sm:$0xf]
    %v1384 = vld [vmem:[#allocation16 + $0x20] sm:$0xf]
    %v1385 = vld [vmem:[#allocation16 + $0x24] sm:$0xf]
    %v1386 = vld [vmem:[#allocation16 + $0x28] sm:$0xf]
    %v1387 = vld [vmem:[#allocation16 + $0x2c] sm:$0xf]
    %v1388 = vld [vmem:[#allocation16 + $0x30] sm:$0xf]
    %v1389 = vld [vmem:[#allocation16 + $0x34] sm:$0xf]
    %v1390 = vld [vmem:[#allocation16 + $0x38] sm:$0xf]
    %v1391 = vld [vmem:[#allocation16 + $0x3c] sm:$0xf]
    %v1392 = vld [vmem:[%s16] sm:$0x1]
    %v1394 = vperm.slane %v1392, 0
    %v1412 = vunpack.c.l.b16 %v1376
    %v1413 = vunpack.c.l.b16 %v1377
    %v1414 = vunpack.c.l.b16 %v1378
    %v1415 = vunpack.c.l.b16 %v1379
    %v1416 = vunpack.c.l.b16 %v1380
    %v1417 = vunpack.c.l.b16 %v1381
    %v1418 = vunpack.c.l.b16 %v1382
    %v1419 = vunpack.c.l.b16 %v1383
    %v1420 = vunpack.c.l.b16 %v1384
    %v1421 = vunpack.c.l.b16 %v1385
    %v1422 = vunpack.c.l.b16 %v1386
    %v1423 = vunpack.c.l.b16 %v1387
    %v1424 = vunpack.c.l.b16 %v1388
    %v1425 = vunpack.c.l.b16 %v1389
    %v1426 = vunpack.c.l.b16 %v1390
    %v1427 = vunpack.c.l.b16 %v1391
    %v1428 = vpack.c.b16 %v1413, %v1412
    %v1429 = vpack.c.b16 %v1415, %v1414
    %v1430 = vpack.c.b16 %v1417, %v1416
    %v1431 = vpack.c.b16 %v1419, %v1418
    %v1432 = vpack.c.b16 %v1421, %v1420
    %v1433 = vpack.c.b16 %v1423, %v1422
    %v1434 = vpack.c.b16 %v1425, %v1424
    %v1435 = vpack.c.b16 %v1427, %v1426
    %1444 = vmatpush.bf16.msra.mxu0 %v1435
    %1445 = vmatpush.bf16.msra.mxu0 %v1434
    %1446 = vmatpush.bf16.msra.mxu0 %v1433
    %1447 = vmatpush.bf16.msra.mxu0 %v1432
    %1448 = vmatpush.bf16.msra.mxu0 %v1431
    %1449 = vmatpush.bf16.msra.mxu0 %v1430
    %1450 = vmatpush.bf16.msra.mxu0 %v1429
    %1451 = vmatpush.bf16.msra.mxu0 %v1428
    %1452 = vmatmul.bf16.gmra.mxu0 %v1375
    %v1453 = vpop.f32.mrf.mxu0
    %v1454 = vadd.f32 %v1394, %v1453
    %v1455 = vpop.f32.mrf.mxu0
    %v1456 = vadd.f32 %v1394, %v1455
    %1457 = vdwg.mxu0
    %1458 = vmax.xlane.f32.xlu0 %v1454
    %v1459 = vpop.xlane.xlu0 %1458
    %1460 = vmax.xlane.f32.xlu0 %v1456
    %v1461 = vpop.xlane.xlu0 %1460
    %v1462 = vsub.f32 %v1454, %v1459
    %v1463 = vsub.f32 %v1456, %v1461
    %v1464 = vmul.f32 %v1462, 1.442695
    %v1465 = vpow.pop %v1464
    %v1466 = vmul.f32 %v1463, 1.442695
    %v1467 = vpow.pop %v1466
    %1468 = vadd.xlane.f32.xlu0 %v1465
    %v1469 = vpop.xlane.xlu0 %1468
    %1470 = vadd.xlane.f32.xlu0 %v1467
    %v1471 = vpop.xlane.xlu0 %1470
    %v1472 = vlog2.pop %v1469
    %v1473 = vmul.f32 %v1472, 0.6931472
    %v1474 = vlog2.pop %v1471
    %v1475 = vmul.f32 %v1474, 0.6931472
    %v1476 = vsub.f32 %v1462, %v1473
    %v1477 = vsub.f32 %v1463, %v1475
    %1478 = vst [vmem:[#allocation17] sm:$0xff] %v1476
    %1479 = vst [vmem:[#allocation17 + $0x8] sm:$0xff] %v1477
    // Predicated region
    $region106: #{tpu_custom_call.1} parent=1 // pred_check
      _
    $region107: #{tpu_custom_call.1} parent=1 // pred_check_branch
      %1481 = sbr.rel (0) target = $region109
    $region108: #{tpu_custom_call.1} parent=1 // pred_region
      %1483 = vsyncadd [#allocation4], 0
      %s1484 = sshll.u32 [#allocation17], 4
      %s1485 = int_to_ptr.vmem [resolvable:$true] %s1484
      %s1486 = sshll.u32 %s17, 4
      %s1487 = int_to_ptr.hbm [resolvable:$true] %s1486
      %1492 = dma.vmem_to_hbm [thread:$0]  %s1485, 256, %s1487, [#allocation4], 128, 128, 8
    $region109: #{tpu_custom_call.1} parent=1 // pred_fallthru
      _
    // Predicated region
    $region110: #{tpu_custom_call.1} parent=1 // pred_check
      _
    $region111: #{tpu_custom_call.1} parent=1 // pred_check_branch
      %1494 = sbr.rel (0) target = $region113
    $region112: #{tpu_custom_call.1} parent=1 // pred_region
      %1496 = dma.done [#allocation4], 256
    $region113: #{tpu_custom_call.1} parent=1 // pred_fallthru
      _
    %1497 = vsyncpa [#allocation3], 1
    %1498 = vsyncpa [#allocation6], 1
    %1499 = vsyncpa [#allocation9], 1
    %1500 = vsyncpa [#allocation12], 1
    %1501 = vsyncpa [#allocation15], 1
    %1502 = vsyncpa [#allocation4], 1

// kernel: tpu_custom_call.1
$region0: #{tpu_custom_call.1}
  #allocation0 [shape = 'u32[]', space=smem, size = 0x4, offset = 0x4, fixed_abs, tag = 'smem constant byte address 0x4 - core index']
  #allocation1 [shape = 'u32[72,128]{1,0:T(1,128)}', space=vmem, size = 0x9000, scoped, tag = 'internal scratch']
  %s0 = inlined_call_operand.hbm [shape: bf16[16,640], index: 0, kind: input, shape index: {}]
  %s1 = inlined_call_operand.hbm [shape: bf16[128,128], index: 1, kind: input, shape index: {}]
  %s2 = inlined_call_operand.vmem [shape: f32[1,128], index: 2, kind: input, shape index: {}]
  %s3 = inlined_call_operand.hbm [shape: bf16[128,128], index: 3, kind: input, shape index: {}]
  %s4 = inlined_call_operand.vmem [shape: f32[1,128], index: 4, kind: input, shape index: {}]
  %s5 = inlined_call_operand.hbm [shape: bf16[128,128], index: 5, kind: input, shape index: {}]
  %s6 = inlined_call_operand.vmem [shape: f32[1,128], index: 6, kind: input, shape index: {}]
  %s7 = inlined_call_operand.hbm [shape: bf16[128,128], index: 7, kind: input, shape index: {}]
  %s8 = inlined_call_operand.vmem [shape: f32[1,128], index: 8, kind: input, shape index: {}]
  %s9 = inlined_call_operand.hbm [shape: bf16[640,128], index: 9, kind: input, shape index: {}]
  %s10 = inlined_call_operand.vmem [shape: f32[1,128], index: 10, kind: input, shape index: {}]
  %s11 = inlined_call_operand.hbm [shape: bf16[128,128], index: 11, kind: input, shape index: {}]
  %s12 = inlined_call_operand.vmem [shape: f32[1,128], index: 12, kind: input, shape index: {}]
  %s13 = inlined_call_operand.hbm [shape: bf16[128,128], index: 13, kind: input, shape index: {}]
  %s14 = inlined_call_operand.vmem [shape: f32[1,128], index: 14, kind: input, shape index: {}]
  %s15 = inlined_call_operand.hbm [shape: bf16[128,128], index: 15, kind: input, shape index: {}]
  %s16 = inlined_call_operand.vmem [shape: f32[1,128], index: 16, kind: input, shape index: {}]
  %s17 = inlined_call_operand.hbm [shape: f32[16,128], index: 17, kind: output, shape index: {}]
  %s18 = sld [smem:[#allocation0]]
  $region114: #{tpu_custom_call.1} parent=0
    _
  %s20 = ssub.s32 1, %s18
  %s21 = scalar_select 0, %s20, %s18
  $region1: #{tpu_custom_call.1} parent=0
    #allocation2 [shape = 'u8[20480]{0}', space=vmem, size = 0x5000, scoped, tag = 'input window, operand 0, single buffered']
    #allocation3 [shape = 's32[1]{0}', space=sflag, size = 0x4, scoped, tag = 'scoped memory for tpu_custom_call.1']
    #allocation4 [shape = 's32[1]{0}', space=sflag, size = 0x4, scoped, tag = 'scoped memory for tpu_custom_call.1']
    #allocation5 [shape = 'u8[32768]{0}', space=vmem, size = 0x8000, scoped, tag = 'input window, operand 1, single buffered']
    #allocation6 [shape = 's32[1]{0}', space=sflag, size = 0x4, scoped, tag = 'scoped memory for tpu_custom_call.1']
    #allocation7 [shape = 'u8[32768]{0}', space=vmem, size = 0x8000, scoped, tag = 'input window, operand 3, single buffered']
    #allocation8 [shape = 'u8[32768]{0}', space=vmem, size = 0x8000, scoped, tag = 'input window, operand 5, single buffered']
    #allocation9 [shape = 's32[1]{0}', space=sflag, size = 0x4, scoped, tag = 'scoped memory for tpu_custom_call.1']
    #allocation10 [shape = 'u8[32768]{0}', space=vmem, size = 0x8000, scoped, tag = 'input window, operand 7, single buffered']
    #allocation11 [shape = 'u8[163840]{0}', space=vmem, size = 0x28000, scoped, tag = 'input window, operand 9, single buffered']
    #allocation12 [shape = 's32[1]{0}', space=sflag, size = 0x4, scoped, tag = 'scoped memory for tpu_custom_call.1']
    #allocation13 [shape = 'u8[32768]{0}', space=vmem, size = 0x8000, scoped, tag = 'input window, operand 11, single buffered']
    #allocation14 [shape = 'u8[32768]{0}', space=vmem, size = 0x8000, scoped, tag = 'input window, operand 13, single buffered']
    #allocation15 [shape = 's32[1]{0}', space=sflag, size = 0x4, scoped, tag = 'scoped memory for tpu_custom_call.1']
    #allocation16 [shape = 'u8[32768]{0}', space=vmem, size = 0x8000, scoped, tag = 'input window, operand 15, single buffered']
    #allocation17 [shape = 'u8[8192]{0}', space=vmem, size = 0x2000, scoped, tag = 'output window, operand 0, single buffered']
    %22 = vsyncpa [#allocation3], 0
    %23 = vsyncpa [#allocation6], 0
    %24 = vsyncpa [#allocation9], 0
    %25 = vsyncpa [#allocation12], 0
    %26 = vsyncpa [#allocation15], 0
    %27 = vsyncpa [#allocation4], 0
    // Predicated region
    $region2: #{tpu_custom_call.1} parent=1 // pred_check
      _
    $region3: #{tpu_custom_call.1} parent=1 // pred_check_branch
      %29 = sbr.rel (0) target = $region5
    $region4: #{tpu_custom_call.1} parent=1 // pred_region
      %31 = vsyncadd [#allocation3], 0
      %s32 = sshll.u32 %s0, 4
      %s33 = int_to_ptr.hbm [resolvable:$true] %s32
      %s34 = sshll.u32 [#allocation2], 4
      %s35 = int_to_ptr.vmem [resolvable:$true] %s34
      %40 = dma.hbm_to_vmem [thread:$0]  %s33, 640, %s35, [#allocation3], 320, 320, 20
    $region5: #{tpu_custom_call.1} parent=1 // pred_fallthru
      _
    // Predicated region
    $region6: #{tpu_custom_call.1} parent=1 // pred_check
      _
    $region7: #{tpu_custom_call.1} parent=1 // pred_check_branch
      %42 = sbr.rel (0) target = $region9
    $region8: #{tpu_custom_call.1} parent=1 // pred_region
      %44 = vsyncadd [#allocation6], 0
      %s45 = sshll.u32 %s1, 4
      %s46 = int_to_ptr.hbm [resolvable:$true] %s45
      %s47 = sshll.u32 [#allocation5], 4
      %s48 = int_to_ptr.vmem [resolvable:$true] %s47
      %53 = dma.hbm_to_vmem [thread:$0]  %s46, 1024, %s48, [#allocation6], 64, 64, 4
    $region9: #{tpu_custom_call.1} parent=1 // pred_fallthru
      _
    // Predicated region
    $region10: #{tpu_custom_call.1} parent=1 // pred_check
      _
    $region11: #{tpu_custom_call.1} parent=1 // pred_check_branch
      %55 = sbr.rel (0) target = $region13
    $region12: #{tpu_custom_call.1} parent=1 // pred_region
      _
    $region13: #{tpu_custom_call.1} parent=1 // pred_fallthru
      _
    // Predicated region
    $region14: #{tpu_custom_call.1} parent=1 // pred_check
      _
    $region15: #{tpu_custom_call.1} parent=1 // pred_check_branch
      %57 = sbr.rel (0) target = $region17
    $region16: #{tpu_custom_call.1} parent=1 // pred_region
      %59 = vsyncadd [#allocation6], 0
      %s60 = sshll.u32 %s3, 4
      %s61 = int_to_ptr.hbm [resolvable:$true] %s60
      %s62 = sshll.u32 [#allocation7], 4
      %s63 = int_to_ptr.vmem [resolvable:$true] %s62
      %68 = dma.hbm_to_vmem [thread:$0]  %s61, 1024, %s63, [#allocation6], 64, 64, 4
    $region17: #{tpu_custom_call.1} parent=1 // pred_fallthru
      _
    // Predicated region
    $region18: #{tpu_custom_call.1} parent=1 // pred_check
      _
    $region19: #{tpu_custom_call.1} parent=1 // pred_check_branch
      %70 = sbr.rel (0) target = $region21
    $region20: #{tpu_custom_call.1} parent=1 // pred_region
      _
    $region21: #{tpu_custom_call.1} parent=1 // pred_fallthru
      _
    // Predicated region
    $region22: #{tpu_custom_call.1} parent=1 // pred_check
      _
    $region23: #{tpu_custom_call.1} parent=1 // pred_check_branch
      %72 = sbr.rel (0) target = $region25
    $region24: #{tpu_custom_call.1} parent=1 // pred_region
      %74 = vsyncadd [#allocation9], 0
      %s75 = sshll.u32 %s5, 4
      %s76 = int_to_ptr.hbm [resolvable:$true] %s75
      %s77 = sshll.u32 [#allocation8], 4
      %s78 = int_to_ptr.vmem [resolvable:$true] %s77
      %83 = dma.hbm_to_vmem [thread:$0]  %s76, 1024, %s78, [#allocation9], 64, 64, 4
    $region25: #{tpu_custom_call.1} parent=1 // pred_fallthru
      _
    // Predicated region
    $region26: #{tpu_custom_call.1} parent=1 // pred_check
      _
    $region27: #{tpu_custom_call.1} parent=1 // pred_check_branch
      %85 = sbr.rel (0) target = $region29
    $region28: #{tpu_custom_call.1} parent=1 // pred_region
      _
    $region29: #{tpu_custom_call.1} parent=1 // pred_fallthru
      _
    // Predicated region
    $region30: #{tpu_custom_call.1} parent=1 // pred_check
      _
    $region31: #{tpu_custom_call.1} parent=1 // pred_check_branch
      %87 = sbr.rel (0) target = $region33
    $region32: #{tpu_custom_call.1} parent=1 // pred_region
      %89 = vsyncadd [#allocation9], 0
      %s90 = sshll.u32 %s7, 4
      %s91 = int_to_ptr.hbm [resolvable:$true] %s90
      %s92 = sshll.u32 [#allocation10], 4
      %s93 = int_to_ptr.vmem [resolvable:$true] %s92
      %98 = dma.hbm_to_vmem [thread:$0]  %s91, 1024, %s93, [#allocation9], 64, 64, 4
    $region33: #{tpu_custom_call.1} parent=1 // pred_fallthru
      _
    // Predicated region
    $region34: #{tpu_custom_call.1} parent=1 // pred_check
      _
    $region35: #{tpu_custom_call.1} parent=1 // pred_check_branch
      %100 = sbr.rel (0) target = $region37
    $region36: #{tpu_custom_call.1} parent=1 // pred_region
      _
    $region37: #{tpu_custom_call.1} parent=1 // pred_fallthru
      _
    // Predicated region
    $region38: #{tpu_custom_call.1} parent=1 // pred_check
      _
    $region39: #{tpu_custom_call.1} parent=1 // pred_check_branch
      %102 = sbr.rel (0) target = $region41
    $region40: #{tpu_custom_call.1} parent=1 // pred_region
      %104 = vsyncadd [#allocation12], 0
      %s105 = sshll.u32 %s9, 4
      %s106 = int_to_ptr.hbm [resolvable:$true] %s105
      %s107 = sshll.u32 [#allocation11], 4
      %s108 = int_to_ptr.vmem [resolvable:$true] %s107
      %113 = dma.hbm_to_vmem [thread:$0]  %s106, 5120, %s108, [#allocation12], 64, 64, 4
    $region41: #{tpu_custom_call.1} parent=1 // pred_fallthru
      _
    // Predicated region
    $region42: #{tpu_custom_call.1} parent=1 // pred_check
      _
    $region43: #{tpu_custom_call.1} parent=1 // pred_check_branch
      %115 = sbr.rel (0) target = $region45
    $region44: #{tpu_custom_call.1} parent=1 // pred_region
      _
    $region45: #{tpu_custom_call.1} parent=1 // pred_fallthru
      _
    // Predicated region
    $region46: #{tpu_custom_call.1} parent=1 // pred_check
      _
    $region47: #{tpu_custom_call.1} parent=1 // pred_check_branch
      %117 = sbr.rel (0) target = $region49
    $region48: #{tpu_custom_call.1} parent=1 // pred_region
      %119 = vsyncadd [#allocation12], 0
      %s120 = sshll.u32 %s11, 4
      %s121 = int_to_ptr.hbm [resolvable:$true] %s120
      %s122 = sshll.u32 [#allocation13], 4
      %s123 = int_to_ptr.vmem [resolvable:$true] %s122
      %128 = dma.hbm_to_vmem [thread:$0]  %s121, 1024, %s123, [#allocation12], 64, 64, 4
    $region49: #{tpu_custom_call.1} parent=1 // pred_fallthru
      _
    // Predicated region
    $region50: #{tpu_custom_call.1} parent=1 // pred_check
      _
    $region51: #{tpu_custom_call.1} parent=1 // pred_check_branch
      %130 = sbr.rel (0) target = $region53
    $region52: #{tpu_custom_call.1} parent=1 // pred_region
      _
    $region53: #{tpu_custom_call.1} parent=1 // pred_fallthru
      _
    // Predicated region
    $region54: #{tpu_custom_call.1} parent=1 // pred_check
      _
    $region55: #{tpu_custom_call.1} parent=1 // pred_check_branch
      %132 = sbr.rel (0) target = $region57
    $region56: #{tpu_custom_call.1} parent=1 // pred_region
      %134 = vsyncadd [#allocation15], 0
      %s135 = sshll.u32 %s13, 4
      %s136 = int_to_ptr.hbm [resolvable:$true] %s135
      %s137 = sshll.u32 [#allocation14], 4
      %s138 = int_to_ptr.vmem [resolvable:$true] %s137
      %143 = dma.hbm_to_vmem [thread:$0]  %s136, 1024, %s138, [#allocation15], 64, 64, 4
    $region57: #{tpu_custom_call.1} parent=1 // pred_fallthru
      _
    // Predicated region
    $region58: #{tpu_custom_call.1} parent=1 // pred_check
      _
    $region59: #{tpu_custom_call.1} parent=1 // pred_check_branch
      %145 = sbr.rel (0) target = $region61
    $region60: #{tpu_custom_call.1} parent=1 // pred_region
      _
    $region61: #{tpu_custom_call.1} parent=1 // pred_fallthru
      _
    // Predicated region
    $region62: #{tpu_custom_call.1} parent=1 // pred_check
      _
    $region63: #{tpu_custom_call.1} parent=1 // pred_check_branch
      %147 = sbr.rel (0) target = $region65
    $region64: #{tpu_custom_call.1} parent=1 // pred_region
      %149 = vsyncadd [#allocation15], 0
      %s150 = sshll.u32 %s15, 4
      %s151 = int_to_ptr.hbm [resolvable:$true] %s150
      %s152 = sshll.u32 [#allocation16], 4
      %s153 = int_to_ptr.vmem [resolvable:$true] %s152
      %158 = dma.hbm_to_vmem [thread:$0]  %s151, 1024, %s153, [#allocation15], 64, 64, 4
    $region65: #{tpu_custom_call.1} parent=1 // pred_fallthru
      _
    // Predicated region
    $region66: #{tpu_custom_call.1} parent=1 // pred_check
      _
    $region67: #{tpu_custom_call.1} parent=1 // pred_check_branch
      %160 = sbr.rel (0) target = $region69
    $region68: #{tpu_custom_call.1} parent=1 // pred_region
      _
    $region69: #{tpu_custom_call.1} parent=1 // pred_fallthru
      _
    // Predicated region
    $region70: #{tpu_custom_call.1} parent=1 // pred_check
      _
    $region71: #{tpu_custom_call.1} parent=1 // pred_check_branch
      %162 = sbr.rel (0) target = $region73
    $region72: #{tpu_custom_call.1} parent=1 // pred_region
      %164 = dma.done [#allocation3], 640
    $region73: #{tpu_custom_call.1} parent=1 // pred_fallthru
      _
    // Predicated region
    $region74: #{tpu_custom_call.1} parent=1 // pred_check
      _
    $region75: #{tpu_custom_call.1} parent=1 // pred_check_branch
      %166 = sbr.rel (0) target = $region77
    $region76: #{tpu_custom_call.1} parent=1 // pred_region
      %168 = dma.done [#allocation6], 1024
    $region77: #{tpu_custom_call.1} parent=1 // pred_fallthru
      _
    // Predicated region
    $region78: #{tpu_custom_call.1} parent=1 // pred_check
      _
    $region79: #{tpu_custom_call.1} parent=1 // pred_check_branch
      %170 = sbr.rel (0) target = $region81
    $region80: #{tpu_custom_call.1} parent=1 // pred_region
      %172 = dma.done [#allocation6], 1024
    $region81: #{tpu_custom_call.1} parent=1 // pred_fallthru
      _
    // Predicated region
    $region82: #{tpu_custom_call.1} parent=1 // pred_check
      _
    $region83: #{tpu_custom_call.1} parent=1 // pred_check_branch
      %174 = sbr.rel (0) target = $region85
    $region84: #{tpu_custom_call.1} parent=1 // pred_region
      %176 = dma.done [#allocation9], 1024
    $region85: #{tpu_custom_call.1} parent=1 // pred_fallthru
      _
    // Predicated region
    $region86: #{tpu_custom_call.1} parent=1 // pred_check
      _
    $region87: #{tpu_custom_call.1} parent=1 // pred_check_branch
      %178 = sbr.rel (0) target = $region89
    $region88: #{tpu_custom_call.1} parent=1 // pred_region
      %180 = dma.done [#allocation9], 1024
    $region89: #{tpu_custom_call.1} parent=1 // pred_fallthru
      _
    // Predicated region
    $region90: #{tpu_custom_call.1} parent=1 // pred_check
      _
    $region91: #{tpu_custom_call.1} parent=1 // pred_check_branch
      %182 = sbr.rel (0) target = $region93
    $region92: #{tpu_custom_call.1} parent=1 // pred_region
      %184 = dma.done [#allocation12], 5120
    $region93: #{tpu_custom_call.1} parent=1 // pred_fallthru
      _
    // Predicated region
    $region94: #{tpu_custom_call.1} parent=1 // pred_check
      _
    $region95: #{tpu_custom_call.1} parent=1 // pred_check_branch
      %186 = sbr.rel (0) target = $region97
    $region96: #{tpu_custom_call.1} parent=1 // pred_region
      %188 = dma.done [#allocation12], 1024
    $region97: #{tpu_custom_call.1} parent=1 // pred_fallthru
      _
    // Predicated region
    $region98: #{tpu_custom_call.1} parent=1 // pred_check
      _
    $region99: #{tpu_custom_call.1} parent=1 // pred_check_branch
      %190 = sbr.rel (0) target = $region101
    $region100: #{tpu_custom_call.1} parent=1 // pred_region
      %192 = dma.done [#allocation15], 1024
    $region101: #{tpu_custom_call.1} parent=1 // pred_fallthru
      _
    // Predicated region
    $region102: #{tpu_custom_call.1} parent=1 // pred_check
      _
    $region103: #{tpu_custom_call.1} parent=1 // pred_check_branch
      %194 = sbr.rel (0) target = $region105
    $region104: #{tpu_custom_call.1} parent=1 // pred_region
      %196 = dma.done [#allocation15], 1024
    $region105: #{tpu_custom_call.1} parent=1 // pred_fallthru
      _
    %v197 = vld [vmem:[#allocation2] sm:$0xf]
    %v198 = vld [vmem:[#allocation2 + $0x14] sm:$0xf]
    %v199 = vld [vmem:[#allocation5] sm:$0xf]
    %v200 = vld [vmem:[#allocation5 + $0x4] sm:$0xf]
    %v201 = vld [vmem:[#allocation5 + $0x8] sm:$0xf]
    %v202 = vld [vmem:[#allocation5 + $0xc] sm:$0xf]
    %v203 = vld [vmem:[#allocation5 + $0x10] sm:$0xf]
    %v204 = vld [vmem:[#allocation5 + $0x14] sm:$0xf]
    %v205 = vld [vmem:[#allocation5 + $0x18] sm:$0xf]
    %v206 = vld [vmem:[#allocation5 + $0x1c] sm:$0xf]
    %v207 = vld [vmem:[#allocation5 + $0x20] sm:$0xf]
    %v208 = vld [vmem:[#allocation5 + $0x24] sm:$0xf]
    %v209 = vld [vmem:[#allocation5 + $0x28] sm:$0xf]
    %v210 = vld [vmem:[#allocation5 + $0x2c] sm:$0xf]
    %v211 = vld [vmem:[#allocation5 + $0x30] sm:$0xf]
    %v212 = vld [vmem:[#allocation5 + $0x34] sm:$0xf]
    %v213 = vld [vmem:[#allocation5 + $0x38] sm:$0xf]
    %v214 = vld [vmem:[#allocation5 + $0x3c] sm:$0xf]
    %v215 = vld [vmem:[%s2] sm:$0x1]
    %v217 = vperm.slane %v215, 0
    %v221 = vunpack.c.l.b16 %v197
    %v222 = vunpack.c.l.b16 %v198
    %v223 = vpack.c.b16 %v222, %v221
    %v241 = vunpack.c.l.b16 %v199
    %v242 = vunpack.c.l.b16 %v200
    %v243 = vunpack.c.l.b16 %v201
    %v244 = vunpack.c.l.b16 %v202
    %v245 = vunpack.c.l.b16 %v203
    %v246 = vunpack.c.l.b16 %v204
    %v247 = vunpack.c.l.b16 %v205
    %v248 = vunpack.c.l.b16 %v206
    %v249 = vunpack.c.l.b16 %v207
    %v250 = vunpack.c.l.b16 %v208
    %v251 = vunpack.c.l.b16 %v209
    %v252 = vunpack.c.l.b16 %v210
    %v253 = vunpack.c.l.b16 %v211
    %v254 = vunpack.c.l.b16 %v212
    %v255 = vunpack.c.l.b16 %v213
    %v256 = vunpack.c.l.b16 %v214
    %v257 = vpack.c.b16 %v242, %v241
    %v258 = vpack.c.b16 %v244, %v243
    %v259 = vpack.c.b16 %v246, %v245
    %v260 = vpack.c.b16 %v248, %v247
    %v261 = vpack.c.b16 %v250, %v249
    %v262 = vpack.c.b16 %v252, %v251
    %v263 = vpack.c.b16 %v254, %v253
    %v264 = vpack.c.b16 %v256, %v255
    %273 = vmatpush.bf16.msra.mxu0 %v264
    %274 = vmatpush.bf16.msra.mxu0 %v263
    %275 = vmatpush.bf16.msra.mxu0 %v262
    %276 = vmatpush.bf16.msra.mxu0 %v261
    %277 = vmatpush.bf16.msra.mxu0 %v260
    %278 = vmatpush.bf16.msra.mxu0 %v259
    %279 = vmatpush.bf16.msra.mxu0 %v258
    %280 = vmatpush.bf16.msra.mxu0 %v257
    %281 = vmatmul.bf16.gmra.mxu0 %v223
    %v282 = vpop.f32.mrf.mxu0
    %v283 = vadd.f32 %v217, %v282
    %v284 = vpop.f32.mrf.mxu0
    %v285 = vadd.f32 %v217, %v284
    %286 = vdwg.mxu0
    %v287 = vmax.f32 %v283, 0.0
    %v288 = vmax.f32 %v285, 0.0
    %v289 = vpack.c.bf16 %v287, %v287
    %v290 = vpack.c.bf16 %v288, %v288
    %v291 = vld [vmem:[#allocation2 + $0x4] sm:$0xf]
    %v292 = vld [vmem:[#allocation2 + $0x18] sm:$0xf]
    %v295 = vunpack.c.l.b16 %v291
    %v296 = vunpack.c.l.b16 %v292
    %v297 = vpack.c.b16 %v296, %v295
    %299 = vmatpush.bf16.msra.mxu0 %v264
    %300 = vmatpush.bf16.msra.mxu0 %v263
    %301 = vmatpush.bf16.msra.mxu0 %v262
    %302 = vmatpush.bf16.msra.mxu0 %v261
    %303 = vmatpush.bf16.msra.mxu0 %v260
    %304 = vmatpush.bf16.msra.mxu0 %v259
    %305 = vmatpush.bf16.msra.mxu0 %v258
    %306 = vmatpush.bf16.msra.mxu0 %v257
    %307 = vmatmul.bf16.gmra.mxu0 %v297
    %v308 = vpop.f32.mrf.mxu0
    %v309 = vadd.f32 %v217, %v308
    %v310 = vpop.f32.mrf.mxu0
    %v311 = vadd.f32 %v217, %v310
    %312 = vdwg.mxu0
    %v313 = vmax.f32 %v309, 0.0
    %v314 = vmax.f32 %v311, 0.0
    %v315 = vpack.c.bf16 %v313, %v313
    %v316 = vpack.c.bf16 %v314, %v314
    %v317 = vld [vmem:[#allocation2 + $0x8] sm:$0xf]
    %v318 = vld [vmem:[#allocation2 + $0x1c] sm:$0xf]
    %v321 = vunpack.c.l.b16 %v317
    %v322 = vunpack.c.l.b16 %v318
    %v323 = vpack.c.b16 %v322, %v321
    %325 = vmatpush.bf16.msra.mxu0 %v264
    %326 = vmatpush.bf16.msra.mxu0 %v263
    %327 = vmatpush.bf16.msra.mxu0 %v262
    %328 = vmatpush.bf16.msra.mxu0 %v261
    %329 = vmatpush.bf16.msra.mxu0 %v260
    %330 = vmatpush.bf16.msra.mxu0 %v259
    %331 = vmatpush.bf16.msra.mxu0 %v258
    %332 = vmatpush.bf16.msra.mxu0 %v257
    %333 = vmatmul.bf16.gmra.mxu0 %v323
    %v334 = vpop.f32.mrf.mxu0
    %v335 = vadd.f32 %v217, %v334
    %v336 = vpop.f32.mrf.mxu0
    %v337 = vadd.f32 %v217, %v336
    %338 = vdwg.mxu0
    %v339 = vmax.f32 %v335, 0.0
    %v340 = vmax.f32 %v337, 0.0
    %v341 = vpack.c.bf16 %v339, %v339
    %v342 = vpack.c.bf16 %v340, %v340
    %v343 = vld [vmem:[#allocation2 + $0xc] sm:$0xf]
    %v344 = vld [vmem:[#allocation2 + $0x20] sm:$0xf]
    %v347 = vunpack.c.l.b16 %v343
    %v348 = vunpack.c.l.b16 %v344
    %v349 = vpack.c.b16 %v348, %v347
    %351 = vmatpush.bf16.msra.mxu0 %v264
    %352 = vmatpush.bf16.msra.mxu0 %v263
    %353 = vmatpush.bf16.msra.mxu0 %v262
    %354 = vmatpush.bf16.msra.mxu0 %v261
    %355 = vmatpush.bf16.msra.mxu0 %v260
    %356 = vmatpush.bf16.msra.mxu0 %v259
    %357 = vmatpush.bf16.msra.mxu0 %v258
    %358 = vmatpush.bf16.msra.mxu0 %v257
    %359 = vmatmul.bf16.gmra.mxu0 %v349
    %v360 = vpop.f32.mrf.mxu0
    %v361 = vadd.f32 %v217, %v360
    %v362 = vpop.f32.mrf.mxu0
    %v363 = vadd.f32 %v217, %v362
    %364 = vdwg.mxu0
    %v365 = vmax.f32 %v361, 0.0
    %v366 = vmax.f32 %v363, 0.0
    %v367 = vpack.c.bf16 %v365, %v365
    %v368 = vpack.c.bf16 %v366, %v366
    %v369 = vld [vmem:[#allocation2 + $0x10] sm:$0xf]
    %v370 = vld [vmem:[#allocation2 + $0x24] sm:$0xf]
    %v373 = vunpack.c.l.b16 %v369
    %v374 = vunpack.c.l.b16 %v370
    %v375 = vpack.c.b16 %v374, %v373
    %377 = vmatpush.bf16.msra.mxu0 %v264
    %378 = vmatpush.bf16.msra.mxu0 %v263
    %379 = vmatpush.bf16.msra.mxu0 %v262
    %380 = vmatpush.bf16.msra.mxu0 %v261
    %381 = vmatpush.bf16.msra.mxu0 %v260
    %382 = vmatpush.bf16.msra.mxu0 %v259
    %383 = vmatpush.bf16.msra.mxu0 %v258
    %384 = vmatpush.bf16.msra.mxu0 %v257
    %385 = vmatmul.bf16.gmra.mxu0 %v375
    %v386 = vpop.f32.mrf.mxu0
    %v387 = vadd.f32 %v217, %v386
    %v388 = vpop.f32.mrf.mxu0
    %v389 = vadd.f32 %v217, %v388
    %390 = vdwg.mxu0
    %v391 = vmax.f32 %v387, 0.0
    %v392 = vmax.f32 %v389, 0.0
    %v393 = vpack.c.bf16 %v391, %v391
    %v394 = vpack.c.bf16 %v392, %v392
    %v397 = vunpack.c.l.b16 %v289
    %v398 = vunpack.c.l.b16 %v290
    %v399 = vpack.c.b16 %v398, %v397
    %v403 = vunpack.c.l.b16 %v315
    %v404 = vunpack.c.l.b16 %v316
    %v405 = vpack.c.b16 %v404, %v403
    %v409 = vunpack.c.l.b16 %v341
    %v410 = vunpack.c.l.b16 %v342
    %v411 = vpack.c.b16 %v410, %v409
    %v415 = vunpack.c.l.b16 %v367
    %v416 = vunpack.c.l.b16 %v368
    %v417 = vpack.c.b16 %v416, %v415
    %v421 = vunpack.c.l.b16 %v393
    %v422 = vunpack.c.l.b16 %v394
    %v423 = vpack.c.b16 %v422, %v421
    %v425 = vld [vmem:[#allocation7] sm:$0xf]
    %v426 = vld [vmem:[#allocation7 + $0x4] sm:$0xf]
    %v427 = vld [vmem:[#allocation7 + $0x8] sm:$0xf]
    %v428 = vld [vmem:[#allocation7 + $0xc] sm:$0xf]
    %v429 = vld [vmem:[#allocation7 + $0x10] sm:$0xf]
    %v430 = vld [vmem:[#allocation7 + $0x14] sm:$0xf]
    %v431 = vld [vmem:[#allocation7 + $0x18] sm:$0xf]
    %v432 = vld [vmem:[#allocation7 + $0x1c] sm:$0xf]
    %v433 = vld [vmem:[#allocation7 + $0x20] sm:$0xf]
    %v434 = vld [vmem:[#allocation7 + $0x24] sm:$0xf]
    %v435 = vld [vmem:[#allocation7 + $0x28] sm:$0xf]
    %v436 = vld [vmem:[#allocation7 + $0x2c] sm:$0xf]
    %v437 = vld [vmem:[#allocation7 + $0x30] sm:$0xf]
    %v438 = vld [vmem:[#allocation7 + $0x34] sm:$0xf]
    %v439 = vld [vmem:[#allocation7 + $0x38] sm:$0xf]
    %v440 = vld [vmem:[#allocation7 + $0x3c] sm:$0xf]
    %v441 = vld [vmem:[%s4] sm:$0x1]
    %v443 = vperm.slane %v441, 0
    %v461 = vunpack.c.l.b16 %v425
    %v462 = vunpack.c.l.b16 %v426
    %v463 = vunpack.c.l.b16 %v427
    %v464 = vunpack.c.l.b16 %v428
    %v465 = vunpack.c.l.b16 %v429
    %v466 = vunpack.c.l.b16 %v430
    %v467 = vunpack.c.l.b16 %v431
    %v468 = vunpack.c.l.b16 %v432
    %v469 = vunpack.c.l.b16 %v433
    %v470 = vunpack.c.l.b16 %v434
    %v471 = vunpack.c.l.b16 %v435
    %v472 = vunpack.c.l.b16 %v436
    %v473 = vunpack.c.l.b16 %v437
    %v474 = vunpack.c.l.b16 %v438
    %v475 = vunpack.c.l.b16 %v439
    %v476 = vunpack.c.l.b16 %v440
    %v477 = vpack.c.b16 %v462, %v461
    %v478 = vpack.c.b16 %v464, %v463
    %v479 = vpack.c.b16 %v466, %v465
    %v480 = vpack.c.b16 %v468, %v467
    %v481 = vpack.c.b16 %v470, %v469
    %v482 = vpack.c.b16 %v472, %v471
    %v483 = vpack.c.b16 %v474, %v473
    %v484 = vpack.c.b16 %v476, %v475
    %493 = vmatpush.bf16.msra.mxu0 %v484
    %494 = vmatpush.bf16.msra.mxu0 %v483
    %495 = vmatpush.bf16.msra.mxu0 %v482
    %496 = vmatpush.bf16.msra.mxu0 %v481
    %497 = vmatpush.bf16.msra.mxu0 %v480
    %498 = vmatpush.bf16.msra.mxu0 %v479
    %499 = vmatpush.bf16.msra.mxu0 %v478
    %500 = vmatpush.bf16.msra.mxu0 %v477
    %501 = vmatmul.bf16.gmra.mxu0 %v399
    %v502 = vpop.f32.mrf.mxu0
    %v503 = vadd.f32 %v443, %v502
    %v504 = vpop.f32.mrf.mxu0
    %v505 = vadd.f32 %v443, %v504
    %506 = vmatmul.bf16.gmra.mxu0 %v405
    %v507 = vpop.f32.mrf.mxu0
    %v508 = vadd.f32 %v443, %v507
    %v509 = vpop.f32.mrf.mxu0
    %v510 = vadd.f32 %v443, %v509
    %511 = vmatmul.bf16.gmra.mxu0 %v411
    %v512 = vpop.f32.mrf.mxu0
    %v513 = vadd.f32 %v443, %v512
    %v514 = vpop.f32.mrf.mxu0
    %v515 = vadd.f32 %v443, %v514
    %516 = vmatmul.bf16.gmra.mxu0 %v417
    %v517 = vpop.f32.mrf.mxu0
    %v518 = vadd.f32 %v443, %v517
    %v519 = vpop.f32.mrf.mxu0
    %v520 = vadd.f32 %v443, %v519
    %521 = vmatmul.bf16.gmra.mxu0 %v423
    %v522 = vpop.f32.mrf.mxu0
    %v523 = vadd.f32 %v443, %v522
    %v524 = vpop.f32.mrf.mxu0
    %v525 = vadd.f32 %v443, %v524
    %526 = vdwg.mxu0
    %v527 = vmax.f32 %v503, 0.0
    %v528 = vmax.f32 %v505, 0.0
    %v529 = vmax.f32 %v508, 0.0
    %v530 = vmax.f32 %v510, 0.0
    %v531 = vmax.f32 %v513, 0.0
    %v532 = vmax.f32 %v515, 0.0
    %v533 = vmax.f32 %v518, 0.0
    %v534 = vmax.f32 %v520, 0.0
    %v535 = vmax.f32 %v523, 0.0
    %v536 = vmax.f32 %v525, 0.0
    %v537 = vpack.c.bf16 %v528, %v527
    %v538 = vpack.c.bf16 %v530, %v529
    %v539 = vpack.c.bf16 %v532, %v531
    %v540 = vpack.c.bf16 %v534, %v533
    %v541 = vpack.c.bf16 %v536, %v535
    %v542 = vld [vmem:[#allocation8] sm:$0xf]
    %v543 = vld [vmem:[#allocation8 + $0x4] sm:$0xf]
    %v544 = vld [vmem:[#allocation8 + $0x8] sm:$0xf]
    %v545 = vld [vmem:[#allocation8 + $0xc] sm:$0xf]
    %v546 = vld [vmem:[#allocation8 + $0x10] sm:$0xf]
    %v547 = vld [vmem:[#allocation8 + $0x14] sm:$0xf]
    %v548 = vld [vmem:[#allocation8 + $0x18] sm:$0xf]
    %v549 = vld [vmem:[#allocation8 + $0x1c] sm:$0xf]
    %v550 = vld [vmem:[#allocation8 + $0x20] sm:$0xf]
    %v551 = vld [vmem:[#allocation8 + $0x24] sm:$0xf]
    %v552 = vld [vmem:[#allocation8 + $0x28] sm:$0xf]
    %v553 = vld [vmem:[#allocation8 + $0x2c] sm:$0xf]
    %v554 = vld [vmem:[#allocation8 + $0x30] sm:$0xf]
    %v555 = vld [vmem:[#allocation8 + $0x34] sm:$0xf]
    %v556 = vld [vmem:[#allocation8 + $0x38] sm:$0xf]
    %v557 = vld [vmem:[#allocation8 + $0x3c] sm:$0xf]
    %v558 = vld [vmem:[%s6] sm:$0x1]
    %v560 = vperm.slane %v558, 0
    %v578 = vunpack.c.l.b16 %v542
    %v579 = vunpack.c.l.b16 %v543
    %v580 = vunpack.c.l.b16 %v544
    %v581 = vunpack.c.l.b16 %v545
    %v582 = vunpack.c.l.b16 %v546
    %v583 = vunpack.c.l.b16 %v547
    %v584 = vunpack.c.l.b16 %v548
    %v585 = vunpack.c.l.b16 %v549
    %v586 = vunpack.c.l.b16 %v550
    %v587 = vunpack.c.l.b16 %v551
    %v588 = vunpack.c.l.b16 %v552
    %v589 = vunpack.c.l.b16 %v553
    %v590 = vunpack.c.l.b16 %v554
    %v591 = vunpack.c.l.b16 %v555
    %v592 = vunpack.c.l.b16 %v556
    %v593 = vunpack.c.l.b16 %v557
    %v594 = vpack.c.b16 %v579, %v578
    %v595 = vpack.c.b16 %v581, %v580
    %v596 = vpack.c.b16 %v583, %v582
    %v597 = vpack.c.b16 %v585, %v584
    %v598 = vpack.c.b16 %v587, %v586
    %v599 = vpack.c.b16 %v589, %v588
    %v600 = vpack.c.b16 %v591, %v590
    %v601 = vpack.c.b16 %v593, %v592
    %610 = vmatpush.bf16.msra.mxu0 %v601
    %611 = vmatpush.bf16.msra.mxu0 %v600
    %612 = vmatpush.bf16.msra.mxu0 %v599
    %613 = vmatpush.bf16.msra.mxu0 %v598
    %614 = vmatpush.bf16.msra.mxu0 %v597
    %615 = vmatpush.bf16.msra.mxu0 %v596
    %616 = vmatpush.bf16.msra.mxu0 %v595
    %617 = vmatpush.bf16.msra.mxu0 %v594
    %618 = vmatmul.bf16.gmra.mxu0 %v537
    %v619 = vpop.f32.mrf.mxu0
    %v620 = vadd.f32 %v560, %v619
    %v621 = vpop.f32.mrf.mxu0
    %v622 = vadd.f32 %v560, %v621
    %623 = vmatmul.bf16.gmra.mxu0 %v538
    %v624 = vpop.f32.mrf.mxu0
    %v625 = vadd.f32 %v560, %v624
    %v626 = vpop.f32.mrf.mxu0
    %v627 = vadd.f32 %v560, %v626
    %628 = vmatmul.bf16.gmra.mxu0 %v539
    %v629 = vpop.f32.mrf.mxu0
    %v630 = vadd.f32 %v560, %v629
    %v631 = vpop.f32.mrf.mxu0
    %v632 = vadd.f32 %v560, %v631
    %633 = vmatmul.bf16.gmra.mxu0 %v540
    %v634 = vpop.f32.mrf.mxu0
    %v635 = vadd.f32 %v560, %v634
    %v636 = vpop.f32.mrf.mxu0
    %v637 = vadd.f32 %v560, %v636
    %638 = vmatmul.bf16.gmra.mxu0 %v541
    %v639 = vpop.f32.mrf.mxu0
    %v640 = vadd.f32 %v560, %v639
    %v641 = vpop.f32.mrf.mxu0
    %v642 = vadd.f32 %v560, %v641
    %643 = vdwg.mxu0
    %v644 = vmax.f32 %v620, 0.0
    %v645 = vmax.f32 %v622, 0.0
    %v646 = vmax.f32 %v625, 0.0
    %v647 = vmax.f32 %v627, 0.0
    %v648 = vmax.f32 %v630, 0.0
    %v649 = vmax.f32 %v632, 0.0
    %v650 = vmax.f32 %v635, 0.0
    %v651 = vmax.f32 %v637, 0.0
    %v652 = vmax.f32 %v640, 0.0
    %v653 = vmax.f32 %v642, 0.0
    %v654 = vpack.c.bf16 %v645, %v644
    %v655 = vpack.c.bf16 %v647, %v646
    %v656 = vpack.c.bf16 %v649, %v648
    %v657 = vpack.c.bf16 %v651, %v650
    %v658 = vpack.c.bf16 %v653, %v652
    %v659 = vld [vmem:[#allocation10] sm:$0xf]
    %v660 = vld [vmem:[#allocation10 + $0x4] sm:$0xf]
    %v661 = vld [vmem:[#allocation10 + $0x8] sm:$0xf]
    %v662 = vld [vmem:[#allocation10 + $0xc] sm:$0xf]
    %v663 = vld [vmem:[#allocation10 + $0x10] sm:$0xf]
    %v664 = vld [vmem:[#allocation10 + $0x14] sm:$0xf]
    %v665 = vld [vmem:[#allocation10 + $0x18] sm:$0xf]
    %v666 = vld [vmem:[#allocation10 + $0x1c] sm:$0xf]
    %v667 = vld [vmem:[#allocation10 + $0x20] sm:$0xf]
    %v668 = vld [vmem:[#allocation10 + $0x24] sm:$0xf]
    %v669 = vld [vmem:[#allocation10 + $0x28] sm:$0xf]
    %v670 = vld [vmem:[#allocation10 + $0x2c] sm:$0xf]
    %v671 = vld [vmem:[#allocation10 + $0x30] sm:$0xf]
    %v672 = vld [vmem:[#allocation10 + $0x34] sm:$0xf]
    %v673 = vld [vmem:[#allocation10 + $0x38] sm:$0xf]
    %v674 = vld [vmem:[#allocation10 + $0x3c] sm:$0xf]
    %v675 = vld [vmem:[%s8] sm:$0x1]
    %v677 = vperm.slane %v675, 0
    %v695 = vunpack.c.l.b16 %v659
    %v696 = vunpack.c.l.b16 %v660
    %v697 = vunpack.c.l.b16 %v661
    %v698 = vunpack.c.l.b16 %v662
    %v699 = vunpack.c.l.b16 %v663
    %v700 = vunpack.c.l.b16 %v664
    %v701 = vunpack.c.l.b16 %v665
    %v702 = vunpack.c.l.b16 %v666
    %v703 = vunpack.c.l.b16 %v667
    %v704 = vunpack.c.l.b16 %v668
    %v705 = vunpack.c.l.b16 %v669
    %v706 = vunpack.c.l.b16 %v670
    %v707 = vunpack.c.l.b16 %v671
    %v708 = vunpack.c.l.b16 %v672
    %v709 = vunpack.c.l.b16 %v673
    %v710 = vunpack.c.l.b16 %v674
    %v711 = vpack.c.b16 %v696, %v695
    %v712 = vpack.c.b16 %v698, %v697
    %v713 = vpack.c.b16 %v700, %v699
    %v714 = vpack.c.b16 %v702, %v701
    %v715 = vpack.c.b16 %v704, %v703
    %v716 = vpack.c.b16 %v706, %v705
    %v717 = vpack.c.b16 %v708, %v707
    %v718 = vpack.c.b16 %v710, %v709
    %727 = vmatpush.bf16.msra.mxu0 %v718
    %728 = vmatpush.bf16.msra.mxu0 %v717
    %729 = vmatpush.bf16.msra.mxu0 %v716
    %730 = vmatpush.bf16.msra.mxu0 %v715
    %731 = vmatpush.bf16.msra.mxu0 %v714
    %732 = vmatpush.bf16.msra.mxu0 %v713
    %733 = vmatpush.bf16.msra.mxu0 %v712
    %734 = vmatpush.bf16.msra.mxu0 %v711
    %735 = vmatmul.bf16.gmra.mxu0 %v654
    %v736 = vpop.f32.mrf.mxu0
    %v737 = vadd.f32 %v677, %v736
    %v738 = vpop.f32.mrf.mxu0
    %v739 = vadd.f32 %v677, %v738
    %740 = vmatmul.bf16.gmra.mxu0 %v655
    %v741 = vpop.f32.mrf.mxu0
    %v742 = vadd.f32 %v677, %v741
    %v743 = vpop.f32.mrf.mxu0
    %v744 = vadd.f32 %v677, %v743
    %745 = vmatmul.bf16.gmra.mxu0 %v656
    %v746 = vpop.f32.mrf.mxu0
    %v747 = vadd.f32 %v677, %v746
    %v748 = vpop.f32.mrf.mxu0
    %v749 = vadd.f32 %v677, %v748
    %750 = vmatmul.bf16.gmra.mxu0 %v657
    %v751 = vpop.f32.mrf.mxu0
    %v752 = vadd.f32 %v677, %v751
    %v753 = vpop.f32.mrf.mxu0
    %v754 = vadd.f32 %v677, %v753
    %755 = vmatmul.bf16.gmra.mxu0 %v658
    %v756 = vpop.f32.mrf.mxu0
    %v757 = vadd.f32 %v677, %v756
    %v758 = vpop.f32.mrf.mxu0
    %v759 = vadd.f32 %v677, %v758
    %760 = vdwg.mxu0
    %v761 = vpack.c.bf16 %v737, %v737
    %v762 = vpack.c.bf16 %v739, %v739
    %v763 = vpack.c.bf16 %v742, %v742
    %v764 = vpack.c.bf16 %v744, %v744
    %v765 = vpack.c.bf16 %v747, %v747
    %v766 = vpack.c.bf16 %v749, %v749
    %v767 = vpack.c.bf16 %v752, %v752
    %v768 = vpack.c.bf16 %v754, %v754
    %v769 = vpack.c.bf16 %v757, %v757
    %v770 = vpack.c.bf16 %v759, %v759
    %v771 = vld [vmem:[#allocation11] sm:$0xf]
    %v772 = vld [vmem:[#allocation11 + $0x4] sm:$0xf]
    %v773 = vld [vmem:[#allocation11 + $0x8] sm:$0xf]
    %v774 = vld [vmem:[#allocation11 + $0xc] sm:$0xf]
    %v775 = vld [vmem:[#allocation11 + $0x10] sm:$0xf]
    %v776 = vld [vmem:[#allocation11 + $0x14] sm:$0xf]
    %v777 = vld [vmem:[#allocation11 + $0x18] sm:$0xf]
    %v778 = vld [vmem:[#allocation11 + $0x1c] sm:$0xf]
    %v779 = vld [vmem:[#allocation11 + $0x20] sm:$0xf]
    %v780 = vld [vmem:[#allocation11 + $0x24] sm:$0xf]
    %v781 = vld [vmem:[#allocation11 + $0x28] sm:$0xf]
    %v782 = vld [vmem:[#allocation11 + $0x2c] sm:$0xf]
    %v783 = vld [vmem:[#allocation11 + $0x30] sm:$0xf]
    %v784 = vld [vmem:[#allocation11 + $0x34] sm:$0xf]
    %v785 = vld [vmem:[#allocation11 + $0x38] sm:$0xf]
    %v786 = vld [vmem:[#allocation11 + $0x3c] sm:$0xf]
    %v787 = vld [vmem:[#allocation11 + $0x40] sm:$0xf]
    %v788 = vld [vmem:[#allocation11 + $0x44] sm:$0xf]
    %v789 = vld [vmem:[#allocation11 + $0x48] sm:$0xf]
    %v790 = vld [vmem:[#allocation11 + $0x4c] sm:$0xf]
    %v791 = vld [vmem:[#allocation11 + $0x50] sm:$0xf]
    %v792 = vld [vmem:[#allocation11 + $0x54] sm:$0xf]
    %v793 = vld [vmem:[#allocation11 + $0x58] sm:$0xf]
    %v794 = vld [vmem:[#allocation11 + $0x5c] sm:$0xf]
    %v795 = vld [vmem:[#allocation11 + $0x60] sm:$0xf]
    %v796 = vld [vmem:[#allocation11 + $0x64] sm:$0xf]
    %v797 = vld [vmem:[#allocation11 + $0x68] sm:$0xf]
    %v798 = vld [vmem:[#allocation11 + $0x6c] sm:$0xf]
    %v799 = vld [vmem:[#allocation11 + $0x70] sm:$0xf]
    %v800 = vld [vmem:[#allocation11 + $0x74] sm:$0xf]
    %v801 = vld [vmem:[#allocation11 + $0x78] sm:$0xf]
    %v802 = vld [vmem:[#allocation11 + $0x7c] sm:$0xf]
    %v805 = vunpack.c.l.b16 %v763
    %v806 = vunpack.c.l.b16 %v764
    %v807 = vpack.c.b16 %v806, %v805
    %v825 = vunpack.c.l.b16 %v787
    %v826 = vunpack.c.l.b16 %v788
    %v827 = vunpack.c.l.b16 %v789
    %v828 = vunpack.c.l.b16 %v790
    %v829 = vunpack.c.l.b16 %v791
    %v830 = vunpack.c.l.b16 %v792
    %v831 = vunpack.c.l.b16 %v793
    %v832 = vunpack.c.l.b16 %v794
    %v833 = vunpack.c.l.b16 %v795
    %v834 = vunpack.c.l.b16 %v796
    %v835 = vunpack.c.l.b16 %v797
    %v836 = vunpack.c.l.b16 %v798
    %v837 = vunpack.c.l.b16 %v799
    %v838 = vunpack.c.l.b16 %v800
    %v839 = vunpack.c.l.b16 %v801
    %v840 = vunpack.c.l.b16 %v802
    %v841 = vpack.c.b16 %v826, %v825
    %v842 = vpack.c.b16 %v828, %v827
    %v843 = vpack.c.b16 %v830, %v829
    %v844 = vpack.c.b16 %v832, %v831
    %v845 = vpack.c.b16 %v834, %v833
    %v846 = vpack.c.b16 %v836, %v835
    %v847 = vpack.c.b16 %v838, %v837
    %v848 = vpack.c.b16 %v840, %v839
    %857 = vmatpush.bf16.msra.mxu0 %v848
    %858 = vmatpush.bf16.msra.mxu0 %v847
    %859 = vmatpush.bf16.msra.mxu0 %v846
    %860 = vmatpush.bf16.msra.mxu0 %v845
    %861 = vmatpush.bf16.msra.mxu0 %v844
    %862 = vmatpush.bf16.msra.mxu0 %v843
    %863 = vmatpush.bf16.msra.mxu0 %v842
    %864 = vmatpush.bf16.msra.mxu0 %v841
    %865 = vmatmul.bf16.gmra.mxu0 %v807
    %v866 = vpop.f32.mrf.mxu0
    %v867 = vadd.f32 0.0, %v866
    %v868 = vpop.f32.mrf.mxu0
    %v869 = vadd.f32 0.0, %v868
    %870 = vdwg.mxu0
    %v873 = vunpack.c.l.b16 %v761
    %v874 = vunpack.c.l.b16 %v762
    %v875 = vpack.c.b16 %v874, %v873
    %v893 = vunpack.c.l.b16 %v771
    %v894 = vunpack.c.l.b16 %v772
    %v895 = vunpack.c.l.b16 %v773
    %v896 = vunpack.c.l.b16 %v774
    %v897 = vunpack.c.l.b16 %v775
    %v898 = vunpack.c.l.b16 %v776
    %v899 = vunpack.c.l.b16 %v777
    %v900 = vunpack.c.l.b16 %v778
    %v901 = vunpack.c.l.b16 %v779
    %v902 = vunpack.c.l.b16 %v780
    %v903 = vunpack.c.l.b16 %v781
    %v904 = vunpack.c.l.b16 %v782
    %v905 = vunpack.c.l.b16 %v783
    %v906 = vunpack.c.l.b16 %v784
    %v907 = vunpack.c.l.b16 %v785
    %v908 = vunpack.c.l.b16 %v786
    %v909 = vpack.c.b16 %v894, %v893
    %v910 = vpack.c.b16 %v896, %v895
    %v911 = vpack.c.b16 %v898, %v897
    %v912 = vpack.c.b16 %v900, %v899
    %v913 = vpack.c.b16 %v902, %v901
    %v914 = vpack.c.b16 %v904, %v903
    %v915 = vpack.c.b16 %v906, %v905
    %v916 = vpack.c.b16 %v908, %v907
    %925 = vmatpush.bf16.msra.mxu0 %v916
    %926 = vmatpush.bf16.msra.mxu0 %v915
    %927 = vmatpush.bf16.msra.mxu0 %v914
    %928 = vmatpush.bf16.msra.mxu0 %v913
    %929 = vmatpush.bf16.msra.mxu0 %v912
    %930 = vmatpush.bf16.msra.mxu0 %v911
    %931 = vmatpush.bf16.msra.mxu0 %v910
    %932 = vmatpush.bf16.msra.mxu0 %v909
    %933 = vmatmul.bf16.gmra.mxu0 %v875
    %v934 = vpop.f32.mrf.mxu0
    %v935 = vadd.f32 %v867, %v934
    %v936 = vpop.f32.mrf.mxu0
    %v937 = vadd.f32 %v869, %v936
    %938 = vdwg.mxu0
    %v939 = vld [vmem:[#allocation11 + $0x80] sm:$0xf]
    %v940 = vld [vmem:[#allocation11 + $0x84] sm:$0xf]
    %v941 = vld [vmem:[#allocation11 + $0x88] sm:$0xf]
    %v942 = vld [vmem:[#allocation11 + $0x8c] sm:$0xf]
    %v943 = vld [vmem:[#allocation11 + $0x90] sm:$0xf]
    %v944 = vld [vmem:[#allocation11 + $0x94] sm:$0xf]
    %v945 = vld [vmem:[#allocation11 + $0x98] sm:$0xf]
    %v946 = vld [vmem:[#allocation11 + $0x9c] sm:$0xf]
    %v947 = vld [vmem:[#allocation11 + $0xa0] sm:$0xf]
    %v948 = vld [vmem:[#allocation11 + $0xa4] sm:$0xf]
    %v949 = vld [vmem:[#allocation11 + $0xa8] sm:$0xf]
    %v950 = vld [vmem:[#allocation11 + $0xac] sm:$0xf]
    %v951 = vld [vmem:[#allocation11 + $0xb0] sm:$0xf]
    %v952 = vld [vmem:[#allocation11 + $0xb4] sm:$0xf]
    %v953 = vld [vmem:[#allocation11 + $0xb8] sm:$0xf]
    %v954 = vld [vmem:[#allocation11 + $0xbc] sm:$0xf]
    %v957 = vunpack.c.l.b16 %v765
    %v958 = vunpack.c.l.b16 %v766
    %v959 = vpack.c.b16 %v958, %v957
    %v977 = vunpack.c.l.b16 %v939
    %v978 = vunpack.c.l.b16 %v940
    %v979 = vunpack.c.l.b16 %v941
    %v980 = vunpack.c.l.b16 %v942
    %v981 = vunpack.c.l.b16 %v943
    %v982 = vunpack.c.l.b16 %v944
    %v983 = vunpack.c.l.b16 %v945
    %v984 = vunpack.c.l.b16 %v946
    %v985 = vunpack.c.l.b16 %v947
    %v986 = vunpack.c.l.b16 %v948
    %v987 = vunpack.c.l.b16 %v949
    %v988 = vunpack.c.l.b16 %v950
    %v989 = vunpack.c.l.b16 %v951
    %v990 = vunpack.c.l.b16 %v952
    %v991 = vunpack.c.l.b16 %v953
    %v992 = vunpack.c.l.b16 %v954
    %v993 = vpack.c.b16 %v978, %v977
    %v994 = vpack.c.b16 %v980, %v979
    %v995 = vpack.c.b16 %v982, %v981
    %v996 = vpack.c.b16 %v984, %v983
    %v997 = vpack.c.b16 %v986, %v985
    %v998 = vpack.c.b16 %v988, %v987
    %v999 = vpack.c.b16 %v990, %v989
    %v1000 = vpack.c.b16 %v992, %v991
    %1009 = vmatpush.bf16.msra.mxu0 %v1000
    %1010 = vmatpush.bf16.msra.mxu0 %v999
    %1011 = vmatpush.bf16.msra.mxu0 %v998
    %1012 = vmatpush.bf16.msra.mxu0 %v997
    %1013 = vmatpush.bf16.msra.mxu0 %v996
    %1014 = vmatpush.bf16.msra.mxu0 %v995
    %1015 = vmatpush.bf16.msra.mxu0 %v994
    %1016 = vmatpush.bf16.msra.mxu0 %v993
    %1017 = vmatmul.bf16.gmra.mxu0 %v959
    %v1018 = vpop.f32.mrf.mxu0
    %v1019 = vadd.f32 0.0, %v1018
    %v1020 = vpop.f32.mrf.mxu0
    %v1021 = vadd.f32 0.0, %v1020
    %1022 = vdwg.mxu0
    %v1023 = vadd.f32 %v935, %v1019
    %v1024 = vadd.f32 %v937, %v1021
    %v1025 = vld [vmem:[#allocation11 + $0xc0] sm:$0xf]
    %v1026 = vld [vmem:[#allocation11 + $0xc4] sm:$0xf]
    %v1027 = vld [vmem:[#allocation11 + $0xc8] sm:$0xf]
    %v1028 = vld [vmem:[#allocation11 + $0xcc] sm:$0xf]
    %v1029 = vld [vmem:[#allocation11 + $0xd0] sm:$0xf]
    %v1030 = vld [vmem:[#allocation11 + $0xd4] sm:$0xf]
    %v1031 = vld [vmem:[#allocation11 + $0xd8] sm:$0xf]
    %v1032 = vld [vmem:[#allocation11 + $0xdc] sm:$0xf]
    %v1033 = vld [vmem:[#allocation11 + $0xe0] sm:$0xf]
    %v1034 = vld [vmem:[#allocation11 + $0xe4] sm:$0xf]
    %v1035 = vld [vmem:[#allocation11 + $0xe8] sm:$0xf]
    %v1036 = vld [vmem:[#allocation11 + $0xec] sm:$0xf]
    %v1037 = vld [vmem:[#allocation11 + $0xf0] sm:$0xf]
    %v1038 = vld [vmem:[#allocation11 + $0xf4] sm:$0xf]
    %v1039 = vld [vmem:[#allocation11 + $0xf8] sm:$0xf]
    %v1040 = vld [vmem:[#allocation11 + $0xfc] sm:$0xf]
    %v1043 = vunpack.c.l.b16 %v767
    %v1044 = vunpack.c.l.b16 %v768
    %v1045 = vpack.c.b16 %v1044, %v1043
    %v1063 = vunpack.c.l.b16 %v1025
    %v1064 = vunpack.c.l.b16 %v1026
    %v1065 = vunpack.c.l.b16 %v1027
    %v1066 = vunpack.c.l.b16 %v1028
    %v1067 = vunpack.c.l.b16 %v1029
    %v1068 = vunpack.c.l.b16 %v1030
    %v1069 = vunpack.c.l.b16 %v1031
    %v1070 = vunpack.c.l.b16 %v1032
    %v1071 = vunpack.c.l.b16 %v1033
    %v1072 = vunpack.c.l.b16 %v1034
    %v1073 = vunpack.c.l.b16 %v1035
    %v1074 = vunpack.c.l.b16 %v1036
    %v1075 = vunpack.c.l.b16 %v1037
    %v1076 = vunpack.c.l.b16 %v1038
    %v1077 = vunpack.c.l.b16 %v1039
    %v1078 = vunpack.c.l.b16 %v1040
    %v1079 = vpack.c.b16 %v1064, %v1063
    %v1080 = vpack.c.b16 %v1066, %v1065
    %v1081 = vpack.c.b16 %v1068, %v1067
    %v1082 = vpack.c.b16 %v1070, %v1069
    %v1083 = vpack.c.b16 %v1072, %v1071
    %v1084 = vpack.c.b16 %v1074, %v1073
    %v1085 = vpack.c.b16 %v1076, %v1075
    %v1086 = vpack.c.b16 %v1078, %v1077
    %1095 = vmatpush.bf16.msra.mxu0 %v1086
    %1096 = vmatpush.bf16.msra.mxu0 %v1085
    %1097 = vmatpush.bf16.msra.mxu0 %v1084
    %1098 = vmatpush.bf16.msra.mxu0 %v1083
    %1099 = vmatpush.bf16.msra.mxu0 %v1082
    %1100 = vmatpush.bf16.msra.mxu0 %v1081
    %1101 = vmatpush.bf16.msra.mxu0 %v1080
    %1102 = vmatpush.bf16.msra.mxu0 %v1079
    %1103 = vmatmul.bf16.gmra.mxu0 %v1045
    %v1104 = vpop.f32.mrf.mxu0
    %v1105 = vadd.f32 0.0, %v1104
    %v1106 = vpop.f32.mrf.mxu0
    %v1107 = vadd.f32 0.0, %v1106
    %1108 = vdwg.mxu0
    %v1109 = vadd.f32 %v1023, %v1105
    %v1110 = vadd.f32 %v1024, %v1107
    %v1111 = vld [vmem:[#allocation11 + $0x100] sm:$0xf]
    %v1112 = vld [vmem:[#allocation11 + $0x104] sm:$0xf]
    %v1113 = vld [vmem:[#allocation11 + $0x108] sm:$0xf]
    %v1114 = vld [vmem:[#allocation11 + $0x10c] sm:$0xf]
    %v1115 = vld [vmem:[#allocation11 + $0x110] sm:$0xf]
    %v1116 = vld [vmem:[#allocation11 + $0x114] sm:$0xf]
    %v1117 = vld [vmem:[#allocation11 + $0x118] sm:$0xf]
    %v1118 = vld [vmem:[#allocation11 + $0x11c] sm:$0xf]
    %v1119 = vld [vmem:[#allocation11 + $0x120] sm:$0xf]
    %v1120 = vld [vmem:[#allocation11 + $0x124] sm:$0xf]
    %v1121 = vld [vmem:[#allocation11 + $0x128] sm:$0xf]
    %v1122 = vld [vmem:[#allocation11 + $0x12c] sm:$0xf]
    %v1123 = vld [vmem:[#allocation11 + $0x130] sm:$0xf]
    %v1124 = vld [vmem:[#allocation11 + $0x134] sm:$0xf]
    %v1125 = vld [vmem:[#allocation11 + $0x138] sm:$0xf]
    %v1126 = vld [vmem:[#allocation11 + $0x13c] sm:$0xf]
    %v1129 = vunpack.c.l.b16 %v769
    %v1130 = vunpack.c.l.b16 %v770
    %v1131 = vpack.c.b16 %v1130, %v1129
    %v1149 = vunpack.c.l.b16 %v1111
    %v1150 = vunpack.c.l.b16 %v1112
    %v1151 = vunpack.c.l.b16 %v1113
    %v1152 = vunpack.c.l.b16 %v1114
    %v1153 = vunpack.c.l.b16 %v1115
    %v1154 = vunpack.c.l.b16 %v1116
    %v1155 = vunpack.c.l.b16 %v1117
    %v1156 = vunpack.c.l.b16 %v1118
    %v1157 = vunpack.c.l.b16 %v1119
    %v1158 = vunpack.c.l.b16 %v1120
    %v1159 = vunpack.c.l.b16 %v1121
    %v1160 = vunpack.c.l.b16 %v1122
    %v1161 = vunpack.c.l.b16 %v1123
    %v1162 = vunpack.c.l.b16 %v1124
    %v1163 = vunpack.c.l.b16 %v1125
    %v1164 = vunpack.c.l.b16 %v1126
    %v1165 = vpack.c.b16 %v1150, %v1149
    %v1166 = vpack.c.b16 %v1152, %v1151
    %v1167 = vpack.c.b16 %v1154, %v1153
    %v1168 = vpack.c.b16 %v1156, %v1155
    %v1169 = vpack.c.b16 %v1158, %v1157
    %v1170 = vpack.c.b16 %v1160, %v1159
    %v1171 = vpack.c.b16 %v1162, %v1161
    %v1172 = vpack.c.b16 %v1164, %v1163
    %1181 = vmatpush.bf16.msra.mxu0 %v1172
    %1182 = vmatpush.bf16.msra.mxu0 %v1171
    %1183 = vmatpush.bf16.msra.mxu0 %v1170
    %1184 = vmatpush.bf16.msra.mxu0 %v1169
    %1185 = vmatpush.bf16.msra.mxu0 %v1168
    %1186 = vmatpush.bf16.msra.mxu0 %v1167
    %1187 = vmatpush.bf16.msra.mxu0 %v1166
    %1188 = vmatpush.bf16.msra.mxu0 %v1165
    %1189 = vmatmul.bf16.gmra.mxu0 %v1131
    %v1190 = vpop.f32.mrf.mxu0
    %v1191 = vadd.f32 0.0, %v1190
    %v1192 = vpop.f32.mrf.mxu0
    %v1193 = vadd.f32 0.0, %v1192
    %1194 = vdwg.mxu0
    %v1195 = vadd.f32 %v1109, %v1191
    %v1196 = vadd.f32 %v1110, %v1193
    %v1197 = vld [vmem:[%s10] sm:$0x1]
    %v1199 = vperm.slane %v1197, 0
    %v1201 = vadd.f32 %v1195, %v1199
    %v1202 = vadd.f32 %v1196, %v1199
    %v1203 = vmax.f32 %v1201, 0.0
    %v1204 = vmax.f32 %v1202, 0.0
    %v1205 = vpack.c.bf16 %v1204, %v1203
    %v1206 = vld [vmem:[#allocation13] sm:$0xf]
    %v1207 = vld [vmem:[#allocation13 + $0x4] sm:$0xf]
    %v1208 = vld [vmem:[#allocation13 + $0x8] sm:$0xf]
    %v1209 = vld [vmem:[#allocation13 + $0xc] sm:$0xf]
    %v1210 = vld [vmem:[#allocation13 + $0x10] sm:$0xf]
    %v1211 = vld [vmem:[#allocation13 + $0x14] sm:$0xf]
    %v1212 = vld [vmem:[#allocation13 + $0x18] sm:$0xf]
    %v1213 = vld [vmem:[#allocation13 + $0x1c] sm:$0xf]
    %v1214 = vld [vmem:[#allocation13 + $0x20] sm:$0xf]
    %v1215 = vld [vmem:[#allocation13 + $0x24] sm:$0xf]
    %v1216 = vld [vmem:[#allocation13 + $0x28] sm:$0xf]
    %v1217 = vld [vmem:[#allocation13 + $0x2c] sm:$0xf]
    %v1218 = vld [vmem:[#allocation13 + $0x30] sm:$0xf]
    %v1219 = vld [vmem:[#allocation13 + $0x34] sm:$0xf]
    %v1220 = vld [vmem:[#allocation13 + $0x38] sm:$0xf]
    %v1221 = vld [vmem:[#allocation13 + $0x3c] sm:$0xf]
    %v1222 = vld [vmem:[%s12] sm:$0x1]
    %v1224 = vperm.slane %v1222, 0
    %v1242 = vunpack.c.l.b16 %v1206
    %v1243 = vunpack.c.l.b16 %v1207
    %v1244 = vunpack.c.l.b16 %v1208
    %v1245 = vunpack.c.l.b16 %v1209
    %v1246 = vunpack.c.l.b16 %v1210
    %v1247 = vunpack.c.l.b16 %v1211
    %v1248 = vunpack.c.l.b16 %v1212
    %v1249 = vunpack.c.l.b16 %v1213
    %v1250 = vunpack.c.l.b16 %v1214
    %v1251 = vunpack.c.l.b16 %v1215
    %v1252 = vunpack.c.l.b16 %v1216
    %v1253 = vunpack.c.l.b16 %v1217
    %v1254 = vunpack.c.l.b16 %v1218
    %v1255 = vunpack.c.l.b16 %v1219
    %v1256 = vunpack.c.l.b16 %v1220
    %v1257 = vunpack.c.l.b16 %v1221
    %v1258 = vpack.c.b16 %v1243, %v1242
    %v1259 = vpack.c.b16 %v1245, %v1244
    %v1260 = vpack.c.b16 %v1247, %v1246
    %v1261 = vpack.c.b16 %v1249, %v1248
    %v1262 = vpack.c.b16 %v1251, %v1250
    %v1263 = vpack.c.b16 %v1253, %v1252
    %v1264 = vpack.c.b16 %v1255, %v1254
    %v1265 = vpack.c.b16 %v1257, %v1256
    %1274 = vmatpush.bf16.msra.mxu0 %v1265
    %1275 = vmatpush.bf16.msra.mxu0 %v1264
    %1276 = vmatpush.bf16.msra.mxu0 %v1263
    %1277 = vmatpush.bf16.msra.mxu0 %v1262
    %1278 = vmatpush.bf16.msra.mxu0 %v1261
    %1279 = vmatpush.bf16.msra.mxu0 %v1260
    %1280 = vmatpush.bf16.msra.mxu0 %v1259
    %1281 = vmatpush.bf16.msra.mxu0 %v1258
    %1282 = vmatmul.bf16.gmra.mxu0 %v1205
    %v1283 = vpop.f32.mrf.mxu0
    %v1284 = vadd.f32 %v1224, %v1283
    %v1285 = vpop.f32.mrf.mxu0
    %v1286 = vadd.f32 %v1224, %v1285
    %1287 = vdwg.mxu0
    %v1288 = vmax.f32 %v1284, 0.0
    %v1289 = vmax.f32 %v1286, 0.0
    %v1290 = vpack.c.bf16 %v1289, %v1288
    %v1291 = vld [vmem:[#allocation14] sm:$0xf]
    %v1292 = vld [vmem:[#allocation14 + $0x4] sm:$0xf]
    %v1293 = vld [vmem:[#allocation14 + $0x8] sm:$0xf]
    %v1294 = vld [vmem:[#allocation14 + $0xc] sm:$0xf]
    %v1295 = vld [vmem:[#allocation14 + $0x10] sm:$0xf]
    %v1296 = vld [vmem:[#allocation14 + $0x14] sm:$0xf]
    %v1297 = vld [vmem:[#allocation14 + $0x18] sm:$0xf]
    %v1298 = vld [vmem:[#allocation14 + $0x1c] sm:$0xf]
    %v1299 = vld [vmem:[#allocation14 + $0x20] sm:$0xf]
    %v1300 = vld [vmem:[#allocation14 + $0x24] sm:$0xf]
    %v1301 = vld [vmem:[#allocation14 + $0x28] sm:$0xf]
    %v1302 = vld [vmem:[#allocation14 + $0x2c] sm:$0xf]
    %v1303 = vld [vmem:[#allocation14 + $0x30] sm:$0xf]
    %v1304 = vld [vmem:[#allocation14 + $0x34] sm:$0xf]
    %v1305 = vld [vmem:[#allocation14 + $0x38] sm:$0xf]
    %v1306 = vld [vmem:[#allocation14 + $0x3c] sm:$0xf]
    %v1307 = vld [vmem:[%s14] sm:$0x1]
    %v1309 = vperm.slane %v1307, 0
    %v1327 = vunpack.c.l.b16 %v1291
    %v1328 = vunpack.c.l.b16 %v1292
    %v1329 = vunpack.c.l.b16 %v1293
    %v1330 = vunpack.c.l.b16 %v1294
    %v1331 = vunpack.c.l.b16 %v1295
    %v1332 = vunpack.c.l.b16 %v1296
    %v1333 = vunpack.c.l.b16 %v1297
    %v1334 = vunpack.c.l.b16 %v1298
    %v1335 = vunpack.c.l.b16 %v1299
    %v1336 = vunpack.c.l.b16 %v1300
    %v1337 = vunpack.c.l.b16 %v1301
    %v1338 = vunpack.c.l.b16 %v1302
    %v1339 = vunpack.c.l.b16 %v1303
    %v1340 = vunpack.c.l.b16 %v1304
    %v1341 = vunpack.c.l.b16 %v1305
    %v1342 = vunpack.c.l.b16 %v1306
    %v1343 = vpack.c.b16 %v1328, %v1327
    %v1344 = vpack.c.b16 %v1330, %v1329
    %v1345 = vpack.c.b16 %v1332, %v1331
    %v1346 = vpack.c.b16 %v1334, %v1333
    %v1347 = vpack.c.b16 %v1336, %v1335
    %v1348 = vpack.c.b16 %v1338, %v1337
    %v1349 = vpack.c.b16 %v1340, %v1339
    %v1350 = vpack.c.b16 %v1342, %v1341
    %1359 = vmatpush.bf16.msra.mxu0 %v1350
    %1360 = vmatpush.bf16.msra.mxu0 %v1349
    %1361 = vmatpush.bf16.msra.mxu0 %v1348
    %1362 = vmatpush.bf16.msra.mxu0 %v1347
    %1363 = vmatpush.bf16.msra.mxu0 %v1346
    %1364 = vmatpush.bf16.msra.mxu0 %v1345
    %1365 = vmatpush.bf16.msra.mxu0 %v1344
    %1366 = vmatpush.bf16.msra.mxu0 %v1343
    %1367 = vmatmul.bf16.gmra.mxu0 %v1290
    %v1368 = vpop.f32.mrf.mxu0
    %v1369 = vadd.f32 %v1309, %v1368
    %v1370 = vpop.f32.mrf.mxu0
    %v1371 = vadd.f32 %v1309, %v1370
    %1372 = vdwg.mxu0
    %v1373 = vmax.f32 %v1369, 0.0
    %v1374 = vmax.f32 %v1371, 0.0
    %v1375 = vpack.c.bf16 %v1374, %v1373
    %v1376 = vld [vmem:[#allocation16] sm:$0xf]
    %v1377 = vld [vmem:[#allocation16 + $0x4] sm:$0xf]
    %v1378 = vld [vmem:[#allocation16 + $0x8] sm:$0xf]
    %v1379 = vld [vmem:[#allocation16 + $0xc] sm:$0xf]
    %v1380 = vld [vmem:[#allocation16 + $0x10] sm:$0xf]
    %v1381 = vld [vmem:[#allocation16 + $0x14] sm:$0xf]
    %v1382 = vld [vmem:[#allocation16 + $0x18] sm:$0xf]
    %v1383 = vld [vmem:[#allocation16 + $0x1c] sm:$0xf]
    %v1384 = vld [vmem:[#allocation16 + $0x20] sm:$0xf]
    %v1385 = vld [vmem:[#allocation16 + $0x24] sm:$0xf]
    %v1386 = vld [vmem:[#allocation16 + $0x28] sm:$0xf]
    %v1387 = vld [vmem:[#allocation16 + $0x2c] sm:$0xf]
    %v1388 = vld [vmem:[#allocation16 + $0x30] sm:$0xf]
    %v1389 = vld [vmem:[#allocation16 + $0x34] sm:$0xf]
    %v1390 = vld [vmem:[#allocation16 + $0x38] sm:$0xf]
    %v1391 = vld [vmem:[#allocation16 + $0x3c] sm:$0xf]
    %v1392 = vld [vmem:[%s16] sm:$0x1]
    %v1394 = vperm.slane %v1392, 0
    %v1412 = vunpack.c.l.b16 %v1376
    %v1413 = vunpack.c.l.b16 %v1377
    %v1414 = vunpack.c.l.b16 %v1378
    %v1415 = vunpack.c.l.b16 %v1379
    %v1416 = vunpack.c.l.b16 %v1380
    %v1417 = vunpack.c.l.b16 %v1381
    %v1418 = vunpack.c.l.b16 %v1382
    %v1419 = vunpack.c.l.b16 %v1383
    %v1420 = vunpack.c.l.b16 %v1384
    %v1421 = vunpack.c.l.b16 %v1385
    %v1422 = vunpack.c.l.b16 %v1386
    %v1423 = vunpack.c.l.b16 %v1387
    %v1424 = vunpack.c.l.b16 %v1388
    %v1425 = vunpack.c.l.b16 %v1389
    %v1426 = vunpack.c.l.b16 %v1390
    %v1427 = vunpack.c.l.b16 %v1391
    %v1428 = vpack.c.b16 %v1413, %v1412
    %v1429 = vpack.c.b16 %v1415, %v1414
    %v1430 = vpack.c.b16 %v1417, %v1416
    %v1431 = vpack.c.b16 %v1419, %v1418
    %v1432 = vpack.c.b16 %v1421, %v1420
    %v1433 = vpack.c.b16 %v1423, %v1422
    %v1434 = vpack.c.b16 %v1425, %v1424
    %v1435 = vpack.c.b16 %v1427, %v1426
    %1444 = vmatpush.bf16.msra.mxu0 %v1435
    %1445 = vmatpush.bf16.msra.mxu0 %v1434
    %1446 = vmatpush.bf16.msra.mxu0 %v1433
    %1447 = vmatpush.bf16.msra.mxu0 %v1432
    %1448 = vmatpush.bf16.msra.mxu0 %v1431
    %1449 = vmatpush.bf16.msra.mxu0 %v1430
    %1450 = vmatpush.bf16.msra.mxu0 %v1429
    %1451 = vmatpush.bf16.msra.mxu0 %v1428
    %1452 = vmatmul.bf16.gmra.mxu0 %v1375
    %v1453 = vpop.f32.mrf.mxu0
    %v1454 = vadd.f32 %v1394, %v1453
    %v1455 = vpop.f32.mrf.mxu0
    %v1456 = vadd.f32 %v1394, %v1455
    %1457 = vdwg.mxu0
    %1458 = vmax.xlane.f32.xlu0 %v1454
    %v1459 = vpop.xlane.xlu0 %1458
    %1460 = vmax.xlane.f32.xlu0 %v1456
    %v1461 = vpop.xlane.xlu0 %1460
    %v1462 = vsub.f32 %v1454, %v1459
    %v1463 = vsub.f32 %v1456, %v1461
    %v1464 = vmul.f32 %v1462, 1.442695
    %v1465 = vpow.pop %v1464
    %v1466 = vmul.f32 %v1463, 1.442695
    %v1467 = vpow.pop %v1466
    %1468 = vadd.xlane.f32.xlu0 %v1465
    %v1469 = vpop.xlane.xlu0 %1468
    %1470 = vadd.xlane.f32.xlu0 %v1467
    %v1471 = vpop.xlane.xlu0 %1470
    %v1472 = vlog2.pop %v1469
    %v1473 = vmul.f32 %v1472, 0.6931472
    %v1474 = vlog2.pop %v1471
    %v1475 = vmul.f32 %v1474, 0.6931472
    %v1476 = vsub.f32 %v1462, %v1473
    %v1477 = vsub.f32 %v1463, %v1475
    %1478 = vst [vmem:[#allocation17] sm:$0xff] %v1476
    %1479 = vst [vmem:[#allocation17 + $0x8] sm:$0xff] %v1477
    // Predicated region
    $region106: #{tpu_custom_call.1} parent=1 // pred_check
      _
    $region107: #{tpu_custom_call.1} parent=1 // pred_check_branch
      %1481 = sbr.rel (0) target = $region109
    $region108: #{tpu_custom_call.1} parent=1 // pred_region
      %1483 = vsyncadd [#allocation4], 0
      %s1484 = sshll.u32 [#allocation17], 4
      %s1485 = int_to_ptr.vmem [resolvable:$true] %s1484
      %s1486 = sshll.u32 %s17, 4
      %s1487 = int_to_ptr.hbm [resolvable:$true] %s1486
      %1492 = dma.vmem_to_hbm [thread:$0]  %s1485, 256, %s1487, [#allocation4], 128, 128, 8
    $region109: #{tpu_custom_call.1} parent=1 // pred_fallthru
      _
    // Predicated region
    $region110: #{tpu_custom_call.1} parent=1 // pred_check
      _
    $region111: #{tpu_custom_call.1} parent=1 // pred_check_branch
      %1494 = sbr.rel (0) target = $region113
    $region112: #{tpu_custom_call.1} parent=1 // pred_region
      %1496 = dma.done [#allocation4], 256
    $region113: #{tpu_custom_call.1} parent=1 // pred_fallthru
      _
    %1497 = vsyncpa [#allocation3], 1
    %1498 = vsyncpa [#allocation6], 1
    %1499 = vsyncpa [#allocation9], 1
    %1500 = vsyncpa [#allocation12], 1
    %1501 = vsyncpa [#allocation15], 1
    %1502 = vsyncpa [#allocation4], 1

</llo_original>
